<compile_context>
chip_gen: v6e
topology: v6e:2x2x1
jax: 0.10.0
libtpu: 0.0.40
codegen_flags: <defaults>
</compile_context>

<pallas_src>
import functools

import jax
import jax.numpy as jnp
from jax.experimental import pallas as pl
from jax.experimental.pallas import tpu as pltpu

NEG_INF = -1e30   # additive mask for non-edges (finite, f32-safe; exp() -> 0)


# ---------------------------------------------------------------------------
# One multi-head GAT layer on VMEM-resident values (called inside the kernel)
# ---------------------------------------------------------------------------
def _gat_layer(x, adj_bias, cfg, prm):
    """x:(N,F_in) f32, adj_bias:(N,H*N) f32 additive mask, adj_bias[i,h*N+j]=0
    iff edge j->i else -1e30 (same for every head block h)."""
    heads, f_out, concat, residual, act = cfg
    (w_all, a_dst_cols, a_src_cols, rep_n, rep_f, lane_diag,
     seg_sum, stack_mask, bias, fold) = prm
    f32 = jnp.float32

    # (1) all-heads feature transform: one wide bf16 MXU matmul.
    xw = jnp.dot(x.astype(jnp.bfloat16), w_all,
                 preferred_element_type=f32)                         # (N, H*F)

    # (2) attention-logit pieces for all heads (block-diagonal packed vectors).
    e_dst = jnp.dot(xw, a_dst_cols, preferred_element_type=f32)      # (N, H): a_dst_h . x'_i
    e_src = jnp.dot(xw, a_src_cols, preferred_element_type=f32)      # (N, H): [j,h] = a_src_h . x'_j

    # (3) lane-dense (N, H*N) logits: column h*N+j <-> (head h, source node j).
    e_dst_wide = jnp.dot(e_dst, rep_n, preferred_element_type=f32)   # (N, H*N)
    # row vector [h*N+j] = a_src_h . x'_j  (expand, diagonal select, sublane sum)
    e_src_row = jnp.sum(
        jnp.dot(e_src, rep_n, preferred_element_type=f32) * lane_diag,
        axis=0, keepdims=True)                                       # (1, H*N)

    z = e_dst_wide + e_src_row
    z = jnp.maximum(z, 0.2 * z)            # LeakyReLU(0.2)
    z = z + adj_bias                       # mask non-edges after LeakyReLU

    # (4) per-(row, head) softmax over source nodes. Row-global max is a
    # per-row constant => also constant within each head segment, so the
    # softmax stays exact; finite logits are O(1) so no segment underflows.
    m = jnp.max(z, axis=-1, keepdims=True)
    p = jnp.exp(z - m)                     # masked entries -> exactly 0
    p_bf = p.astype(jnp.bfloat16)

    # (5) aggregation: ONE K=H*N MXU matmul against the head-masked sublane
    # stack of xw; output is directly the concatenated (N, H*F) layout.
    xw_stack = jnp.concatenate([xw.astype(jnp.bfloat16)] * heads, axis=0) * stack_mask
    out_un = jnp.dot(p_bf, xw_stack, preferred_element_type=f32)     # (N, H*F)

    # (6) softmax denominators per (row, head) via one tiny matmul; normalize in f32.
    denom = jnp.dot(p_bf, seg_sum, preferred_element_type=f32)       # (N, H)
    recip = pl.reciprocal(denom, approx=True)
    out = out_un * jnp.dot(recip, rep_f, preferred_element_type=f32)

    if concat:
        y = out + bias                     # GATConv bias (concat layout)
        if residual:                       # skip_connection = 'res'
            y = y + x
        if act:                            # cfg.activation = ReLU
            y = jnp.maximum(y, 0.0)
        return y
    # last layer: mean over heads (fold carries the 1/H factor), then bias.
    return jnp.dot(out, fold, preferred_element_type=f32) + bias


# ---------------------------------------------------------------------------
# Fused kernel: all GAT layers + bias / ReLU / residual / head-mean epilogues
# ---------------------------------------------------------------------------
def _gat_fused_kernel(layer_cfgs, n_nodes, x_ref, adj_ref, *refs):
    out_ref = refs[-1]
    prm_refs = refs[:-1]

    adj_wide = adj_ref[...]                # (N, Hmax*N) additive bias, head-tiled
    x = x_ref[...]

    off = 0
    for cfg in layer_cfgs:
        heads = cfg[0]
        concat = cfg[2]
        nprm = 9 if concat else 10
        prm = [r[...] for r in prm_refs[off:off + nprm]]
        if concat:
            prm = prm + [None]             # no head-mean fold for concat layers
        off += nprm
        x = _gat_layer(x, adj_wide[:, :heads * n_nodes], cfg, tuple(prm))

    out_ref[...] = x


# ---------------------------------------------------------------------------
# Wrapper: parameter / constant packing + single pallas_call
# ---------------------------------------------------------------------------
def _pack_gat_layer(W, a_src, a_dst, bias, n_nodes, is_last):
    """W:(H,F_in,F_out)  a_*:(H,F_out)  bias:(out_dim,) -> packed kernel inputs."""
    H, F_in, F_out = map(int, W.shape)
    HF = H * F_out
    f32, bf16 = jnp.float32, jnp.bfloat16
    eye_h = jnp.eye(H, dtype=f32)

    w_all = jnp.transpose(W, (1, 0, 2)).reshape(F_in, HF).astype(bf16)
    # block-diagonal attention vectors: [h*F+f, h] = a[h, f]
    a_dst_cols = (a_dst[:, :, None] * eye_h[:, None, :]).reshape(HF, H).astype(f32)
    a_src_cols = (a_src[:, :, None] * eye_h[:, None, :]).reshape(HF, H).astype(f32)
    # structural constants (hoisted out of the kernel):
    rep_n = jnp.repeat(eye_h, n_nodes, axis=1)                       # (H, H*N)
    rep_f = jnp.repeat(eye_h, F_out, axis=1)                         # (H, H*F)
    lane_diag = jnp.tile(jnp.eye(n_nodes, dtype=f32), (1, H))        # (N, H*N)
    seg_sum = jnp.repeat(eye_h, n_nodes, axis=0).astype(bf16)        # (H*N, H)
    stack_mask = jnp.repeat(jnp.repeat(eye_h, n_nodes, axis=0),
                            F_out, axis=1).astype(bf16)              # (H*N, H*F)

    packed = [w_all, a_dst_cols, a_src_cols, rep_n, rep_f, lane_diag,
              seg_sum, stack_mask, bias.reshape(1, -1).astype(f32)]
    if is_last:
        fold = jnp.tile(jnp.eye(F_out, dtype=f32), (H, 1)) / H       # (H*F, F_out)
        packed.append(fold)
    return packed


def gat_forward(x, adj, params):
    """Mirrors GAT.forward in eval mode. Returns (logits, None)."""
    N = int(x.shape[0])
    layer_params = [params["in_conv"]] + list(params["mid_convs"]) + [params["out_conv"]]
    n_layers = len(layer_params)

    layer_cfgs = []
    flat_inputs = []
    for li, (W, a_src, a_dst, bias) in enumerate(layer_params):
        H, _, F_out = map(int, W.shape)
        is_first, is_last = li == 0, li == n_layers - 1
        layer_cfgs.append((H, F_out,
                           not is_last,                        # concat
                           (not is_first) and (not is_last),   # residual (mid only)
                           not is_last))                       # ReLU
        flat_inputs.extend(_pack_gat_layer(W, a_src, a_dst, bias, N, is_last))

    # adjacency as additive bias, pre-tiled along lanes for the widest head count
    h_max = max(c[0] for c in layer_cfgs)
    adj_bias = jnp.where(adj > 0, 0.0, NEG_INF).astype(jnp.float32)
    adj_wide = jnp.tile(adj_bias, (1, h_max))                        # (N, Hmax*N)

    n_class = int(layer_params[-1][0].shape[-1])

    # Advisory cost estimate for the XLA scheduler.
    flops = 0
    transc = 0
    for (W, _, _, _), (H, F_out, *_rest) in zip(layer_params, layer_cfgs):
        f_in = int(W.shape[1])
        hf, hn = H * F_out, H * N
        flops += 2 * N * f_in * hf + 4 * N * hf * H + 4 * N * H * hn
        flops += 2 * N * hn * hf + 2 * N * hn * H + 12 * N * hn
        transc += N * hn + N * H
    bytes_accessed = 4 * (x.size + adj_wide.size + N * n_class) + \
        sum(int(a.size) * a.dtype.itemsize for a in flat_inputs)

    vmem_spec = pl.BlockSpec(memory_space=pltpu.MemorySpace.VMEM)
    out = pl.pallas_call(
        functools.partial(_gat_fused_kernel, tuple(layer_cfgs), N),
        out_shape=jax.ShapeDtypeStruct((N, n_class), jnp.float32),
        in_specs=[vmem_spec] * (2 + len(flat_inputs)),
        out_specs=vmem_spec,
        cost_estimate=pl.CostEstimate(flops=int(flops),
                                      transcendentals=int(transc),
                                      bytes_accessed=int(bytes_accessed)),
    )(x, adj_wide, *flat_inputs)
    return out, None


# ---------------------------------------------------------------------------
# Deterministic parameter init + pure-JAX reference (for a loose sanity check)
# ---------------------------------------------------------------------------
def init_gat_layer(key, f_in, f_out, heads, concat):
    k1, k2, k3 = jax.random.split(key, 3)
    scale = 1.0 / jnp.sqrt(jnp.float32(f_in))
    W = scale * jax.random.normal(k1, (heads, f_in, f_out), jnp.float32)
    a_src = 0.1 * jax.random.normal(k2, (heads, f_out), jnp.float32)
    a_dst = 0.1 * jax.random.normal(k3, (heads, f_out), jnp.float32)
    bias_dim = heads * f_out if concat else f_out
    bias = jnp.zeros((bias_dim,), jnp.float32)
    return (W, a_src, a_dst, bias)


def _reference_layer(x, adj_mask, W, a_src, a_dst, bias, concat):
    xw = jnp.einsum("nf,hfo->hno", x, W)
    e_dst = jnp.einsum("hno,ho->hn", xw, a_dst)
    e_src = jnp.einsum("hno,ho->hn", xw, a_src)
    z = e_dst[:, :, None] + e_src[:, None, :]            # [h, i, j]
    z = jnp.where(z >= 0, z, 0.2 * z)
    z = jnp.where(adj_mask[None], z, -jnp.inf)
    attn = jax.nn.softmax(z, axis=-1)
    out = jnp.einsum("hij,hjo->hio", attn, xw)
    if concat:
        out = jnp.transpose(out, (1, 0, 2)).reshape(x.shape[0], -1)
    else:
        out = jnp.mean(out, axis=0)
    return out + bias


def gat_reference(x, adj, params):
    adj_mask = adj > 0
    layers = [params["in_conv"]] + list(params["mid_convs"]) + [params["out_conv"]]
    h = x
    for li, (W, a_src, a_dst, bias) in enumerate(layers):
        is_first, is_last = li == 0, li == len(layers) - 1
        y = _reference_layer(h, adj_mask, W, a_src, a_dst, bias, concat=not is_last)
        if (not is_first) and (not is_last):
            y = y + h
        if not is_last:
            y = jnp.maximum(y, 0.0)
        h = y
    return h


if __name__ == "__main__":
    # cfg: n_feat=16, n_hid=8, n_head=4, n_head_last=2, n_class=4, n_layer=3,
    #      dropout=0.5 (eval -> identity), norm='None', skip='res', act='ReLU'
    N, n_feat, n_hid, n_head, n_head_last, n_class = 32, 16, 8, 4, 2, 4

    key = jax.random.PRNGKey(0)
    kx, k_in, k_mid, k_out = jax.random.split(key, 4)

    # node features
    x = jax.random.normal(kx, (N, n_feat), jnp.float32)

    # edge_index of an undirected ring graph: shape [2, 2N]
    src = jnp.arange(N, dtype=jnp.int32)
    dst = (src + 1) % N
    edge_index = jnp.stack(
        [jnp.concatenate([src, dst]), jnp.concatenate([dst, src])], axis=0)

    # dense adjacency adj[i, j] = 1 if edge j -> i, plus self-loops
    adj = jnp.zeros((N, N), jnp.float32)
    adj = adj.at[edge_index[1], edge_index[0]].set(1.0)
    adj = jnp.maximum(adj, jnp.eye(N, dtype=jnp.float32))

    params = {
        "in_conv": init_gat_layer(k_in, n_feat, n_hid, n_head, concat=True),
        "mid_convs": [
            init_gat_layer(k_mid, n_hid * n_head, n_hid, n_head, concat=True),
        ],
        "out_conv": init_gat_layer(k_out, n_hid * n_head, n_class,
                                   n_head_last, concat=False),
    }

    out, _ = jax.jit(gat_forward)(x, adj, params)
    jax.block_until_ready(out)
    assert out.shape == (N, n_class) and out.dtype == jnp.float32

    # loose check vs f32 reference (bf16 MXU operands + approx reciprocal)
    ref = gat_reference(x, adj, params)
    max_err = float(jnp.max(jnp.abs(out - ref)))
    assert max_err < 0.1, f"kernel deviates from reference: max|err|={max_err}"

    print("KERNEL_OK")
</pallas_src>

<mosaic_0001>
module attributes {stable_mosaic.version = 11 : i64} {
  func.func @_gat_fused_kernel(%arg0: memref<32x16xf32, #tpu.memory_space<vmem>>, %arg1: memref<32x128xf32, #tpu.memory_space<vmem>>, %arg2: memref<16x32xbf16, #tpu.memory_space<vmem>>, %arg3: memref<32x4xf32, #tpu.memory_space<vmem>>, %arg4: memref<32x4xf32, #tpu.memory_space<vmem>>, %arg5: memref<4x128xf32, #tpu.memory_space<vmem>>, %arg6: memref<4x32xf32, #tpu.memory_space<vmem>>, %arg7: memref<32x128xf32, #tpu.memory_space<vmem>>, %arg8: memref<128x4xbf16, #tpu.memory_space<vmem>>, %arg9: memref<128x32xbf16, #tpu.memory_space<vmem>>, %arg10: memref<1x32xf32, #tpu.memory_space<vmem>>, %arg11: memref<32x32xbf16, #tpu.memory_space<vmem>>, %arg12: memref<32x4xf32, #tpu.memory_space<vmem>>, %arg13: memref<32x4xf32, #tpu.memory_space<vmem>>, %arg14: memref<4x128xf32, #tpu.memory_space<vmem>>, %arg15: memref<4x32xf32, #tpu.memory_space<vmem>>, %arg16: memref<32x128xf32, #tpu.memory_space<vmem>>, %arg17: memref<128x4xbf16, #tpu.memory_space<vmem>>, %arg18: memref<128x32xbf16, #tpu.memory_space<vmem>>, %arg19: memref<1x32xf32, #tpu.memory_space<vmem>>, %arg20: memref<32x8xbf16, #tpu.memory_space<vmem>>, %arg21: memref<8x2xf32, #tpu.memory_space<vmem>>, %arg22: memref<8x2xf32, #tpu.memory_space<vmem>>, %arg23: memref<2x64xf32, #tpu.memory_space<vmem>>, %arg24: memref<2x8xf32, #tpu.memory_space<vmem>>, %arg25: memref<32x64xf32, #tpu.memory_space<vmem>>, %arg26: memref<64x2xbf16, #tpu.memory_space<vmem>>, %arg27: memref<64x8xbf16, #tpu.memory_space<vmem>>, %arg28: memref<1x4xf32, #tpu.memory_space<vmem>>, %arg29: memref<8x4xf32, #tpu.memory_space<vmem>>, %arg30: memref<32x4xf32, #tpu.memory_space<vmem>>) attributes {dimension_semantics = [], scalar_prefetch = 0 : i64, scratch_operands = 0 : i64, tpu.core_type = #tpu.core_type<tc>} {
    %c0 = arith.constant 0 : index
    %c0_0 = arith.constant 0 : index
    %0 = vector.load %arg1[%c0, %c0_0] : memref<32x128xf32, #tpu.memory_space<vmem>>, vector<32x128xf32>
    %c0_1 = arith.constant 0 : index
    %c0_2 = arith.constant 0 : index
    %1 = vector.load %arg0[%c0_1, %c0_2] : memref<32x16xf32, #tpu.memory_space<vmem>>, vector<32x16xf32>
    %c0_3 = arith.constant 0 : index
    %c0_4 = arith.constant 0 : index
    %2 = vector.load %arg2[%c0_3, %c0_4] : memref<16x32xbf16, #tpu.memory_space<vmem>>, vector<16x32xbf16>
    %c0_5 = arith.constant 0 : index
    %c0_6 = arith.constant 0 : index
    %3 = vector.load %arg3[%c0_5, %c0_6] : memref<32x4xf32, #tpu.memory_space<vmem>>, vector<32x4xf32>
    %c0_7 = arith.constant 0 : index
    %c0_8 = arith.constant 0 : index
    %4 = vector.load %arg4[%c0_7, %c0_8] : memref<32x4xf32, #tpu.memory_space<vmem>>, vector<32x4xf32>
    %c0_9 = arith.constant 0 : index
    %c0_10 = arith.constant 0 : index
    %5 = vector.load %arg5[%c0_9, %c0_10] : memref<4x128xf32, #tpu.memory_space<vmem>>, vector<4x128xf32>
    %c0_11 = arith.constant 0 : index
    %c0_12 = arith.constant 0 : index
    %6 = vector.load %arg6[%c0_11, %c0_12] : memref<4x32xf32, #tpu.memory_space<vmem>>, vector<4x32xf32>
    %c0_13 = arith.constant 0 : index
    %c0_14 = arith.constant 0 : index
    %7 = vector.load %arg7[%c0_13, %c0_14] : memref<32x128xf32, #tpu.memory_space<vmem>>, vector<32x128xf32>
    %c0_15 = arith.constant 0 : index
    %c0_16 = arith.constant 0 : index
    %8 = vector.load %arg8[%c0_15, %c0_16] : memref<128x4xbf16, #tpu.memory_space<vmem>>, vector<128x4xbf16>
    %c0_17 = arith.constant 0 : index
    %c0_18 = arith.constant 0 : index
    %9 = vector.load %arg9[%c0_17, %c0_18] : memref<128x32xbf16, #tpu.memory_space<vmem>>, vector<128x32xbf16>
    %c0_19 = arith.constant 0 : index
    %c0_20 = arith.constant 0 : index
    %10 = vector.load %arg10[%c0_19, %c0_20] : memref<1x32xf32, #tpu.memory_space<vmem>>, vector<1x32xf32>
    %11 = arith.truncf %1 : vector<32x16xf32> to vector<32x16xbf16>
    %cst = arith.constant dense<0.000000e+00> : vector<32x32xf32>
    %12 = tpu.matmul %11, %2, %cst {dimension_numbers = #tpu.dot_dimension_numbers<[1], [0], [0], [1], [0, 0, 1, 1], [], []>} : vector<32x16xbf16>, vector<16x32xbf16>, vector<32x32xf32> -> vector<32x32xf32>
    %cst_21 = arith.constant dense<0.000000e+00> : vector<32x4xf32>
    %13 = tpu.matmul %12, %3, %cst_21 {dimension_numbers = #tpu.dot_dimension_numbers<[1], [0], [0], [1], [0, 0, 1, 1], [], []>} : vector<32x32xf32>, vector<32x4xf32>, vector<32x4xf32> -> vector<32x4xf32>
    %cst_22 = arith.constant dense<0.000000e+00> : vector<32x4xf32>
    %14 = tpu.matmul %12, %4, %cst_22 {dimension_numbers = #tpu.dot_dimension_numbers<[1], [0], [0], [1], [0, 0, 1, 1], [], []>} : vector<32x32xf32>, vector<32x4xf32>, vector<32x4xf32> -> vector<32x4xf32>
    %cst_23 = arith.constant dense<0.000000e+00> : vector<32x128xf32>
    %15 = tpu.matmul %13, %5, %cst_23 {dimension_numbers = #tpu.dot_dimension_numbers<[1], [0], [0], [1], [0, 0, 1, 1], [], []>} : vector<32x4xf32>, vector<4x128xf32>, vector<32x128xf32> -> vector<32x128xf32>
    %cst_24 = arith.constant dense<0.000000e+00> : vector<32x128xf32>
    %16 = tpu.matmul %14, %5, %cst_24 {dimension_numbers = #tpu.dot_dimension_numbers<[1], [0], [0], [1], [0, 0, 1, 1], [], []>} : vector<32x4xf32>, vector<4x128xf32>, vector<32x128xf32> -> vector<32x128xf32>
    %17 = arith.mulf %16, %7 : vector<32x128xf32>
    %cst_25 = arith.constant dense<0.000000e+00> : vector<128xf32>
    %18 = vector.multi_reduction <add>, %17, %cst_25 [0] : vector<32x128xf32> to vector<128xf32>
    %19 = vector.shape_cast %18 : vector<128xf32> to vector<1x128xf32>
    %20 = vector.broadcast %19 : vector<1x128xf32> to vector<32x128xf32>
    %21 = arith.addf %15, %20 : vector<32x128xf32>
    %cst_26 = arith.constant 2.000000e-01 : f32
    %22 = vector.broadcast %cst_26 : f32 to vector<32x128xf32>
    %23 = arith.mulf %22, %21 : vector<32x128xf32>
    %24 = arith.maximumf %21, %23 : vector<32x128xf32>
    %25 = arith.addf %24, %0 : vector<32x128xf32>
    %cst_27 = arith.constant dense<0xFF800000> : vector<32xf32>
    %26 = vector.multi_reduction <maximumf>, %25, %cst_27 [1] : vector<32x128xf32> to vector<32xf32>
    %27 = vector.shape_cast %26 : vector<32xf32> to vector<32x1xf32>
    %28 = vector.broadcast %27 : vector<32x1xf32> to vector<32x128xf32>
    %29 = arith.subf %25, %28 : vector<32x128xf32>
    %30 = math.exp %29 : vector<32x128xf32>
    %31 = arith.truncf %30 : vector<32x128xf32> to vector<32x128xbf16>
    %32 = arith.truncf %12 : vector<32x32xf32> to vector<32x32xbf16>
    %33 = tpu.concatenate %32, %32, %32, %32 in 0 : vector<32x32xbf16>, vector<32x32xbf16>, vector<32x32xbf16>, vector<32x32xbf16> -> vector<128x32xbf16>
    %34 = arith.mulf %33, %9 : vector<128x32xbf16>
    %cst_28 = arith.constant dense<0.000000e+00> : vector<32x32xf32>
    %35 = tpu.matmul %31, %34, %cst_28 {dimension_numbers = #tpu.dot_dimension_numbers<[1], [0], [0], [1], [0, 0, 1, 1], [], []>} : vector<32x128xbf16>, vector<128x32xbf16>, vector<32x32xf32> -> vector<32x32xf32>
    %cst_29 = arith.constant dense<0.000000e+00> : vector<32x4xf32>
    %36 = tpu.matmul %31, %8, %cst_29 {dimension_numbers = #tpu.dot_dimension_numbers<[1], [0], [0], [1], [0, 0, 1, 1], [], []>} : vector<32x128xbf16>, vector<128x4xbf16>, vector<32x4xf32> -> vector<32x4xf32>
    %37 = tpu.reciprocal %36 {approx = true} : vector<32x4xf32> -> vector<32x4xf32>
    %cst_30 = arith.constant dense<0.000000e+00> : vector<32x32xf32>
    %38 = tpu.matmul %37, %6, %cst_30 {dimension_numbers = #tpu.dot_dimension_numbers<[1], [0], [0], [1], [0, 0, 1, 1], [], []>} : vector<32x4xf32>, vector<4x32xf32>, vector<32x32xf32> -> vector<32x32xf32>
    %39 = arith.mulf %35, %38 : vector<32x32xf32>
    %40 = vector.broadcast %10 : vector<1x32xf32> to vector<32x32xf32>
    %41 = arith.addf %39, %40 : vector<32x32xf32>
    %cst_31 = arith.constant 0.000000e+00 : f32
    %42 = vector.broadcast %cst_31 : f32 to vector<32x32xf32>
    %43 = arith.maximumf %41, %42 : vector<32x32xf32>
    %c0_32 = arith.constant 0 : index
    %c0_33 = arith.constant 0 : index
    %44 = vector.load %arg11[%c0_32, %c0_33] : memref<32x32xbf16, #tpu.memory_space<vmem>>, vector<32x32xbf16>
    %c0_34 = arith.constant 0 : index
    %c0_35 = arith.constant 0 : index
    %45 = vector.load %arg12[%c0_34, %c0_35] : memref<32x4xf32, #tpu.memory_space<vmem>>, vector<32x4xf32>
    %c0_36 = arith.constant 0 : index
    %c0_37 = arith.constant 0 : index
    %46 = vector.load %arg13[%c0_36, %c0_37] : memref<32x4xf32, #tpu.memory_space<vmem>>, vector<32x4xf32>
    %c0_38 = arith.constant 0 : index
    %c0_39 = arith.constant 0 : index
    %47 = vector.load %arg14[%c0_38, %c0_39] : memref<4x128xf32, #tpu.memory_space<vmem>>, vector<4x128xf32>
    %c0_40 = arith.constant 0 : index
    %c0_41 = arith.constant 0 : index
    %48 = vector.load %arg15[%c0_40, %c0_41] : memref<4x32xf32, #tpu.memory_space<vmem>>, vector<4x32xf32>
    %c0_42 = arith.constant 0 : index
    %c0_43 = arith.constant 0 : index
    %49 = vector.load %arg16[%c0_42, %c0_43] : memref<32x128xf32, #tpu.memory_space<vmem>>, vector<32x128xf32>
    %c0_44 = arith.constant 0 : index
    %c0_45 = arith.constant 0 : index
    %50 = vector.load %arg17[%c0_44, %c0_45] : memref<128x4xbf16, #tpu.memory_space<vmem>>, vector<128x4xbf16>
    %c0_46 = arith.constant 0 : index
    %c0_47 = arith.constant 0 : index
    %51 = vector.load %arg18[%c0_46, %c0_47] : memref<128x32xbf16, #tpu.memory_space<vmem>>, vector<128x32xbf16>
    %c0_48 = arith.constant 0 : index
    %c0_49 = arith.constant 0 : index
    %52 = vector.load %arg19[%c0_48, %c0_49] : memref<1x32xf32, #tpu.memory_space<vmem>>, vector<1x32xf32>
    %53 = arith.truncf %43 : vector<32x32xf32> to vector<32x32xbf16>
    %cst_50 = arith.constant dense<0.000000e+00> : vector<32x32xf32>
    %54 = tpu.matmul %53, %44, %cst_50 {dimension_numbers = #tpu.dot_dimension_numbers<[1], [0], [0], [1], [0, 0, 1, 1], [], []>} : vector<32x32xbf16>, vector<32x32xbf16>, vector<32x32xf32> -> vector<32x32xf32>
    %cst_51 = arith.constant dense<0.000000e+00> : vector<32x4xf32>
    %55 = tpu.matmul %54, %45, %cst_51 {dimension_numbers = #tpu.dot_dimension_numbers<[1], [0], [0], [1], [0, 0, 1, 1], [], []>} : vector<32x32xf32>, vector<32x4xf32>, vector<32x4xf32> -> vector<32x4xf32>
    %cst_52 = arith.constant dense<0.000000e+00> : vector<32x4xf32>
    %56 = tpu.matmul %54, %46, %cst_52 {dimension_numbers = #tpu.dot_dimension_numbers<[1], [0], [0], [1], [0, 0, 1, 1], [], []>} : vector<32x32xf32>, vector<32x4xf32>, vector<32x4xf32> -> vector<32x4xf32>
    %cst_53 = arith.constant dense<0.000000e+00> : vector<32x128xf32>
    %57 = tpu.matmul %55, %47, %cst_53 {dimension_numbers = #tpu.dot_dimension_numbers<[1], [0], [0], [1], [0, 0, 1, 1], [], []>} : vector<32x4xf32>, vector<4x128xf32>, vector<32x128xf32> -> vector<32x128xf32>
    %cst_54 = arith.constant dense<0.000000e+00> : vector<32x128xf32>
    %58 = tpu.matmul %56, %47, %cst_54 {dimension_numbers = #tpu.dot_dimension_numbers<[1], [0], [0], [1], [0, 0, 1, 1], [], []>} : vector<32x4xf32>, vector<4x128xf32>, vector<32x128xf32> -> vector<32x128xf32>
    %59 = arith.mulf %58, %49 : vector<32x128xf32>
    %cst_55 = arith.constant dense<0.000000e+00> : vector<128xf32>
    %60 = vector.multi_reduction <add>, %59, %cst_55 [0] : vector<32x128xf32> to vector<128xf32>
    %61 = vector.shape_cast %60 : vector<128xf32> to vector<1x128xf32>
    %62 = vector.broadcast %61 : vector<1x128xf32> to vector<32x128xf32>
    %63 = arith.addf %57, %62 : vector<32x128xf32>
    %cst_56 = arith.constant 2.000000e-01 : f32
    %64 = vector.broadcast %cst_56 : f32 to vector<32x128xf32>
    %65 = arith.mulf %64, %63 : vector<32x128xf32>
    %66 = arith.maximumf %63, %65 : vector<32x128xf32>
    %67 = arith.addf %66, %0 : vector<32x128xf32>
    %cst_57 = arith.constant dense<0xFF800000> : vector<32xf32>
    %68 = vector.multi_reduction <maximumf>, %67, %cst_57 [1] : vector<32x128xf32> to vector<32xf32>
    %69 = vector.shape_cast %68 : vector<32xf32> to vector<32x1xf32>
    %70 = vector.broadcast %69 : vector<32x1xf32> to vector<32x128xf32>
    %71 = arith.subf %67, %70 : vector<32x128xf32>
    %72 = math.exp %71 : vector<32x128xf32>
    %73 = arith.truncf %72 : vector<32x128xf32> to vector<32x128xbf16>
    %74 = arith.truncf %54 : vector<32x32xf32> to vector<32x32xbf16>
    %75 = tpu.concatenate %74, %74, %74, %74 in 0 : vector<32x32xbf16>, vector<32x32xbf16>, vector<32x32xbf16>, vector<32x32xbf16> -> vector<128x32xbf16>
    %76 = arith.mulf %75, %51 : vector<128x32xbf16>
    %cst_58 = arith.constant dense<0.000000e+00> : vector<32x32xf32>
    %77 = tpu.matmul %73, %76, %cst_58 {dimension_numbers = #tpu.dot_dimension_numbers<[1], [0], [0], [1], [0, 0, 1, 1], [], []>} : vector<32x128xbf16>, vector<128x32xbf16>, vector<32x32xf32> -> vector<32x32xf32>
    %cst_59 = arith.constant dense<0.000000e+00> : vector<32x4xf32>
    %78 = tpu.matmul %73, %50, %cst_59 {dimension_numbers = #tpu.dot_dimension_numbers<[1], [0], [0], [1], [0, 0, 1, 1], [], []>} : vector<32x128xbf16>, vector<128x4xbf16>, vector<32x4xf32> -> vector<32x4xf32>
    %79 = tpu.reciprocal %78 {approx = true} : vector<32x4xf32> -> vector<32x4xf32>
    %cst_60 = arith.constant dense<0.000000e+00> : vector<32x32xf32>
    %80 = tpu.matmul %79, %48, %cst_60 {dimension_numbers = #tpu.dot_dimension_numbers<[1], [0], [0], [1], [0, 0, 1, 1], [], []>} : vector<32x4xf32>, vector<4x32xf32>, vector<32x32xf32> -> vector<32x32xf32>
    %81 = arith.mulf %77, %80 : vector<32x32xf32>
    %82 = vector.broadcast %52 : vector<1x32xf32> to vector<32x32xf32>
    %83 = arith.addf %81, %82 : vector<32x32xf32>
    %84 = arith.addf %83, %43 : vector<32x32xf32>
    %cst_61 = arith.constant 0.000000e+00 : f32
    %85 = vector.broadcast %cst_61 : f32 to vector<32x32xf32>
    %86 = arith.maximumf %84, %85 : vector<32x32xf32>
    %c0_62 = arith.constant 0 : index
    %c0_63 = arith.constant 0 : index
    %87 = vector.load %arg20[%c0_62, %c0_63] : memref<32x8xbf16, #tpu.memory_space<vmem>>, vector<32x8xbf16>
    %c0_64 = arith.constant 0 : index
    %c0_65 = arith.constant 0 : index
    %88 = vector.load %arg21[%c0_64, %c0_65] : memref<8x2xf32, #tpu.memory_space<vmem>>, vector<8x2xf32>
    %c0_66 = arith.constant 0 : index
    %c0_67 = arith.constant 0 : index
    %89 = vector.load %arg22[%c0_66, %c0_67] : memref<8x2xf32, #tpu.memory_space<vmem>>, vector<8x2xf32>
    %c0_68 = arith.constant 0 : index
    %c0_69 = arith.constant 0 : index
    %90 = vector.load %arg23[%c0_68, %c0_69] : memref<2x64xf32, #tpu.memory_space<vmem>>, vector<2x64xf32>
    %c0_70 = arith.constant 0 : index
    %c0_71 = arith.constant 0 : index
    %91 = vector.load %arg24[%c0_70, %c0_71] : memref<2x8xf32, #tpu.memory_space<vmem>>, vector<2x8xf32>
    %c0_72 = arith.constant 0 : index
    %c0_73 = arith.constant 0 : index
    %92 = vector.load %arg25[%c0_72, %c0_73] : memref<32x64xf32, #tpu.memory_space<vmem>>, vector<32x64xf32>
    %c0_74 = arith.constant 0 : index
    %c0_75 = arith.constant 0 : index
    %93 = vector.load %arg26[%c0_74, %c0_75] : memref<64x2xbf16, #tpu.memory_space<vmem>>, vector<64x2xbf16>
    %c0_76 = arith.constant 0 : index
    %c0_77 = arith.constant 0 : index
    %94 = vector.load %arg27[%c0_76, %c0_77] : memref<64x8xbf16, #tpu.memory_space<vmem>>, vector<64x8xbf16>
    %c0_78 = arith.constant 0 : index
    %c0_79 = arith.constant 0 : index
    %95 = vector.load %arg28[%c0_78, %c0_79] : memref<1x4xf32, #tpu.memory_space<vmem>>, vector<1x4xf32>
    %c0_80 = arith.constant 0 : index
    %c0_81 = arith.constant 0 : index
    %96 = vector.load %arg29[%c0_80, %c0_81] : memref<8x4xf32, #tpu.memory_space<vmem>>, vector<8x4xf32>
    %97 = vector.extract_strided_slice %0 {offsets = [0, 0], sizes = [32, 64], strides = [1, 1]} : vector<32x128xf32> to vector<32x64xf32>
    %98 = arith.truncf %86 : vector<32x32xf32> to vector<32x32xbf16>
    %cst_82 = arith.constant dense<0.000000e+00> : vector<32x8xf32>
    %99 = tpu.matmul %98, %87, %cst_82 {dimension_numbers = #tpu.dot_dimension_numbers<[1], [0], [0], [1], [0, 0, 1, 1], [], []>} : vector<32x32xbf16>, vector<32x8xbf16>, vector<32x8xf32> -> vector<32x8xf32>
    %cst_83 = arith.constant dense<0.000000e+00> : vector<32x2xf32>
    %100 = tpu.matmul %99, %88, %cst_83 {dimension_numbers = #tpu.dot_dimension_numbers<[1], [0], [0], [1], [0, 0, 1, 1], [], []>} : vector<32x8xf32>, vector<8x2xf32>, vector<32x2xf32> -> vector<32x2xf32>
    %cst_84 = arith.constant dense<0.000000e+00> : vector<32x2xf32>
    %101 = tpu.matmul %99, %89, %cst_84 {dimension_numbers = #tpu.dot_dimension_numbers<[1], [0], [0], [1], [0, 0, 1, 1], [], []>} : vector<32x8xf32>, vector<8x2xf32>, vector<32x2xf32> -> vector<32x2xf32>
    %cst_85 = arith.constant dense<0.000000e+00> : vector<32x64xf32>
    %102 = tpu.matmul %100, %90, %cst_85 {dimension_numbers = #tpu.dot_dimension_numbers<[1], [0], [0], [1], [0, 0, 1, 1], [], []>} : vector<32x2xf32>, vector<2x64xf32>, vector<32x64xf32> -> vector<32x64xf32>
    %cst_86 = arith.constant dense<0.000000e+00> : vector<32x64xf32>
    %103 = tpu.matmul %101, %90, %cst_86 {dimension_numbers = #tpu.dot_dimension_numbers<[1], [0], [0], [1], [0, 0, 1, 1], [], []>} : vector<32x2xf32>, vector<2x64xf32>, vector<32x64xf32> -> vector<32x64xf32>
    %104 = arith.mulf %103, %92 : vector<32x64xf32>
    %cst_87 = arith.constant dense<0.000000e+00> : vector<64xf32>
    %105 = vector.multi_reduction <add>, %104, %cst_87 [0] : vector<32x64xf32> to vector<64xf32>
    %106 = vector.shape_cast %105 : vector<64xf32> to vector<1x64xf32>
    %107 = vector.broadcast %106 : vector<1x64xf32> to vector<32x64xf32>
    %108 = arith.addf %102, %107 : vector<32x64xf32>
    %cst_88 = arith.constant 2.000000e-01 : f32
    %109 = vector.broadcast %cst_88 : f32 to vector<32x64xf32>
    %110 = arith.mulf %109, %108 : vector<32x64xf32>
    %111 = arith.maximumf %108, %110 : vector<32x64xf32>
    %112 = arith.addf %111, %97 : vector<32x64xf32>
    %cst_89 = arith.constant dense<0xFF800000> : vector<32xf32>
    %113 = vector.multi_reduction <maximumf>, %112, %cst_89 [1] : vector<32x64xf32> to vector<32xf32>
    %114 = vector.shape_cast %113 : vector<32xf32> to vector<32x1xf32>
    %115 = vector.broadcast %114 : vector<32x1xf32> to vector<32x64xf32>
    %116 = arith.subf %112, %115 : vector<32x64xf32>
    %117 = math.exp %116 : vector<32x64xf32>
    %118 = arith.truncf %117 : vector<32x64xf32> to vector<32x64xbf16>
    %119 = arith.truncf %99 : vector<32x8xf32> to vector<32x8xbf16>
    %120 = tpu.concatenate %119, %119 in 0 : vector<32x8xbf16>, vector<32x8xbf16> -> vector<64x8xbf16>
    %121 = arith.mulf %120, %94 : vector<64x8xbf16>
    %cst_90 = arith.constant dense<0.000000e+00> : vector<32x8xf32>
    %122 = tpu.matmul %118, %121, %cst_90 {dimension_numbers = #tpu.dot_dimension_numbers<[1], [0], [0], [1], [0, 0, 1, 1], [], []>} : vector<32x64xbf16>, vector<64x8xbf16>, vector<32x8xf32> -> vector<32x8xf32>
    %cst_91 = arith.constant dense<0.000000e+00> : vector<32x2xf32>
    %123 = tpu.matmul %118, %93, %cst_91 {dimension_numbers = #tpu.dot_dimension_numbers<[1], [0], [0], [1], [0, 0, 1, 1], [], []>} : vector<32x64xbf16>, vector<64x2xbf16>, vector<32x2xf32> -> vector<32x2xf32>
    %124 = tpu.reciprocal %123 {approx = true} : vector<32x2xf32> -> vector<32x2xf32>
    %cst_92 = arith.constant dense<0.000000e+00> : vector<32x8xf32>
    %125 = tpu.matmul %124, %91, %cst_92 {dimension_numbers = #tpu.dot_dimension_numbers<[1], [0], [0], [1], [0, 0, 1, 1], [], []>} : vector<32x2xf32>, vector<2x8xf32>, vector<32x8xf32> -> vector<32x8xf32>
    %126 = arith.mulf %122, %125 : vector<32x8xf32>
    %cst_93 = arith.constant dense<0.000000e+00> : vector<32x4xf32>
    %127 = tpu.matmul %126, %96, %cst_93 {dimension_numbers = #tpu.dot_dimension_numbers<[1], [0], [0], [1], [0, 0, 1, 1], [], []>} : vector<32x8xf32>, vector<8x4xf32>, vector<32x4xf32> -> vector<32x4xf32>
    %128 = vector.broadcast %95 : vector<1x4xf32> to vector<32x4xf32>
    %129 = arith.addf %127, %128 : vector<32x4xf32>
    %c0_94 = arith.constant 0 : index
    %c0_95 = arith.constant 0 : index
    %130 = vector.load %arg30[%c0_94, %c0_95] : memref<32x4xf32, #tpu.memory_space<vmem>>, vector<32x4xf32>
    tpu.vector_store %arg30[%c0_94, %c0_95], %129 {strides = array<i32>} : memref<32x4xf32, #tpu.memory_space<vmem>>, vector<32x4xf32>,
    return
  }
}

</mosaic_0001>

<llo_original>
// kernel: tile.39
$region0: #{tile.39}
  %s0 = inlined_call_operand.vmem [shape: f32[32,2,32], index: 0, kind: input, shape index: {}]
  %s1 = inlined_call_operand.vmem [shape: f32[32,64], index: 1, kind: output, shape index: {}]
  $region1: #{tile.39} parent=0
    #allocation0 [shape = 'u8[131072]{0}', space=vmem, size = 0x20000, scoped, tag = 'scoped mem for input reshape']
    %s3 = sshll.u32 1, 2
    %s4 = ssub.s32 %s3, 1
    %s5 = smul.addr 2, 31
    %s6 = scalar_lea.vmem %s0, %s5
    %v7 = vld [vmem:[%s6] sm:%s4]
    %s8 = scalar_lea.vmem [#allocation0], 248
    %9 = vst [vmem:[%s8] sm:%s4] %v7
    %s10 = smul.addr 2, 30
    %s11 = scalar_lea.vmem %s0, %s10
    %v12 = vld [vmem:[%s11] sm:%s4]
    %s13 = scalar_lea.vmem [#allocation0], 240
    %14 = vst [vmem:[%s13] sm:%s4] %v12
    %s15 = smul.addr 2, 29
    %s16 = scalar_lea.vmem %s0, %s15
    %v17 = vld [vmem:[%s16] sm:%s4]
    %s18 = scalar_lea.vmem [#allocation0], 232
    %19 = vst [vmem:[%s18] sm:%s4] %v17
    %s20 = smul.addr 2, 28
    %s21 = scalar_lea.vmem %s0, %s20
    %v22 = vld [vmem:[%s21] sm:%s4]
    %s23 = scalar_lea.vmem [#allocation0], 224
    %24 = vst [vmem:[%s23] sm:%s4] %v22
    %s25 = smul.addr 2, 27
    %s26 = scalar_lea.vmem %s0, %s25
    %v27 = vld [vmem:[%s26] sm:%s4]
    %s28 = scalar_lea.vmem [#allocation0], 216
    %29 = vst [vmem:[%s28] sm:%s4] %v27
    %s30 = smul.addr 2, 26
    %s31 = scalar_lea.vmem %s0, %s30
    %v32 = vld [vmem:[%s31] sm:%s4]
    %s33 = scalar_lea.vmem [#allocation0], 208
    %34 = vst [vmem:[%s33] sm:%s4] %v32
    %s35 = smul.addr 2, 25
    %s36 = scalar_lea.vmem %s0, %s35
    %v37 = vld [vmem:[%s36] sm:%s4]
    %s38 = scalar_lea.vmem [#allocation0], 200
    %39 = vst [vmem:[%s38] sm:%s4] %v37
    %s40 = smul.addr 2, 24
    %s41 = scalar_lea.vmem %s0, %s40
    %v42 = vld [vmem:[%s41] sm:%s4]
    %s43 = scalar_lea.vmem [#allocation0], 192
    %44 = vst [vmem:[%s43] sm:%s4] %v42
    %s45 = smul.addr 2, 23
    %s46 = scalar_lea.vmem %s0, %s45
    %v47 = vld [vmem:[%s46] sm:%s4]
    %s48 = scalar_lea.vmem [#allocation0], 184
    %49 = vst [vmem:[%s48] sm:%s4] %v47
    %s50 = smul.addr 2, 22
    %s51 = scalar_lea.vmem %s0, %s50
    %v52 = vld [vmem:[%s51] sm:%s4]
    %s53 = scalar_lea.vmem [#allocation0], 176
    %54 = vst [vmem:[%s53] sm:%s4] %v52
    %s55 = smul.addr 2, 21
    %s56 = scalar_lea.vmem %s0, %s55
    %v57 = vld [vmem:[%s56] sm:%s4]
    %s58 = scalar_lea.vmem [#allocation0], 168
    %59 = vst [vmem:[%s58] sm:%s4] %v57
    %s60 = smul.addr 2, 20
    %s61 = scalar_lea.vmem %s0, %s60
    %v62 = vld [vmem:[%s61] sm:%s4]
    %s63 = scalar_lea.vmem [#allocation0], 160
    %64 = vst [vmem:[%s63] sm:%s4] %v62
    %s65 = smul.addr 2, 19
    %s66 = scalar_lea.vmem %s0, %s65
    %v67 = vld [vmem:[%s66] sm:%s4]
    %s68 = scalar_lea.vmem [#allocation0], 152
    %69 = vst [vmem:[%s68] sm:%s4] %v67
    %s70 = smul.addr 2, 18
    %s71 = scalar_lea.vmem %s0, %s70
    %v72 = vld [vmem:[%s71] sm:%s4]
    %s73 = scalar_lea.vmem [#allocation0], 144
    %74 = vst [vmem:[%s73] sm:%s4] %v72
    %s75 = smul.addr 2, 17
    %s76 = scalar_lea.vmem %s0, %s75
    %v77 = vld [vmem:[%s76] sm:%s4]
    %s78 = scalar_lea.vmem [#allocation0], 136
    %79 = vst [vmem:[%s78] sm:%s4] %v77
    %s80 = smul.addr 2, 16
    %s81 = scalar_lea.vmem %s0, %s80
    %v82 = vld [vmem:[%s81] sm:%s4]
    %s83 = scalar_lea.vmem [#allocation0], 128
    %84 = vst [vmem:[%s83] sm:%s4] %v82
    %s85 = smul.addr 2, 15
    %s86 = scalar_lea.vmem %s0, %s85
    %v87 = vld [vmem:[%s86] sm:%s4]
    %s88 = scalar_lea.vmem [#allocation0], 120
    %89 = vst [vmem:[%s88] sm:%s4] %v87
    %s90 = smul.addr 2, 14
    %s91 = scalar_lea.vmem %s0, %s90
    %v92 = vld [vmem:[%s91] sm:%s4]
    %s93 = scalar_lea.vmem [#allocation0], 112
    %94 = vst [vmem:[%s93] sm:%s4] %v92
    %s95 = smul.addr 2, 13
    %s96 = scalar_lea.vmem %s0, %s95
    %v97 = vld [vmem:[%s96] sm:%s4]
    %s98 = scalar_lea.vmem [#allocation0], 104
    %99 = vst [vmem:[%s98] sm:%s4] %v97
    %s100 = smul.addr 2, 12
    %s101 = scalar_lea.vmem %s0, %s100
    %v102 = vld [vmem:[%s101] sm:%s4]
    %s103 = scalar_lea.vmem [#allocation0], 96
    %104 = vst [vmem:[%s103] sm:%s4] %v102
    %s105 = smul.addr 2, 11
    %s106 = scalar_lea.vmem %s0, %s105
    %v107 = vld [vmem:[%s106] sm:%s4]
    %s108 = scalar_lea.vmem [#allocation0], 88
    %109 = vst [vmem:[%s108] sm:%s4] %v107
    %s110 = smul.addr 2, 10
    %s111 = scalar_lea.vmem %s0, %s110
    %v112 = vld [vmem:[%s111] sm:%s4]
    %s113 = scalar_lea.vmem [#allocation0], 80
    %114 = vst [vmem:[%s113] sm:%s4] %v112
    %s115 = smul.addr 2, 9
    %s116 = scalar_lea.vmem %s0, %s115
    %v117 = vld [vmem:[%s116] sm:%s4]
    %s118 = scalar_lea.vmem [#allocation0], 72
    %119 = vst [vmem:[%s118] sm:%s4] %v117
    %s120 = smul.addr 2, 8
    %s121 = scalar_lea.vmem %s0, %s120
    %v122 = vld [vmem:[%s121] sm:%s4]
    %s123 = scalar_lea.vmem [#allocation0], 64
    %124 = vst [vmem:[%s123] sm:%s4] %v122
    %s125 = smul.addr 2, 7
    %s126 = scalar_lea.vmem %s0, %s125
    %v127 = vld [vmem:[%s126] sm:%s4]
    %s128 = scalar_lea.vmem [#allocation0], 56
    %129 = vst [vmem:[%s128] sm:%s4] %v127
    %s130 = smul.addr 2, 6
    %s131 = scalar_lea.vmem %s0, %s130
    %v132 = vld [vmem:[%s131] sm:%s4]
    %s133 = scalar_lea.vmem [#allocation0], 48
    %134 = vst [vmem:[%s133] sm:%s4] %v132
    %s135 = smul.addr 2, 5
    %s136 = scalar_lea.vmem %s0, %s135
    %v137 = vld [vmem:[%s136] sm:%s4]
    %s138 = scalar_lea.vmem [#allocation0], 40
    %139 = vst [vmem:[%s138] sm:%s4] %v137
    %s140 = smul.addr 2, 4
    %s141 = scalar_lea.vmem %s0, %s140
    %v142 = vld [vmem:[%s141] sm:%s4]
    %s143 = scalar_lea.vmem [#allocation0], 32
    %144 = vst [vmem:[%s143] sm:%s4] %v142
    %s145 = smul.addr 2, 3
    %s146 = scalar_lea.vmem %s0, %s145
    %v147 = vld [vmem:[%s146] sm:%s4]
    %s148 = scalar_lea.vmem [#allocation0], 24
    %149 = vst [vmem:[%s148] sm:%s4] %v147
    %s150 = smul.addr 2, 2
    %s151 = scalar_lea.vmem %s0, %s150
    %v152 = vld [vmem:[%s151] sm:%s4]
    %s153 = scalar_lea.vmem [#allocation0], 16
    %154 = vst [vmem:[%s153] sm:%s4] %v152
    %s155 = scalar_lea.vmem %s0, 2
    %v156 = vld [vmem:[%s155] sm:%s4]
    %s157 = scalar_lea.vmem [#allocation0], 8
    %158 = vst [vmem:[%s157] sm:%s4] %v156
    %v159 = vld [vmem:[%s0] sm:%s4]
    %160 = vst [vmem:[#allocation0] sm:%s4] %v159
    %v161 = vld [vmem:[#allocation0] ss:$8 sm:$0xf]
    %v162 = vld [vmem:[#allocation0] ss:$8 sm:$0xf0]
    %vm163 = vcmask 1047556
    %v164 = vsel %vm163, %v162, %v161
    %vm165 = vcmask 261120
    %166 = vst.msk [vmem:[%s1] sm:$0xff] %vm165, %v164
    %s167 = scalar_lea.vmem [#allocation0], 64
    %v168 = vld [vmem:[%s167] ss:$8 sm:$0xf]
    %s169 = scalar_lea.vmem [#allocation0], 64
    %v170 = vld [vmem:[%s169] ss:$8 sm:$0xf0]
    %vm171 = vcmask 1047556
    %v172 = vsel %vm171, %v170, %v168
    %vm173 = vcmask 261120
    %s174 = scalar_lea.vmem %s1, 8
    %175 = vst.msk [vmem:[%s174] sm:$0xff] %vm173, %v172
    %s176 = scalar_lea.vmem [#allocation0], 128
    %v177 = vld [vmem:[%s176] ss:$8 sm:$0xf]
    %s178 = scalar_lea.vmem [#allocation0], 128
    %v179 = vld [vmem:[%s178] ss:$8 sm:$0xf0]
    %vm180 = vcmask 1047556
    %v181 = vsel %vm180, %v179, %v177
    %vm182 = vcmask 261120
    %s183 = scalar_lea.vmem %s1, 16
    %184 = vst.msk [vmem:[%s183] sm:$0xff] %vm182, %v181
    %s185 = scalar_lea.vmem [#allocation0], 192
    %v186 = vld [vmem:[%s185] ss:$8 sm:$0xf]
    %s187 = scalar_lea.vmem [#allocation0], 192
    %v188 = vld [vmem:[%s187] ss:$8 sm:$0xf0]
    %vm189 = vcmask 1047556
    %v190 = vsel %vm189, %v188, %v186
    %vm191 = vcmask 261120
    %s192 = scalar_lea.vmem %s1, 24
    %193 = vst.msk [vmem:[%s192] sm:$0xff] %vm191, %v190
    %s194 = scalar_lea.vmem [#allocation0], 1
    %v195 = vld [vmem:[%s194] ss:$8 sm:$0xf]
    %s196 = scalar_lea.vmem [#allocation0], 1
    %v197 = vld [vmem:[%s196] ss:$8 sm:$0xf0]
    %vm198 = vcmask 1047556
    %v199 = vsel %vm198, %v197, %v195
    %200 = vrot.lane.b32.xlu0 %v199, 32
    %v201 = vpop.permute.xlu0 %200
    %vm202 = vcmask 523520
    %203 = vst.msk [vmem:[%s1] sm:$0xff] %vm202, %v201
    %s204 = scalar_lea.vmem [#allocation0], 65
    %v205 = vld [vmem:[%s204] ss:$8 sm:$0xf]
    %s206 = scalar_lea.vmem [#allocation0], 65
    %v207 = vld [vmem:[%s206] ss:$8 sm:$0xf0]
    %vm208 = vcmask 1047556
    %v209 = vsel %vm208, %v207, %v205
    %210 = vrot.lane.b32.xlu0 %v209, 32
    %v211 = vpop.permute.xlu0 %210
    %vm212 = vcmask 523520
    %s213 = scalar_lea.vmem %s1, 8
    %214 = vst.msk [vmem:[%s213] sm:$0xff] %vm212, %v211
    %s215 = scalar_lea.vmem [#allocation0], 129
    %v216 = vld [vmem:[%s215] ss:$8 sm:$0xf]
    %s217 = scalar_lea.vmem [#allocation0], 129
    %v218 = vld [vmem:[%s217] ss:$8 sm:$0xf0]
    %vm219 = vcmask 1047556
    %v220 = vsel %vm219, %v218, %v216
    %221 = vrot.lane.b32.xlu0 %v220, 32
    %v222 = vpop.permute.xlu0 %221
    %vm223 = vcmask 523520
    %s224 = scalar_lea.vmem %s1, 16
    %225 = vst.msk [vmem:[%s224] sm:$0xff] %vm223, %v222
    %s226 = scalar_lea.vmem [#allocation0], 193
    %v227 = vld [vmem:[%s226] ss:$8 sm:$0xf]
    %s228 = scalar_lea.vmem [#allocation0], 193
    %v229 = vld [vmem:[%s228] ss:$8 sm:$0xf0]
    %vm230 = vcmask 1047556
    %v231 = vsel %vm230, %v229, %v227
    %232 = vrot.lane.b32.xlu0 %v231, 32
    %v233 = vpop.permute.xlu0 %232
    %vm234 = vcmask 523520
    %s235 = scalar_lea.vmem %s1, 24
    %236 = vst.msk [vmem:[%s235] sm:$0xff] %vm234, %v233

// kernel: tile.29
$region0: #{tile.29}
  %s0 = inlined_call_operand.vmem [shape: f32[32,4,32], index: 0, kind: input, shape index: {}]
  %s1 = inlined_call_operand.vmem [shape: f32[32,128], index: 1, kind: output, shape index: {}]
  $region1: #{tile.29} parent=0
    #allocation0 [shape = 'u8[131072]{0}', space=vmem, size = 0x20000, scoped, tag = 'scoped mem for input reshape']
    %s3 = sshll.u32 1, 4
    %s4 = ssub.s32 %s3, 1
    %s5 = smul.addr 4, 31
    %s6 = scalar_lea.vmem %s0, %s5
    %v7 = vld [vmem:[%s6] sm:%s4]
    %s8 = scalar_lea.vmem [#allocation0], 248
    %9 = vst [vmem:[%s8] sm:%s4] %v7
    %s10 = smul.addr 4, 30
    %s11 = scalar_lea.vmem %s0, %s10
    %v12 = vld [vmem:[%s11] sm:%s4]
    %s13 = scalar_lea.vmem [#allocation0], 240
    %14 = vst [vmem:[%s13] sm:%s4] %v12
    %s15 = smul.addr 4, 29
    %s16 = scalar_lea.vmem %s0, %s15
    %v17 = vld [vmem:[%s16] sm:%s4]
    %s18 = scalar_lea.vmem [#allocation0], 232
    %19 = vst [vmem:[%s18] sm:%s4] %v17
    %s20 = smul.addr 4, 28
    %s21 = scalar_lea.vmem %s0, %s20
    %v22 = vld [vmem:[%s21] sm:%s4]
    %s23 = scalar_lea.vmem [#allocation0], 224
    %24 = vst [vmem:[%s23] sm:%s4] %v22
    %s25 = smul.addr 4, 27
    %s26 = scalar_lea.vmem %s0, %s25
    %v27 = vld [vmem:[%s26] sm:%s4]
    %s28 = scalar_lea.vmem [#allocation0], 216
    %29 = vst [vmem:[%s28] sm:%s4] %v27
    %s30 = smul.addr 4, 26
    %s31 = scalar_lea.vmem %s0, %s30
    %v32 = vld [vmem:[%s31] sm:%s4]
    %s33 = scalar_lea.vmem [#allocation0], 208
    %34 = vst [vmem:[%s33] sm:%s4] %v32
    %s35 = smul.addr 4, 25
    %s36 = scalar_lea.vmem %s0, %s35
    %v37 = vld [vmem:[%s36] sm:%s4]
    %s38 = scalar_lea.vmem [#allocation0], 200
    %39 = vst [vmem:[%s38] sm:%s4] %v37
    %s40 = smul.addr 4, 24
    %s41 = scalar_lea.vmem %s0, %s40
    %v42 = vld [vmem:[%s41] sm:%s4]
    %s43 = scalar_lea.vmem [#allocation0], 192
    %44 = vst [vmem:[%s43] sm:%s4] %v42
    %s45 = smul.addr 4, 23
    %s46 = scalar_lea.vmem %s0, %s45
    %v47 = vld [vmem:[%s46] sm:%s4]
    %s48 = scalar_lea.vmem [#allocation0], 184
    %49 = vst [vmem:[%s48] sm:%s4] %v47
    %s50 = smul.addr 4, 22
    %s51 = scalar_lea.vmem %s0, %s50
    %v52 = vld [vmem:[%s51] sm:%s4]
    %s53 = scalar_lea.vmem [#allocation0], 176
    %54 = vst [vmem:[%s53] sm:%s4] %v52
    %s55 = smul.addr 4, 21
    %s56 = scalar_lea.vmem %s0, %s55
    %v57 = vld [vmem:[%s56] sm:%s4]
    %s58 = scalar_lea.vmem [#allocation0], 168
    %59 = vst [vmem:[%s58] sm:%s4] %v57
    %s60 = smul.addr 4, 20
    %s61 = scalar_lea.vmem %s0, %s60
    %v62 = vld [vmem:[%s61] sm:%s4]
    %s63 = scalar_lea.vmem [#allocation0], 160
    %64 = vst [vmem:[%s63] sm:%s4] %v62
    %s65 = smul.addr 4, 19
    %s66 = scalar_lea.vmem %s0, %s65
    %v67 = vld [vmem:[%s66] sm:%s4]
    %s68 = scalar_lea.vmem [#allocation0], 152
    %69 = vst [vmem:[%s68] sm:%s4] %v67
    %s70 = smul.addr 4, 18
    %s71 = scalar_lea.vmem %s0, %s70
    %v72 = vld [vmem:[%s71] sm:%s4]
    %s73 = scalar_lea.vmem [#allocation0], 144
    %74 = vst [vmem:[%s73] sm:%s4] %v72
    %s75 = smul.addr 4, 17
    %s76 = scalar_lea.vmem %s0, %s75
    %v77 = vld [vmem:[%s76] sm:%s4]
    %s78 = scalar_lea.vmem [#allocation0], 136
    %79 = vst [vmem:[%s78] sm:%s4] %v77
    %s80 = smul.addr 4, 16
    %s81 = scalar_lea.vmem %s0, %s80
    %v82 = vld [vmem:[%s81] sm:%s4]
    %s83 = scalar_lea.vmem [#allocation0], 128
    %84 = vst [vmem:[%s83] sm:%s4] %v82
    %s85 = smul.addr 4, 15
    %s86 = scalar_lea.vmem %s0, %s85
    %v87 = vld [vmem:[%s86] sm:%s4]
    %s88 = scalar_lea.vmem [#allocation0], 120
    %89 = vst [vmem:[%s88] sm:%s4] %v87
    %s90 = smul.addr 4, 14
    %s91 = scalar_lea.vmem %s0, %s90
    %v92 = vld [vmem:[%s91] sm:%s4]
    %s93 = scalar_lea.vmem [#allocation0], 112
    %94 = vst [vmem:[%s93] sm:%s4] %v92
    %s95 = smul.addr 4, 13
    %s96 = scalar_lea.vmem %s0, %s95
    %v97 = vld [vmem:[%s96] sm:%s4]
    %s98 = scalar_lea.vmem [#allocation0], 104
    %99 = vst [vmem:[%s98] sm:%s4] %v97
    %s100 = smul.addr 4, 12
    %s101 = scalar_lea.vmem %s0, %s100
    %v102 = vld [vmem:[%s101] sm:%s4]
    %s103 = scalar_lea.vmem [#allocation0], 96
    %104 = vst [vmem:[%s103] sm:%s4] %v102
    %s105 = smul.addr 4, 11
    %s106 = scalar_lea.vmem %s0, %s105
    %v107 = vld [vmem:[%s106] sm:%s4]
    %s108 = scalar_lea.vmem [#allocation0], 88
    %109 = vst [vmem:[%s108] sm:%s4] %v107
    %s110 = smul.addr 4, 10
    %s111 = scalar_lea.vmem %s0, %s110
    %v112 = vld [vmem:[%s111] sm:%s4]
    %s113 = scalar_lea.vmem [#allocation0], 80
    %114 = vst [vmem:[%s113] sm:%s4] %v112
    %s115 = smul.addr 4, 9
    %s116 = scalar_lea.vmem %s0, %s115
    %v117 = vld [vmem:[%s116] sm:%s4]
    %s118 = scalar_lea.vmem [#allocation0], 72
    %119 = vst [vmem:[%s118] sm:%s4] %v117
    %s120 = smul.addr 4, 8
    %s121 = scalar_lea.vmem %s0, %s120
    %v122 = vld [vmem:[%s121] sm:%s4]
    %s123 = scalar_lea.vmem [#allocation0], 64
    %124 = vst [vmem:[%s123] sm:%s4] %v122
    %s125 = smul.addr 4, 7
    %s126 = scalar_lea.vmem %s0, %s125
    %v127 = vld [vmem:[%s126] sm:%s4]
    %s128 = scalar_lea.vmem [#allocation0], 56
    %129 = vst [vmem:[%s128] sm:%s4] %v127
    %s130 = smul.addr 4, 6
    %s131 = scalar_lea.vmem %s0, %s130
    %v132 = vld [vmem:[%s131] sm:%s4]
    %s133 = scalar_lea.vmem [#allocation0], 48
    %134 = vst [vmem:[%s133] sm:%s4] %v132
    %s135 = smul.addr 4, 5
    %s136 = scalar_lea.vmem %s0, %s135
    %v137 = vld [vmem:[%s136] sm:%s4]
    %s138 = scalar_lea.vmem [#allocation0], 40
    %139 = vst [vmem:[%s138] sm:%s4] %v137
    %s140 = smul.addr 4, 4
    %s141 = scalar_lea.vmem %s0, %s140
    %v142 = vld [vmem:[%s141] sm:%s4]
    %s143 = scalar_lea.vmem [#allocation0], 32
    %144 = vst [vmem:[%s143] sm:%s4] %v142
    %s145 = smul.addr 4, 3
    %s146 = scalar_lea.vmem %s0, %s145
    %v147 = vld [vmem:[%s146] sm:%s4]
    %s148 = scalar_lea.vmem [#allocation0], 24
    %149 = vst [vmem:[%s148] sm:%s4] %v147
    %s150 = smul.addr 4, 2
    %s151 = scalar_lea.vmem %s0, %s150
    %v152 = vld [vmem:[%s151] sm:%s4]
    %s153 = scalar_lea.vmem [#allocation0], 16
    %154 = vst [vmem:[%s153] sm:%s4] %v152
    %s155 = scalar_lea.vmem %s0, 4
    %v156 = vld [vmem:[%s155] sm:%s4]
    %s157 = scalar_lea.vmem [#allocation0], 8
    %158 = vst [vmem:[%s157] sm:%s4] %v156
    %v159 = vld [vmem:[%s0] sm:%s4]
    %160 = vst [vmem:[#allocation0] sm:%s4] %v159
    %v161 = vld [vmem:[#allocation0] ss:$8 sm:$0xf]
    %v162 = vld [vmem:[#allocation0] ss:$8 sm:$0xf0]
    %vm163 = vcmask 1047556
    %v164 = vsel %vm163, %v162, %v161
    %vm165 = vcmask 261120
    %166 = vst.msk [vmem:[%s1] sm:$0xff] %vm165, %v164
    %s167 = scalar_lea.vmem [#allocation0], 64
    %v168 = vld [vmem:[%s167] ss:$8 sm:$0xf]
    %s169 = scalar_lea.vmem [#allocation0], 64
    %v170 = vld [vmem:[%s169] ss:$8 sm:$0xf0]
    %vm171 = vcmask 1047556
    %v172 = vsel %vm171, %v170, %v168
    %vm173 = vcmask 261120
    %s174 = scalar_lea.vmem %s1, 8
    %175 = vst.msk [vmem:[%s174] sm:$0xff] %vm173, %v172
    %s176 = scalar_lea.vmem [#allocation0], 128
    %v177 = vld [vmem:[%s176] ss:$8 sm:$0xf]
    %s178 = scalar_lea.vmem [#allocation0], 128
    %v179 = vld [vmem:[%s178] ss:$8 sm:$0xf0]
    %vm180 = vcmask 1047556
    %v181 = vsel %vm180, %v179, %v177
    %vm182 = vcmask 261120
    %s183 = scalar_lea.vmem %s1, 16
    %184 = vst.msk [vmem:[%s183] sm:$0xff] %vm182, %v181
    %s185 = scalar_lea.vmem [#allocation0], 192
    %v186 = vld [vmem:[%s185] ss:$8 sm:$0xf]
    %s187 = scalar_lea.vmem [#allocation0], 192
    %v188 = vld [vmem:[%s187] ss:$8 sm:$0xf0]
    %vm189 = vcmask 1047556
    %v190 = vsel %vm189, %v188, %v186
    %vm191 = vcmask 261120
    %s192 = scalar_lea.vmem %s1, 24
    %193 = vst.msk [vmem:[%s192] sm:$0xff] %vm191, %v190
    %s194 = scalar_lea.vmem [#allocation0], 3
    %v195 = vld [vmem:[%s194] ss:$8 sm:$0xf]
    %s196 = scalar_lea.vmem [#allocation0], 3
    %v197 = vld [vmem:[%s196] ss:$8 sm:$0xf0]
    %vm198 = vcmask 1047556
    %v199 = vsel %vm198, %v197, %v195
    %200 = vrot.lane.b32.xlu0 %v199, 96
    %v201 = vpop.permute.xlu0 %200
    %vm202 = vcmask 1048320
    %203 = vst.msk [vmem:[%s1] sm:$0xff] %vm202, %v201
    %s204 = scalar_lea.vmem [#allocation0], 67
    %v205 = vld [vmem:[%s204] ss:$8 sm:$0xf]
    %s206 = scalar_lea.vmem [#allocation0], 67
    %v207 = vld [vmem:[%s206] ss:$8 sm:$0xf0]
    %vm208 = vcmask 1047556
    %v209 = vsel %vm208, %v207, %v205
    %210 = vrot.lane.b32.xlu0 %v209, 96
    %v211 = vpop.permute.xlu0 %210
    %vm212 = vcmask 1048320
    %s213 = scalar_lea.vmem %s1, 8
    %214 = vst.msk [vmem:[%s213] sm:$0xff] %vm212, %v211
    %s215 = scalar_lea.vmem [#allocation0], 131
    %v216 = vld [vmem:[%s215] ss:$8 sm:$0xf]
    %s217 = scalar_lea.vmem [#allocation0], 131
    %v218 = vld [vmem:[%s217] ss:$8 sm:$0xf0]
    %vm219 = vcmask 1047556
    %v220 = vsel %vm219, %v218, %v216
    %221 = vrot.lane.b32.xlu0 %v220, 96
    %v222 = vpop.permute.xlu0 %221
    %vm223 = vcmask 1048320
    %s224 = scalar_lea.vmem %s1, 16
    %225 = vst.msk [vmem:[%s224] sm:$0xff] %vm223, %v222
    %s226 = scalar_lea.vmem [#allocation0], 195
    %v227 = vld [vmem:[%s226] ss:$8 sm:$0xf]
    %s228 = scalar_lea.vmem [#allocation0], 195
    %v229 = vld [vmem:[%s228] ss:$8 sm:$0xf0]
    %vm230 = vcmask 1047556
    %v231 = vsel %vm230, %v229, %v227
    %232 = vrot.lane.b32.xlu0 %v231, 96
    %v233 = vpop.permute.xlu0 %232
    %vm234 = vcmask 1048320
    %s235 = scalar_lea.vmem %s1, 24
    %236 = vst.msk [vmem:[%s235] sm:$0xff] %vm234, %v233
    %s237 = scalar_lea.vmem [#allocation0], 2
    %v238 = vld [vmem:[%s237] ss:$8 sm:$0xf]
    %s239 = scalar_lea.vmem [#allocation0], 2
    %v240 = vld [vmem:[%s239] ss:$8 sm:$0xf0]
    %vm241 = vcmask 1047556
    %v242 = vsel %vm241, %v240, %v238
    %243 = vrot.lane.b32.xlu0 %v242, 64
    %v244 = vpop.permute.xlu0 %243
    %vm245 = vcmask 785920
    %246 = vst.msk [vmem:[%s1] sm:$0xff] %vm245, %v244
    %s247 = scalar_lea.vmem [#allocation0], 66
    %v248 = vld [vmem:[%s247] ss:$8 sm:$0xf]
    %s249 = scalar_lea.vmem [#allocation0], 66
    %v250 = vld [vmem:[%s249] ss:$8 sm:$0xf0]
    %vm251 = vcmask 1047556
    %v252 = vsel %vm251, %v250, %v248
    %253 = vrot.lane.b32.xlu0 %v252, 64
    %v254 = vpop.permute.xlu0 %253
    %vm255 = vcmask 785920
    %s256 = scalar_lea.vmem %s1, 8
    %257 = vst.msk [vmem:[%s256] sm:$0xff] %vm255, %v254
    %s258 = scalar_lea.vmem [#allocation0], 130
    %v259 = vld [vmem:[%s258] ss:$8 sm:$0xf]
    %s260 = scalar_lea.vmem [#allocation0], 130
    %v261 = vld [vmem:[%s260] ss:$8 sm:$0xf0]
    %vm262 = vcmask 1047556
    %v263 = vsel %vm262, %v261, %v259
    %264 = vrot.lane.b32.xlu0 %v263, 64
    %v265 = vpop.permute.xlu0 %264
    %vm266 = vcmask 785920
    %s267 = scalar_lea.vmem %s1, 16
    %268 = vst.msk [vmem:[%s267] sm:$0xff] %vm266, %v265
    %s269 = scalar_lea.vmem [#allocation0], 194
    %v270 = vld [vmem:[%s269] ss:$8 sm:$0xf]
    %s271 = scalar_lea.vmem [#allocation0], 194
    %v272 = vld [vmem:[%s271] ss:$8 sm:$0xf0]
    %vm273 = vcmask 1047556
    %v274 = vsel %vm273, %v272, %v270
    %275 = vrot.lane.b32.xlu0 %v274, 64
    %v276 = vpop.permute.xlu0 %275
    %vm277 = vcmask 785920
    %s278 = scalar_lea.vmem %s1, 24
    %279 = vst.msk [vmem:[%s278] sm:$0xff] %vm277, %v276
    %s280 = scalar_lea.vmem [#allocation0], 1
    %v281 = vld [vmem:[%s280] ss:$8 sm:$0xf]
    %s282 = scalar_lea.vmem [#allocation0], 1
    %v283 = vld [vmem:[%s282] ss:$8 sm:$0xf0]
    %vm284 = vcmask 1047556
    %v285 = vsel %vm284, %v283, %v281
    %286 = vrot.lane.b32.xlu0 %v285, 32
    %v287 = vpop.permute.xlu0 %286
    %vm288 = vcmask 523520
    %289 = vst.msk [vmem:[%s1] sm:$0xff] %vm288, %v287
    %s290 = scalar_lea.vmem [#allocation0], 65
    %v291 = vld [vmem:[%s290] ss:$8 sm:$0xf]
    %s292 = scalar_lea.vmem [#allocation0], 65
    %v293 = vld [vmem:[%s292] ss:$8 sm:$0xf0]
    %vm294 = vcmask 1047556
    %v295 = vsel %vm294, %v293, %v291
    %296 = vrot.lane.b32.xlu0 %v295, 32
    %v297 = vpop.permute.xlu0 %296
    %vm298 = vcmask 523520
    %s299 = scalar_lea.vmem %s1, 8
    %300 = vst.msk [vmem:[%s299] sm:$0xff] %vm298, %v297
    %s301 = scalar_lea.vmem [#allocation0], 129
    %v302 = vld [vmem:[%s301] ss:$8 sm:$0xf]
    %s303 = scalar_lea.vmem [#allocation0], 129
    %v304 = vld [vmem:[%s303] ss:$8 sm:$0xf0]
    %vm305 = vcmask 1047556
    %v306 = vsel %vm305, %v304, %v302
    %307 = vrot.lane.b32.xlu0 %v306, 32
    %v308 = vpop.permute.xlu0 %307
    %vm309 = vcmask 523520
    %s310 = scalar_lea.vmem %s1, 16
    %311 = vst.msk [vmem:[%s310] sm:$0xff] %vm309, %v308
    %s312 = scalar_lea.vmem [#allocation0], 193
    %v313 = vld [vmem:[%s312] ss:$8 sm:$0xf]
    %s314 = scalar_lea.vmem [#allocation0], 193
    %v315 = vld [vmem:[%s314] ss:$8 sm:$0xf0]
    %vm316 = vcmask 1047556
    %v317 = vsel %vm316, %v315, %v313
    %318 = vrot.lane.b32.xlu0 %v317, 32
    %v319 = vpop.permute.xlu0 %318
    %vm320 = vcmask 523520
    %s321 = scalar_lea.vmem %s1, 24
    %322 = vst.msk [vmem:[%s321] sm:$0xff] %vm320, %v319

// kernel: gat_forward.1
$region0: #{gat_forward.1}
  #allocation0 [shape = 'u32[]', space=smem, size = 0x4, offset = 0x4, fixed_abs, tag = 'smem constant byte address 0x4 - core index']
  #allocation1 [shape = 'u32[144,128]{1,0:T(1,128)}', space=vmem, size = 0x12000, scoped, tag = 'internal scratch']
  %s0 = inlined_call_operand.smem [shape: u32[31], index: -1, kind: input, shape index: {}]
  %s1 = sld [smem:[%s0]]
  %s2 = scalar_lea.smem %s0, 1
  %s3 = sld [smem:[%s2]]
  %s4 = scalar_lea.smem %s0, 2
  %s5 = sld [smem:[%s4]]
  %s6 = scalar_lea.smem %s0, 3
  %s7 = sld [smem:[%s6]]
  %s8 = scalar_lea.smem %s0, 4
  %s9 = sld [smem:[%s8]]
  %s10 = scalar_lea.smem %s0, 5
  %s11 = sld [smem:[%s10]]
  %s12 = scalar_lea.smem %s0, 6
  %s13 = sld [smem:[%s12]]
  %s14 = scalar_lea.smem %s0, 7
  %s15 = sld [smem:[%s14]]
  %s16 = scalar_lea.smem %s0, 8
  %s17 = sld [smem:[%s16]]
  %s18 = scalar_lea.smem %s0, 9
  %s19 = sld [smem:[%s18]]
  %s20 = scalar_lea.smem %s0, 10
  %s21 = sld [smem:[%s20]]
  %s22 = scalar_lea.smem %s0, 11
  %s23 = sld [smem:[%s22]]
  %s24 = scalar_lea.smem %s0, 12
  %s25 = sld [smem:[%s24]]
  %s26 = scalar_lea.smem %s0, 13
  %s27 = sld [smem:[%s26]]
  %s28 = scalar_lea.smem %s0, 14
  %s29 = sld [smem:[%s28]]
  %s30 = scalar_lea.smem %s0, 15
  %s31 = sld [smem:[%s30]]
  %s32 = scalar_lea.smem %s0, 16
  %s33 = sld [smem:[%s32]]
  %s34 = scalar_lea.smem %s0, 17
  %s35 = sld [smem:[%s34]]
  %s36 = scalar_lea.smem %s0, 18
  %s37 = sld [smem:[%s36]]
  %s38 = scalar_lea.smem %s0, 19
  %s39 = sld [smem:[%s38]]
  %s40 = scalar_lea.smem %s0, 20
  %s41 = sld [smem:[%s40]]
  %s42 = scalar_lea.smem %s0, 21
  %s43 = sld [smem:[%s42]]
  %s44 = scalar_lea.smem %s0, 22
  %s45 = sld [smem:[%s44]]
  %s46 = scalar_lea.smem %s0, 23
  %s47 = sld [smem:[%s46]]
  %s48 = scalar_lea.smem %s0, 24
  %s49 = sld [smem:[%s48]]
  %s50 = scalar_lea.smem %s0, 25
  %s51 = sld [smem:[%s50]]
  %s52 = scalar_lea.smem %s0, 26
  %s53 = sld [smem:[%s52]]
  %s54 = scalar_lea.smem %s0, 27
  %s55 = sld [smem:[%s54]]
  %s56 = scalar_lea.smem %s0, 28
  %s57 = sld [smem:[%s56]]
  %s58 = scalar_lea.smem %s0, 29
  %s59 = sld [smem:[%s58]]
  %s60 = scalar_lea.smem %s0, 30
  %s61 = sld [smem:[%s60]]
  %s62 = sld [smem:[#allocation0]]
  $region130: #{gat_forward.1} parent=0
    _
  %s64 = ssub.s32 1, %s62
  %s65 = scalar_select 0, %s64, %s62
  // Predicated region
  $region2: #{gat_forward.1} parent=0 // pred_check
    _
  $region3: #{gat_forward.1} parent=0 // pred_check_branch
    %67 = sbr.rel (0) target = $region5
  $region4: #{gat_forward.1} parent=0 // pred_region
    _
  $region5: #{gat_forward.1} parent=0 // pred_fallthru
    _
  // Predicated region
  $region6: #{gat_forward.1} parent=0 // pred_check
    _
  $region7: #{gat_forward.1} parent=0 // pred_check_branch
    %69 = sbr.rel (0) target = $region9
  $region8: #{gat_forward.1} parent=0 // pred_region
    _
  $region9: #{gat_forward.1} parent=0 // pred_fallthru
    _
  // Predicated region
  $region10: #{gat_forward.1} parent=0 // pred_check
    _
  $region11: #{gat_forward.1} parent=0 // pred_check_branch
    %71 = sbr.rel (0) target = $region13
  $region12: #{gat_forward.1} parent=0 // pred_region
    _
  $region13: #{gat_forward.1} parent=0 // pred_fallthru
    _
  // Predicated region
  $region14: #{gat_forward.1} parent=0 // pred_check
    _
  $region15: #{gat_forward.1} parent=0 // pred_check_branch
    %73 = sbr.rel (0) target = $region17
  $region16: #{gat_forward.1} parent=0 // pred_region
    _
  $region17: #{gat_forward.1} parent=0 // pred_fallthru
    _
  // Predicated region
  $region18: #{gat_forward.1} parent=0 // pred_check
    _
  $region19: #{gat_forward.1} parent=0 // pred_check_branch
    %75 = sbr.rel (0) target = $region21
  $region20: #{gat_forward.1} parent=0 // pred_region
    _
  $region21: #{gat_forward.1} parent=0 // pred_fallthru
    _
  // Predicated region
  $region22: #{gat_forward.1} parent=0 // pred_check
    _
  $region23: #{gat_forward.1} parent=0 // pred_check_branch
    %77 = sbr.rel (0) target = $region25
  $region24: #{gat_forward.1} parent=0 // pred_region
    _
  $region25: #{gat_forward.1} parent=0 // pred_fallthru
    _
  // Predicated region
  $region26: #{gat_forward.1} parent=0 // pred_check
    _
  $region27: #{gat_forward.1} parent=0 // pred_check_branch
    %79 = sbr.rel (0) target = $region29
  $region28: #{gat_forward.1} parent=0 // pred_region
    _
  $region29: #{gat_forward.1} parent=0 // pred_fallthru
    _
  // Predicated region
  $region30: #{gat_forward.1} parent=0 // pred_check
    _
  $region31: #{gat_forward.1} parent=0 // pred_check_branch
    %81 = sbr.rel (0) target = $region33
  $region32: #{gat_forward.1} parent=0 // pred_region
    _
  $region33: #{gat_forward.1} parent=0 // pred_fallthru
    _
  // Predicated region
  $region34: #{gat_forward.1} parent=0 // pred_check
    _
  $region35: #{gat_forward.1} parent=0 // pred_check_branch
    %83 = sbr.rel (0) target = $region37
  $region36: #{gat_forward.1} parent=0 // pred_region
    _
  $region37: #{gat_forward.1} parent=0 // pred_fallthru
    _
  // Predicated region
  $region38: #{gat_forward.1} parent=0 // pred_check
    _
  $region39: #{gat_forward.1} parent=0 // pred_check_branch
    %85 = sbr.rel (0) target = $region41
  $region40: #{gat_forward.1} parent=0 // pred_region
    _
  $region41: #{gat_forward.1} parent=0 // pred_fallthru
    _
  // Predicated region
  $region42: #{gat_forward.1} parent=0 // pred_check
    _
  $region43: #{gat_forward.1} parent=0 // pred_check_branch
    %87 = sbr.rel (0) target = $region45
  $region44: #{gat_forward.1} parent=0 // pred_region
    _
  $region45: #{gat_forward.1} parent=0 // pred_fallthru
    _
  // Predicated region
  $region46: #{gat_forward.1} parent=0 // pred_check
    _
  $region47: #{gat_forward.1} parent=0 // pred_check_branch
    %89 = sbr.rel (0) target = $region49
  $region48: #{gat_forward.1} parent=0 // pred_region
    _
  $region49: #{gat_forward.1} parent=0 // pred_fallthru
    _
  // Predicated region
  $region50: #{gat_forward.1} parent=0 // pred_check
    _
  $region51: #{gat_forward.1} parent=0 // pred_check_branch
    %91 = sbr.rel (0) target = $region53
  $region52: #{gat_forward.1} parent=0 // pred_region
    _
  $region53: #{gat_forward.1} parent=0 // pred_fallthru
    _
  // Predicated region
  $region54: #{gat_forward.1} parent=0 // pred_check
    _
  $region55: #{gat_forward.1} parent=0 // pred_check_branch
    %93 = sbr.rel (0) target = $region57
  $region56: #{gat_forward.1} parent=0 // pred_region
    _
  $region57: #{gat_forward.1} parent=0 // pred_fallthru
    _
  // Predicated region
  $region58: #{gat_forward.1} parent=0 // pred_check
    _
  $region59: #{gat_forward.1} parent=0 // pred_check_branch
    %95 = sbr.rel (0) target = $region61
  $region60: #{gat_forward.1} parent=0 // pred_region
    _
  $region61: #{gat_forward.1} parent=0 // pred_fallthru
    _
  // Predicated region
  $region62: #{gat_forward.1} parent=0 // pred_check
    _
  $region63: #{gat_forward.1} parent=0 // pred_check_branch
    %97 = sbr.rel (0) target = $region65
  $region64: #{gat_forward.1} parent=0 // pred_region
    _
  $region65: #{gat_forward.1} parent=0 // pred_fallthru
    _
  // Predicated region
  $region66: #{gat_forward.1} parent=0 // pred_check
    _
  $region67: #{gat_forward.1} parent=0 // pred_check_branch
    %99 = sbr.rel (0) target = $region69
  $region68: #{gat_forward.1} parent=0 // pred_region
    _
  $region69: #{gat_forward.1} parent=0 // pred_fallthru
    _
  // Predicated region
  $region70: #{gat_forward.1} parent=0 // pred_check
    _
  $region71: #{gat_forward.1} parent=0 // pred_check_branch
    %101 = sbr.rel (0) target = $region73
  $region72: #{gat_forward.1} parent=0 // pred_region
    _
  $region73: #{gat_forward.1} parent=0 // pred_fallthru
    _
  // Predicated region
  $region74: #{gat_forward.1} parent=0 // pred_check
    _
  $region75: #{gat_forward.1} parent=0 // pred_check_branch
    %103 = sbr.rel (0) target = $region77
  $region76: #{gat_forward.1} parent=0 // pred_region
    _
  $region77: #{gat_forward.1} parent=0 // pred_fallthru
    _
  // Predicated region
  $region78: #{gat_forward.1} parent=0 // pred_check
    _
  $region79: #{gat_forward.1} parent=0 // pred_check_branch
    %105 = sbr.rel (0) target = $region81
  $region80: #{gat_forward.1} parent=0 // pred_region
    _
  $region81: #{gat_forward.1} parent=0 // pred_fallthru
    _
  // Predicated region
  $region82: #{gat_forward.1} parent=0 // pred_check
    _
  $region83: #{gat_forward.1} parent=0 // pred_check_branch
    %107 = sbr.rel (0) target = $region85
  $region84: #{gat_forward.1} parent=0 // pred_region
    _
  $region85: #{gat_forward.1} parent=0 // pred_fallthru
    _
  // Predicated region
  $region86: #{gat_forward.1} parent=0 // pred_check
    _
  $region87: #{gat_forward.1} parent=0 // pred_check_branch
    %109 = sbr.rel (0) target = $region89
  $region88: #{gat_forward.1} parent=0 // pred_region
    _
  $region89: #{gat_forward.1} parent=0 // pred_fallthru
    _
  // Predicated region
  $region90: #{gat_forward.1} parent=0 // pred_check
    _
  $region91: #{gat_forward.1} parent=0 // pred_check_branch
    %111 = sbr.rel (0) target = $region93
  $region92: #{gat_forward.1} parent=0 // pred_region
    _
  $region93: #{gat_forward.1} parent=0 // pred_fallthru
    _
  // Predicated region
  $region94: #{gat_forward.1} parent=0 // pred_check
    _
  $region95: #{gat_forward.1} parent=0 // pred_check_branch
    %113 = sbr.rel (0) target = $region97
  $region96: #{gat_forward.1} parent=0 // pred_region
    _
  $region97: #{gat_forward.1} parent=0 // pred_fallthru
    _
  // Predicated region
  $region98: #{gat_forward.1} parent=0 // pred_check
    _
  $region99: #{gat_forward.1} parent=0 // pred_check_branch
    %115 = sbr.rel (0) target = $region101
  $region100: #{gat_forward.1} parent=0 // pred_region
    _
  $region101: #{gat_forward.1} parent=0 // pred_fallthru
    _
  // Predicated region
  $region102: #{gat_forward.1} parent=0 // pred_check
    _
  $region103: #{gat_forward.1} parent=0 // pred_check_branch
    %117 = sbr.rel (0) target = $region105
  $region104: #{gat_forward.1} parent=0 // pred_region
    _
  $region105: #{gat_forward.1} parent=0 // pred_fallthru
    _
  // Predicated region
  $region106: #{gat_forward.1} parent=0 // pred_check
    _
  $region107: #{gat_forward.1} parent=0 // pred_check_branch
    %119 = sbr.rel (0) target = $region109
  $region108: #{gat_forward.1} parent=0 // pred_region
    _
  $region109: #{gat_forward.1} parent=0 // pred_fallthru
    _
  // Predicated region
  $region110: #{gat_forward.1} parent=0 // pred_check
    _
  $region111: #{gat_forward.1} parent=0 // pred_check_branch
    %121 = sbr.rel (0) target = $region113
  $region112: #{gat_forward.1} parent=0 // pred_region
    _
  $region113: #{gat_forward.1} parent=0 // pred_fallthru
    _
  // Predicated region
  $region114: #{gat_forward.1} parent=0 // pred_check
    _
  $region115: #{gat_forward.1} parent=0 // pred_check_branch
    %123 = sbr.rel (0) target = $region117
  $region116: #{gat_forward.1} parent=0 // pred_region
    _
  $region117: #{gat_forward.1} parent=0 // pred_fallthru
    _
  // Predicated region
  $region118: #{gat_forward.1} parent=0 // pred_check
    _
  $region119: #{gat_forward.1} parent=0 // pred_check_branch
    %125 = sbr.rel (0) target = $region121
  $region120: #{gat_forward.1} parent=0 // pred_region
    _
  $region121: #{gat_forward.1} parent=0 // pred_fallthru
    _
  %v127 = vld [vmem:[%s3] sm:$0xff]
  %v128 = vld [vmem:[%s3 + $0x8] sm:$0xff]
  %v129 = vld [vmem:[%s3 + $0x10] sm:$0xff]
  %v130 = vld [vmem:[%s3 + $0x18] sm:$0xff]
  %v131 = vld [vmem:[%s1] sm:$0xff]
  %v132 = vld [vmem:[%s1 + $0x8] sm:$0xff]
  %v133 = vld [vmem:[%s1 + $0x10] sm:$0xff]
  %v134 = vld [vmem:[%s1 + $0x18] sm:$0xff]
  %v135 = vld [vmem:[%s5] sm:$0xf]
  %v136 = vld [vmem:[%s5 + $0x4] sm:$0xf]
  %v137 = vld [vmem:[%s7] sm:$0xff]
  %v138 = vld [vmem:[%s7 + $0x8] sm:$0xff]
  %v139 = vld [vmem:[%s7 + $0x10] sm:$0xff]
  %v140 = vld [vmem:[%s7 + $0x18] sm:$0xff]
  %v141 = vld [vmem:[%s9] sm:$0xff]
  %v142 = vld [vmem:[%s9 + $0x8] sm:$0xff]
  %v143 = vld [vmem:[%s9 + $0x10] sm:$0xff]
  %v144 = vld [vmem:[%s9 + $0x18] sm:$0xff]
  %v145 = vld [vmem:[%s11] sm:$0xf]
  %v146 = vld [vmem:[%s13] sm:$0xf]
  %v147 = vld [vmem:[%s15] sm:$0xff]
  %v148 = vld [vmem:[%s15 + $0x8] sm:$0xff]
  %v149 = vld [vmem:[%s15 + $0x10] sm:$0xff]
  %v150 = vld [vmem:[%s15 + $0x18] sm:$0xff]
  %v151 = vld [vmem:[%s17] sm:$0xf]
  %v152 = vld [vmem:[%s17 + $0x4] sm:$0xf]
  %v153 = vld [vmem:[%s17 + $0x8] sm:$0xf]
  %v154 = vld [vmem:[%s17 + $0xc] sm:$0xf]
  %v155 = vld [vmem:[%s17 + $0x10] sm:$0xf]
  %v156 = vld [vmem:[%s17 + $0x14] sm:$0xf]
  %v157 = vld [vmem:[%s17 + $0x18] sm:$0xf]
  %v158 = vld [vmem:[%s17 + $0x1c] sm:$0xf]
  %v159 = vld [vmem:[%s17 + $0x20] sm:$0xf]
  %v160 = vld [vmem:[%s17 + $0x24] sm:$0xf]
  %v161 = vld [vmem:[%s17 + $0x28] sm:$0xf]
  %v162 = vld [vmem:[%s17 + $0x2c] sm:$0xf]
  %v163 = vld [vmem:[%s17 + $0x30] sm:$0xf]
  %v164 = vld [vmem:[%s17 + $0x34] sm:$0xf]
  %v165 = vld [vmem:[%s17 + $0x38] sm:$0xf]
  %v166 = vld [vmem:[%s17 + $0x3c] sm:$0xf]
  %v167 = vld [vmem:[%s19] sm:$0xf]
  %v168 = vld [vmem:[%s19 + $0x4] sm:$0xf]
  %v169 = vld [vmem:[%s19 + $0x8] sm:$0xf]
  %v170 = vld [vmem:[%s19 + $0xc] sm:$0xf]
  %v171 = vld [vmem:[%s19 + $0x10] sm:$0xf]
  %v172 = vld [vmem:[%s19 + $0x14] sm:$0xf]
  %v173 = vld [vmem:[%s19 + $0x18] sm:$0xf]
  %v174 = vld [vmem:[%s19 + $0x1c] sm:$0xf]
  %v175 = vld [vmem:[%s19 + $0x20] sm:$0xf]
  %v176 = vld [vmem:[%s19 + $0x24] sm:$0xf]
  %v177 = vld [vmem:[%s19 + $0x28] sm:$0xf]
  %v178 = vld [vmem:[%s19 + $0x2c] sm:$0xf]
  %v179 = vld [vmem:[%s19 + $0x30] sm:$0xf]
  %v180 = vld [vmem:[%s19 + $0x34] sm:$0xf]
  %v181 = vld [vmem:[%s19 + $0x38] sm:$0xf]
  %v182 = vld [vmem:[%s19 + $0x3c] sm:$0xf]
  %v183 = vld [vmem:[%s21] sm:$0x1]
  %v184 = vpack.c.bf16 %v132, %v131
  %v185 = vpack.c.bf16 %v134, %v133
  %v188 = vunpack.c.l.b16 %v135
  %v189 = vunpack.c.l.b16 %v136
  %v190 = vpack.c.b16 %v189, %v188
  %vm192 = vcmask 130048
  %v194 = vsel %vm192, %v184, 0
  %v197 = vsel %vm192, %v185, 0
  %199 = vmatprep.subr.bf16.mxu0 0
  %200 = vmatpush1.bf16.msra.mxu0 0
  %201 = vmatprep.subr.bf16.mxu0 0
  %202 = vmatpush1.bf16.msra.mxu0 0
  %203 = vmatprep.subr.bf16.mxu0 0
  %204 = vmatpush1.bf16.msra.mxu0 0
  %205 = vmatprep.subr.bf16.mxu0 0
  %206 = vmatpush1.bf16.msra.mxu0 0
  %207 = vmatprep.subr.bf16.mxu0 0
  %208 = vmatpush1.bf16.msra.mxu0 0
  %209 = vmatprep.subr.bf16.mxu0 0
  %210 = vmatpush1.bf16.msra.mxu0 0
  %211 = vmatprep.subr.bf16.mxu0 0
  %212 = vmatpush1.bf16.msra.mxu0 0
  %213 = vmatprep.subr.bf16.mxu0 0
  %214 = vmatpush1.bf16.msra.mxu0 %v190
  %215 = vmatprep.subr.bf16.mxu0 0
  %216 = vmatpush2.bf16.msra.mxu0 0
  %217 = vmatprep.subr.bf16.mxu0 0
  %218 = vmatpush2.bf16.msra.mxu0 0
  %219 = vmatprep.subr.bf16.mxu0 0
  %220 = vmatpush2.bf16.msra.mxu0 0
  %221 = vmatprep.subr.bf16.mxu0 0
  %222 = vmatpush2.bf16.msra.mxu0 0
  %223 = vmatprep.subr.bf16.mxu0 0
  %224 = vmatpush2.bf16.msra.mxu0 0
  %225 = vmatprep.subr.bf16.mxu0 0
  %226 = vmatpush2.bf16.msra.mxu0 0
  %227 = vmatprep.subr.bf16.mxu0 0
  %228 = vmatpush2.bf16.msra.mxu0 0
  %229 = vmatprep.subr.bf16.mxu0 0
  %230 = vmatpush2.bf16.msra.mxu0 0
  %231 = vmatprep.mubr.bf16.mxu0 0
  %232 = vmatmul.mubr.bf16.gmra.mxu0 %v194
  %v233 = vpop.f32.mrf.mxu0
  %v234 = vadd.f32 0.0, %v233
  %v235 = vpop.f32.mrf.mxu0
  %v236 = vpop.f32.mrf.mxu0
  %v237 = vadd.f32 0.0, %v236
  %v238 = vpop.f32.mrf.mxu0
  %239 = vmatprep.mubr.bf16.mxu0 0
  %240 = vmatmul.mubr.bf16.gmra.mxu0 %v197
  %v241 = vpop.f32.mrf.mxu0
  %v242 = vadd.f32 0.0, %v241
  %v243 = vpop.f32.mrf.mxu0
  %v244 = vpop.f32.mrf.mxu0
  %v245 = vadd.f32 0.0, %v244
  %v246 = vpop.f32.mrf.mxu0
  %247 = vdwg.mxu0
  %vm248 = vcmask 261120
  %v250 = vsel %vm248, %v234, 0
  %v253 = vsel %vm248, %v237, 0
  %v256 = vsel %vm248, %v242, 0
  %v259 = vsel %vm248, %v245, 0
  %261 = vmatprep.subr.mxu0 0.0
  %262 = vmatpush1.msra.mxu0 0.0
  %263 = vmatprep.subr.mxu0 0.0
  %264 = vmatpush1.msra.mxu0 0.0
  %265 = vmatprep.subr.mxu0 0.0
  %266 = vmatpush1.msra.mxu0 0.0
  %267 = vmatprep.subr.mxu0 0.0
  %268 = vmatpush1.msra.mxu0 0.0
  %269 = vmatprep.subr.mxu0 0.0
  %270 = vmatpush1.msra.mxu0 0.0
  %271 = vmatprep.subr.mxu0 0.0
  %272 = vmatpush1.msra.mxu0 0.0
  %273 = vmatprep.subr.mxu0 0.0
  %274 = vmatpush1.msra.mxu0 0.0
  %275 = vmatprep.subr.mxu0 0.0
  %276 = vmatpush1.msra.mxu0 0.0
  %277 = vmatprep.subr.mxu0 0.0
  %278 = vmatpush1.msra.mxu0 0.0
  %279 = vmatprep.subr.mxu0 0.0
  %280 = vmatpush1.msra.mxu0 0.0
  %281 = vmatprep.subr.mxu0 0.0
  %282 = vmatpush1.msra.mxu0 0.0
  %283 = vmatprep.subr.mxu0 0.0
  %284 = vmatpush1.msra.mxu0 0.0
  %285 = vmatprep.subr.mxu0 0.0
  %286 = vmatpush1.msra.mxu0 %v140
  %287 = vmatprep.subr.mxu0 0.0
  %288 = vmatpush1.msra.mxu0 %v139
  %289 = vmatprep.subr.mxu0 0.0
  %290 = vmatpush1.msra.mxu0 %v138
  %291 = vmatprep.subr.mxu0 0.0
  %292 = vmatpush1.msra.mxu0 %v137
  %293 = vmatprep.subr.mxu0 0.0
  %294 = vmatpush2.msra.mxu0 0.0
  %295 = vmatprep.subr.mxu0 0.0
  %296 = vmatpush2.msra.mxu0 0.0
  %297 = vmatprep.subr.mxu0 0.0
  %298 = vmatpush2.msra.mxu0 0.0
  %299 = vmatprep.subr.mxu0 0.0
  %300 = vmatpush2.msra.mxu0 0.0
  %301 = vmatprep.subr.mxu0 0.0
  %302 = vmatpush2.msra.mxu0 0.0
  %303 = vmatprep.subr.mxu0 0.0
  %304 = vmatpush2.msra.mxu0 0.0
  %305 = vmatprep.subr.mxu0 0.0
  %306 = vmatpush2.msra.mxu0 0.0
  %307 = vmatprep.subr.mxu0 0.0
  %308 = vmatpush2.msra.mxu0 0.0
  %309 = vmatprep.subr.mxu0 0.0
  %310 = vmatpush2.msra.mxu0 0.0
  %311 = vmatprep.subr.mxu0 0.0
  %312 = vmatpush2.msra.mxu0 0.0
  %313 = vmatprep.subr.mxu0 0.0
  %314 = vmatpush2.msra.mxu0 0.0
  %315 = vmatprep.subr.mxu0 0.0
  %316 = vmatpush2.msra.mxu0 0.0
  %317 = vmatprep.subr.mxu0 0.0
  %318 = vmatpush2.msra.mxu0 0.0
  %319 = vmatprep.subr.mxu0 0.0
  %320 = vmatpush2.msra.mxu0 0.0
  %321 = vmatprep.subr.mxu0 0.0
  %322 = vmatpush2.msra.mxu0 0.0
  %323 = vmatprep.subr.mxu0 0.0
  %324 = vmatpush2.msra.mxu0 0.0
  %325 = vmatprep.mubr.f32.mxu0 0.0
  %326 = vmatmul.mubr.f32.gmra.mxu0 %v250
  %v327 = vpop.f32.mrf.mxu0
  %v328 = vadd.f32 0.0, %v327
  %v329 = vpop.f32.mrf.mxu0
  %330 = vmatprep.mubr.f32.mxu0 0.0
  %331 = vmatmul.mubr.f32.gmra.mxu0 %v253
  %v332 = vpop.f32.mrf.mxu0
  %v333 = vadd.f32 0.0, %v332
  %v334 = vpop.f32.mrf.mxu0
  %335 = vmatprep.mubr.f32.mxu0 0.0
  %336 = vmatmul.mubr.f32.gmra.mxu0 %v256
  %v337 = vpop.f32.mrf.mxu0
  %v338 = vadd.f32 0.0, %v337
  %v339 = vpop.f32.mrf.mxu0
  %340 = vmatprep.mubr.f32.mxu0 0.0
  %341 = vmatmul.mubr.f32.gmra.mxu0 %v259
  %v342 = vpop.f32.mrf.mxu0
  %v343 = vadd.f32 0.0, %v342
  %v344 = vpop.f32.mrf.mxu0
  %345 = vdwg.mxu0
  %346 = vmatprep.subr.mxu0 0.0
  %347 = vmatpush1.msra.mxu0 0.0
  %348 = vmatprep.subr.mxu0 0.0
  %349 = vmatpush1.msra.mxu0 0.0
  %350 = vmatprep.subr.mxu0 0.0
  %351 = vmatpush1.msra.mxu0 0.0
  %352 = vmatprep.subr.mxu0 0.0
  %353 = vmatpush1.msra.mxu0 0.0
  %354 = vmatprep.subr.mxu0 0.0
  %355 = vmatpush1.msra.mxu0 0.0
  %356 = vmatprep.subr.mxu0 0.0
  %357 = vmatpush1.msra.mxu0 0.0
  %358 = vmatprep.subr.mxu0 0.0
  %359 = vmatpush1.msra.mxu0 0.0
  %360 = vmatprep.subr.mxu0 0.0
  %361 = vmatpush1.msra.mxu0 0.0
  %362 = vmatprep.subr.mxu0 0.0
  %363 = vmatpush1.msra.mxu0 0.0
  %364 = vmatprep.subr.mxu0 0.0
  %365 = vmatpush1.msra.mxu0 0.0
  %366 = vmatprep.subr.mxu0 0.0
  %367 = vmatpush1.msra.mxu0 0.0
  %368 = vmatprep.subr.mxu0 0.0
  %369 = vmatpush1.msra.mxu0 0.0
  %370 = vmatprep.subr.mxu0 0.0
  %371 = vmatpush1.msra.mxu0 %v144
  %372 = vmatprep.subr.mxu0 0.0
  %373 = vmatpush1.msra.mxu0 %v143
  %374 = vmatprep.subr.mxu0 0.0
  %375 = vmatpush1.msra.mxu0 %v142
  %376 = vmatprep.subr.mxu0 0.0
  %377 = vmatpush1.msra.mxu0 %v141
  %378 = vmatprep.subr.mxu0 0.0
  %379 = vmatpush2.msra.mxu0 0.0
  %380 = vmatprep.subr.mxu0 0.0
  %381 = vmatpush2.msra.mxu0 0.0
  %382 = vmatprep.subr.mxu0 0.0
  %383 = vmatpush2.msra.mxu0 0.0
  %384 = vmatprep.subr.mxu0 0.0
  %385 = vmatpush2.msra.mxu0 0.0
  %386 = vmatprep.subr.mxu0 0.0
  %387 = vmatpush2.msra.mxu0 0.0
  %388 = vmatprep.subr.mxu0 0.0
  %389 = vmatpush2.msra.mxu0 0.0
  %390 = vmatprep.subr.mxu0 0.0
  %391 = vmatpush2.msra.mxu0 0.0
  %392 = vmatprep.subr.mxu0 0.0
  %393 = vmatpush2.msra.mxu0 0.0
  %394 = vmatprep.subr.mxu0 0.0
  %395 = vmatpush2.msra.mxu0 0.0
  %396 = vmatprep.subr.mxu0 0.0
  %397 = vmatpush2.msra.mxu0 0.0
  %398 = vmatprep.subr.mxu0 0.0
  %399 = vmatpush2.msra.mxu0 0.0
  %400 = vmatprep.subr.mxu0 0.0
  %401 = vmatpush2.msra.mxu0 0.0
  %402 = vmatprep.subr.mxu0 0.0
  %403 = vmatpush2.msra.mxu0 0.0
  %404 = vmatprep.subr.mxu0 0.0
  %405 = vmatpush2.msra.mxu0 0.0
  %406 = vmatprep.subr.mxu0 0.0
  %407 = vmatpush2.msra.mxu0 0.0
  %408 = vmatprep.subr.mxu0 0.0
  %409 = vmatpush2.msra.mxu0 0.0
  %410 = vmatprep.mubr.f32.mxu0 0.0
  %411 = vmatmul.mubr.f32.gmra.mxu0 %v250
  %v412 = vpop.f32.mrf.mxu0
  %v413 = vadd.f32 0.0, %v412
  %v414 = vpop.f32.mrf.mxu0
  %415 = vmatprep.mubr.f32.mxu0 0.0
  %416 = vmatmul.mubr.f32.gmra.mxu0 %v253
  %v417 = vpop.f32.mrf.mxu0
  %v418 = vadd.f32 0.0, %v417
  %v419 = vpop.f32.mrf.mxu0
  %420 = vmatprep.mubr.f32.mxu0 0.0
  %421 = vmatmul.mubr.f32.gmra.mxu0 %v256
  %v422 = vpop.f32.mrf.mxu0
  %v423 = vadd.f32 0.0, %v422
  %v424 = vpop.f32.mrf.mxu0
  %425 = vmatprep.mubr.f32.mxu0 0.0
  %426 = vmatmul.mubr.f32.gmra.mxu0 %v259
  %v427 = vpop.f32.mrf.mxu0
  %v428 = vadd.f32 0.0, %v427
  %v429 = vpop.f32.mrf.mxu0
  %430 = vdwg.mxu0
  %vm431 = vcmask 31744
  %v433 = vsel %vm431, %v413, 0
  %v436 = vsel %vm431, %v418, 0
  %v439 = vsel %vm431, %v423, 0
  %v442 = vsel %vm431, %v428, 0
  %vm444 = vcmask 1043456
  %v446 = vsel %vm444, %v145, 0
  %448 = vmatprep.subr.mxu0 0.0
  %449 = vmatpush1.msra.mxu0 0.0
  %450 = vmatprep.subr.mxu0 0.0
  %451 = vmatpush1.msra.mxu0 0.0
  %452 = vmatprep.subr.mxu0 0.0
  %453 = vmatpush1.msra.mxu0 0.0
  %454 = vmatprep.subr.mxu0 0.0
  %455 = vmatpush1.msra.mxu0 0.0
  %456 = vmatprep.subr.mxu0 0.0
  %457 = vmatpush1.msra.mxu0 0.0
  %458 = vmatprep.subr.mxu0 0.0
  %459 = vmatpush1.msra.mxu0 0.0
  %460 = vmatprep.subr.mxu0 0.0
  %461 = vmatpush1.msra.mxu0 0.0
  %462 = vmatprep.subr.mxu0 0.0
  %463 = vmatpush1.msra.mxu0 0.0
  %464 = vmatprep.subr.mxu0 0.0
  %465 = vmatpush1.msra.mxu0 0.0
  %466 = vmatprep.subr.mxu0 0.0
  %467 = vmatpush1.msra.mxu0 0.0
  %468 = vmatprep.subr.mxu0 0.0
  %469 = vmatpush1.msra.mxu0 0.0
  %470 = vmatprep.subr.mxu0 0.0
  %471 = vmatpush1.msra.mxu0 0.0
  %472 = vmatprep.subr.mxu0 0.0
  %473 = vmatpush1.msra.mxu0 0.0
  %474 = vmatprep.subr.mxu0 0.0
  %475 = vmatpush1.msra.mxu0 0.0
  %476 = vmatprep.subr.mxu0 0.0
  %477 = vmatpush1.msra.mxu0 0.0
  %478 = vmatprep.subr.mxu0 0.0
  %479 = vmatpush1.msra.mxu0 %v446
  %480 = vmatprep.subr.mxu0 0.0
  %481 = vmatpush2.msra.mxu0 0.0
  %482 = vmatprep.subr.mxu0 0.0
  %483 = vmatpush2.msra.mxu0 0.0
  %484 = vmatprep.subr.mxu0 0.0
  %485 = vmatpush2.msra.mxu0 0.0
  %486 = vmatprep.subr.mxu0 0.0
  %487 = vmatpush2.msra.mxu0 0.0
  %488 = vmatprep.subr.mxu0 0.0
  %489 = vmatpush2.msra.mxu0 0.0
  %490 = vmatprep.subr.mxu0 0.0
  %491 = vmatpush2.msra.mxu0 0.0
  %492 = vmatprep.subr.mxu0 0.0
  %493 = vmatpush2.msra.mxu0 0.0
  %494 = vmatprep.subr.mxu0 0.0
  %495 = vmatpush2.msra.mxu0 0.0
  %496 = vmatprep.subr.mxu0 0.0
  %497 = vmatpush2.msra.mxu0 0.0
  %498 = vmatprep.subr.mxu0 0.0
  %499 = vmatpush2.msra.mxu0 0.0
  %500 = vmatprep.subr.mxu0 0.0
  %501 = vmatpush2.msra.mxu0 0.0
  %502 = vmatprep.subr.mxu0 0.0
  %503 = vmatpush2.msra.mxu0 0.0
  %504 = vmatprep.subr.mxu0 0.0
  %505 = vmatpush2.msra.mxu0 0.0
  %506 = vmatprep.subr.mxu0 0.0
  %507 = vmatpush2.msra.mxu0 0.0
  %508 = vmatprep.subr.mxu0 0.0
  %509 = vmatpush2.msra.mxu0 0.0
  %510 = vmatprep.subr.mxu0 0.0
  %511 = vmatpush2.msra.mxu0 0.0
  %512 = vmatprep.mubr.f32.mxu0 0.0
  %513 = vmatmul.mubr.f32.gmra.mxu0 %v433
  %v514 = vpop.f32.mrf.mxu0
  %v515 = vadd.f32 0.0, %v514
  %v516 = vpop.f32.mrf.mxu0
  %517 = vmatprep.mubr.f32.mxu0 0.0
  %518 = vmatmul.mubr.f32.gmra.mxu0 %v436
  %v519 = vpop.f32.mrf.mxu0
  %v520 = vadd.f32 0.0, %v519
  %v521 = vpop.f32.mrf.mxu0
  %522 = vmatprep.mubr.f32.mxu0 0.0
  %523 = vmatmul.mubr.f32.gmra.mxu0 %v439
  %v524 = vpop.f32.mrf.mxu0
  %v525 = vadd.f32 0.0, %v524
  %v526 = vpop.f32.mrf.mxu0
  %527 = vmatprep.mubr.f32.mxu0 0.0
  %528 = vmatmul.mubr.f32.gmra.mxu0 %v442
  %v529 = vpop.f32.mrf.mxu0
  %v530 = vadd.f32 0.0, %v529
  %v531 = vpop.f32.mrf.mxu0
  %532 = vdwg.mxu0
  %v533 = vmul.f32 %v515, %v147
  %v534 = vmul.f32 %v520, %v148
  %v535 = vmul.f32 %v525, %v149
  %v536 = vmul.f32 %v530, %v150
  %v537 = vadd.f32 %v533, %v534
  %v538 = vadd.f32 %v537, %v535
  %v539 = vadd.f32 %v538, %v536
  %v540 = vrot.slane %v539, 4
  %v541 = vadd.f32 %v539, %v540
  %v542 = vrot.slane %v541, 2
  %v543 = vadd.f32 %v541, %v542
  %v544 = vrot.slane %v543, 1
  %v545 = vadd.f32 %v543, %v544
  %v547 = vsel %vm431, %v328, 0
  %v550 = vsel %vm431, %v333, 0
  %v553 = vsel %vm431, %v338, 0
  %v556 = vsel %vm431, %v343, 0
  %558 = vmatprep.subr.mxu0 0.0
  %559 = vmatpush1.msra.mxu0 0.0
  %560 = vmatprep.subr.mxu0 0.0
  %561 = vmatpush1.msra.mxu0 0.0
  %562 = vmatprep.subr.mxu0 0.0
  %563 = vmatpush1.msra.mxu0 0.0
  %564 = vmatprep.subr.mxu0 0.0
  %565 = vmatpush1.msra.mxu0 0.0
  %566 = vmatprep.subr.mxu0 0.0
  %567 = vmatpush1.msra.mxu0 0.0
  %568 = vmatprep.subr.mxu0 0.0
  %569 = vmatpush1.msra.mxu0 0.0
  %570 = vmatprep.subr.mxu0 0.0
  %571 = vmatpush1.msra.mxu0 0.0
  %572 = vmatprep.subr.mxu0 0.0
  %573 = vmatpush1.msra.mxu0 0.0
  %574 = vmatprep.subr.mxu0 0.0
  %575 = vmatpush1.msra.mxu0 0.0
  %576 = vmatprep.subr.mxu0 0.0
  %577 = vmatpush1.msra.mxu0 0.0
  %578 = vmatprep.subr.mxu0 0.0
  %579 = vmatpush1.msra.mxu0 0.0
  %580 = vmatprep.subr.mxu0 0.0
  %581 = vmatpush1.msra.mxu0 0.0
  %582 = vmatprep.subr.mxu0 0.0
  %583 = vmatpush1.msra.mxu0 0.0
  %584 = vmatprep.subr.mxu0 0.0
  %585 = vmatpush1.msra.mxu0 0.0
  %586 = vmatprep.subr.mxu0 0.0
  %587 = vmatpush1.msra.mxu0 0.0
  %588 = vmatprep.subr.mxu0 0.0
  %589 = vmatpush1.msra.mxu0 %v446
  %590 = vmatprep.subr.mxu0 0.0
  %591 = vmatpush2.msra.mxu0 0.0
  %592 = vmatprep.subr.mxu0 0.0
  %593 = vmatpush2.msra.mxu0 0.0
  %594 = vmatprep.subr.mxu0 0.0
  %595 = vmatpush2.msra.mxu0 0.0
  %596 = vmatprep.subr.mxu0 0.0
  %597 = vmatpush2.msra.mxu0 0.0
  %598 = vmatprep.subr.mxu0 0.0
  %599 = vmatpush2.msra.mxu0 0.0
  %600 = vmatprep.subr.mxu0 0.0
  %601 = vmatpush2.msra.mxu0 0.0
  %602 = vmatprep.subr.mxu0 0.0
  %603 = vmatpush2.msra.mxu0 0.0
  %604 = vmatprep.subr.mxu0 0.0
  %605 = vmatpush2.msra.mxu0 0.0
  %606 = vmatprep.subr.mxu0 0.0
  %607 = vmatpush2.msra.mxu0 0.0
  %608 = vmatprep.subr.mxu0 0.0
  %609 = vmatpush2.msra.mxu0 0.0
  %610 = vmatprep.subr.mxu0 0.0
  %611 = vmatpush2.msra.mxu0 0.0
  %612 = vmatprep.subr.mxu0 0.0
  %613 = vmatpush2.msra.mxu0 0.0
  %614 = vmatprep.subr.mxu0 0.0
  %615 = vmatpush2.msra.mxu0 0.0
  %616 = vmatprep.subr.mxu0 0.0
  %617 = vmatpush2.msra.mxu0 0.0
  %618 = vmatprep.subr.mxu0 0.0
  %619 = vmatpush2.msra.mxu0 0.0
  %620 = vmatprep.subr.mxu0 0.0
  %621 = vmatpush2.msra.mxu0 0.0
  %622 = vmatprep.mubr.f32.mxu0 0.0
  %623 = vmatmul.mubr.f32.gmra.mxu0 %v547
  %v624 = vpop.f32.mrf.mxu0
  %v625 = vadd.f32 %v545, %v624
  %v626 = vpop.f32.mrf.mxu0
  %627 = vmatprep.mubr.f32.mxu0 0.0
  %628 = vmatmul.mubr.f32.gmra.mxu0 %v550
  %v629 = vpop.f32.mrf.mxu0
  %v630 = vadd.f32 %v545, %v629
  %v631 = vpop.f32.mrf.mxu0
  %632 = vmatprep.mubr.f32.mxu0 0.0
  %633 = vmatmul.mubr.f32.gmra.mxu0 %v553
  %v634 = vpop.f32.mrf.mxu0
  %v635 = vadd.f32 %v545, %v634
  %v636 = vpop.f32.mrf.mxu0
  %637 = vmatprep.mubr.f32.mxu0 0.0
  %638 = vmatmul.mubr.f32.gmra.mxu0 %v556
  %v639 = vpop.f32.mrf.mxu0
  %v640 = vadd.f32 %v545, %v639
  %v641 = vpop.f32.mrf.mxu0
  %642 = vdwg.mxu0
  %v643 = vmul.f32 %v625, 0.2
  %v644 = vmul.f32 %v630, 0.2
  %v645 = vmul.f32 %v635, 0.2
  %v646 = vmul.f32 %v640, 0.2
  %v647 = vmax.f32 %v625, %v643
  %v648 = vmax.f32 %v630, %v644
  %v649 = vmax.f32 %v635, %v645
  %v650 = vmax.f32 %v640, %v646
  %v651 = vadd.f32 %v647, %v127
  %v652 = vadd.f32 %v648, %v128
  %v653 = vadd.f32 %v649, %v129
  %v654 = vadd.f32 %v650, %v130
  %655 = vmax.xlane.f32.xlu0 %v651
  %v656 = vpop.xlane.xlu0 %655
  %657 = vmax.xlane.f32.xlu0 %v652
  %v658 = vpop.xlane.xlu0 %657
  %659 = vmax.xlane.f32.xlu0 %v653
  %v660 = vpop.xlane.xlu0 %659
  %661 = vmax.xlane.f32.xlu0 %v654
  %v662 = vpop.xlane.xlu0 %661
  %v663 = vsub.f32 %v651, %v656
  %v664 = vsub.f32 %v652, %v658
  %v665 = vsub.f32 %v653, %v660
  %v666 = vsub.f32 %v654, %v662
  %v667 = vmul.f32 %v663, 1.442695
  %v668 = vpow.pop %v667
  %v669 = vmul.f32 %v664, 1.442695
  %v670 = vpow.pop %v669
  %v671 = vmul.f32 %v665, 1.442695
  %v672 = vpow.pop %v671
  %v673 = vmul.f32 %v666, 1.442695
  %v674 = vpow.pop %v673
  %v675 = vpack.c.bf16 %v670, %v668
  %v676 = vpack.c.bf16 %v674, %v672
  %v677 = vpack.c.bf16 %v237, %v234
  %v678 = vpack.c.bf16 %v245, %v242
  %v695 = vunpack.c.l.b16 %v167
  %v696 = vunpack.c.l.b16 %v168
  %v697 = vunpack.c.l.b16 %v169
  %v698 = vunpack.c.l.b16 %v170
  %v699 = vunpack.c.l.b16 %v171
  %v700 = vunpack.c.l.b16 %v172
  %v701 = vunpack.c.l.b16 %v173
  %v702 = vunpack.c.l.b16 %v174
  %v703 = vunpack.c.l.b16 %v175
  %v704 = vunpack.c.l.b16 %v176
  %v705 = vunpack.c.l.b16 %v177
  %v706 = vunpack.c.l.b16 %v178
  %v707 = vunpack.c.l.b16 %v179
  %v708 = vunpack.c.l.b16 %v180
  %v709 = vunpack.c.l.b16 %v181
  %v710 = vunpack.c.l.b16 %v182
  %v711 = vpack.c.b16 %v696, %v695
  %v712 = vpack.c.b16 %v698, %v697
  %v713 = vpack.c.b16 %v700, %v699
  %v714 = vpack.c.b16 %v702, %v701
  %v715 = vpack.c.b16 %v704, %v703
  %v716 = vpack.c.b16 %v706, %v705
  %v717 = vpack.c.b16 %v708, %v707
  %v718 = vpack.c.b16 %v710, %v709
  %v727 = vmul.bf16 %v677, %v711
  %v728 = vmul.bf16 %v678, %v712
  %v729 = vmul.bf16 %v677, %v713
  %v730 = vmul.bf16 %v678, %v714
  %v731 = vmul.bf16 %v677, %v715
  %v732 = vmul.bf16 %v678, %v716
  %v733 = vmul.bf16 %v677, %v717
  %v734 = vmul.bf16 %v678, %v718
  %735 = vmatprep.subr.bf16.mxu0 0
  %736 = vmatpush1.bf16.msra.mxu0 %v734
  %737 = vmatprep.subr.bf16.mxu0 0
  %738 = vmatpush1.bf16.msra.mxu0 %v733
  %739 = vmatprep.subr.bf16.mxu0 0
  %740 = vmatpush1.bf16.msra.mxu0 %v732
  %741 = vmatprep.subr.bf16.mxu0 0
  %742 = vmatpush1.bf16.msra.mxu0 %v731
  %743 = vmatprep.subr.bf16.mxu0 0
  %744 = vmatpush1.bf16.msra.mxu0 %v730
  %745 = vmatprep.subr.bf16.mxu0 0
  %746 = vmatpush1.bf16.msra.mxu0 %v729
  %747 = vmatprep.subr.bf16.mxu0 0
  %748 = vmatpush1.bf16.msra.mxu0 %v728
  %749 = vmatprep.subr.bf16.mxu0 0
  %750 = vmatpush1.bf16.msra.mxu0 %v727
  %751 = vmatprep.subr.bf16.mxu0 0
  %752 = vmatpush2.bf16.msra.mxu0 0
  %753 = vmatprep.subr.bf16.mxu0 0
  %754 = vmatpush2.bf16.msra.mxu0 0
  %755 = vmatprep.subr.bf16.mxu0 0
  %756 = vmatpush2.bf16.msra.mxu0 0
  %757 = vmatprep.subr.bf16.mxu0 0
  %758 = vmatpush2.bf16.msra.mxu0 0
  %759 = vmatprep.subr.bf16.mxu0 0
  %760 = vmatpush2.bf16.msra.mxu0 0
  %761 = vmatprep.subr.bf16.mxu0 0
  %762 = vmatpush2.bf16.msra.mxu0 0
  %763 = vmatprep.subr.bf16.mxu0 0
  %764 = vmatpush2.bf16.msra.mxu0 0
  %765 = vmatprep.subr.bf16.mxu0 0
  %766 = vmatpush2.bf16.msra.mxu0 0
  %767 = vmatprep.mubr.bf16.mxu0 0
  %768 = vmatmul.mubr.bf16.gmra.mxu0 %v675
  %v769 = vpop.f32.mrf.mxu0
  %v770 = vadd.f32 0.0, %v769
  %v771 = vpop.f32.mrf.mxu0
  %v772 = vpop.f32.mrf.mxu0
  %v773 = vadd.f32 0.0, %v772
  %v774 = vpop.f32.mrf.mxu0
  %775 = vmatprep.mubr.bf16.mxu0 0
  %776 = vmatmul.mubr.bf16.gmra.mxu0 %v676
  %v777 = vpop.f32.mrf.mxu0
  %v778 = vadd.f32 0.0, %v777
  %v779 = vpop.f32.mrf.mxu0
  %v780 = vpop.f32.mrf.mxu0
  %v781 = vadd.f32 0.0, %v780
  %v782 = vpop.f32.mrf.mxu0
  %783 = vdwg.mxu0
  %v800 = vunpack.c.l.b16 %v151
  %v801 = vunpack.c.l.b16 %v152
  %v802 = vunpack.c.l.b16 %v153
  %v803 = vunpack.c.l.b16 %v154
  %v804 = vunpack.c.l.b16 %v155
  %v805 = vunpack.c.l.b16 %v156
  %v806 = vunpack.c.l.b16 %v157
  %v807 = vunpack.c.l.b16 %v158
  %v808 = vunpack.c.l.b16 %v159
  %v809 = vunpack.c.l.b16 %v160
  %v810 = vunpack.c.l.b16 %v161
  %v811 = vunpack.c.l.b16 %v162
  %v812 = vunpack.c.l.b16 %v163
  %v813 = vunpack.c.l.b16 %v164
  %v814 = vunpack.c.l.b16 %v165
  %v815 = vunpack.c.l.b16 %v166
  %v816 = vpack.c.b16 %v801, %v800
  %v817 = vpack.c.b16 %v803, %v802
  %v818 = vpack.c.b16 %v805, %v804
  %v819 = vpack.c.b16 %v807, %v806
  %v820 = vpack.c.b16 %v809, %v808
  %v821 = vpack.c.b16 %v811, %v810
  %v822 = vpack.c.b16 %v813, %v812
  %v823 = vpack.c.b16 %v815, %v814
  %832 = vmatprep.subr.bf16.mxu0 0
  %833 = vmatpush1.bf16.msra.mxu0 %v823
  %834 = vmatprep.subr.bf16.mxu0 0
  %835 = vmatpush1.bf16.msra.mxu0 %v822
  %836 = vmatprep.subr.bf16.mxu0 0
  %837 = vmatpush1.bf16.msra.mxu0 %v821
  %838 = vmatprep.subr.bf16.mxu0 0
  %839 = vmatpush1.bf16.msra.mxu0 %v820
  %840 = vmatprep.subr.bf16.mxu0 0
  %841 = vmatpush1.bf16.msra.mxu0 %v819
  %842 = vmatprep.subr.bf16.mxu0 0
  %843 = vmatpush1.bf16.msra.mxu0 %v818
  %844 = vmatprep.subr.bf16.mxu0 0
  %845 = vmatpush1.bf16.msra.mxu0 %v817
  %846 = vmatprep.subr.bf16.mxu0 0
  %847 = vmatpush1.bf16.msra.mxu0 %v816
  %848 = vmatprep.subr.bf16.mxu0 0
  %849 = vmatpush2.bf16.msra.mxu0 0
  %850 = vmatprep.subr.bf16.mxu0 0
  %851 = vmatpush2.bf16.msra.mxu0 0
  %852 = vmatprep.subr.bf16.mxu0 0
  %853 = vmatpush2.bf16.msra.mxu0 0
  %854 = vmatprep.subr.bf16.mxu0 0
  %855 = vmatpush2.bf16.msra.mxu0 0
  %856 = vmatprep.subr.bf16.mxu0 0
  %857 = vmatpush2.bf16.msra.mxu0 0
  %858 = vmatprep.subr.bf16.mxu0 0
  %859 = vmatpush2.bf16.msra.mxu0 0
  %860 = vmatprep.subr.bf16.mxu0 0
  %861 = vmatpush2.bf16.msra.mxu0 0
  %862 = vmatprep.subr.bf16.mxu0 0
  %863 = vmatpush2.bf16.msra.mxu0 0
  %864 = vmatprep.mubr.bf16.mxu0 0
  %865 = vmatmul.mubr.bf16.gmra.mxu0 %v675
  %v866 = vpop.f32.mrf.mxu0
  %v867 = vadd.f32 0.0, %v866
  %v868 = vpop.f32.mrf.mxu0
  %v869 = vpop.f32.mrf.mxu0
  %v870 = vadd.f32 0.0, %v869
  %v871 = vpop.f32.mrf.mxu0
  %872 = vmatprep.mubr.bf16.mxu0 0
  %873 = vmatmul.mubr.bf16.gmra.mxu0 %v676
  %v874 = vpop.f32.mrf.mxu0
  %v875 = vadd.f32 0.0, %v874
  %v876 = vpop.f32.mrf.mxu0
  %v877 = vpop.f32.mrf.mxu0
  %v878 = vadd.f32 0.0, %v877
  %v879 = vpop.f32.mrf.mxu0
  %880 = vdwg.mxu0
  %v881 = vrcp.pop %v867
  %v882 = vrcp.pop %v870
  %v883 = vrcp.pop %v875
  %v884 = vrcp.pop %v878
  %v886 = vsel %vm431, %v881, 0
  %v889 = vsel %vm431, %v882, 0
  %v892 = vsel %vm431, %v883, 0
  %v895 = vsel %vm431, %v884, 0
  %v898 = vsel %vm444, %v146, 0
  %900 = vmatprep.subr.mxu0 0.0
  %901 = vmatpush1.msra.mxu0 0.0
  %902 = vmatprep.subr.mxu0 0.0
  %903 = vmatpush1.msra.mxu0 0.0
  %904 = vmatprep.subr.mxu0 0.0
  %905 = vmatpush1.msra.mxu0 0.0
  %906 = vmatprep.subr.mxu0 0.0
  %907 = vmatpush1.msra.mxu0 0.0
  %908 = vmatprep.subr.mxu0 0.0
  %909 = vmatpush1.msra.mxu0 0.0
  %910 = vmatprep.subr.mxu0 0.0
  %911 = vmatpush1.msra.mxu0 0.0
  %912 = vmatprep.subr.mxu0 0.0
  %913 = vmatpush1.msra.mxu0 0.0
  %914 = vmatprep.subr.mxu0 0.0
  %915 = vmatpush1.msra.mxu0 0.0
  %916 = vmatprep.subr.mxu0 0.0
  %917 = vmatpush1.msra.mxu0 0.0
  %918 = vmatprep.subr.mxu0 0.0
  %919 = vmatpush1.msra.mxu0 0.0
  %920 = vmatprep.subr.mxu0 0.0
  %921 = vmatpush1.msra.mxu0 0.0
  %922 = vmatprep.subr.mxu0 0.0
  %923 = vmatpush1.msra.mxu0 0.0
  %924 = vmatprep.subr.mxu0 0.0
  %925 = vmatpush1.msra.mxu0 0.0
  %926 = vmatprep.subr.mxu0 0.0
  %927 = vmatpush1.msra.mxu0 0.0
  %928 = vmatprep.subr.mxu0 0.0
  %929 = vmatpush1.msra.mxu0 0.0
  %930 = vmatprep.subr.mxu0 0.0
  %931 = vmatpush1.msra.mxu0 %v898
  %932 = vmatprep.subr.mxu0 0.0
  %933 = vmatpush2.msra.mxu0 0.0
  %934 = vmatprep.subr.mxu0 0.0
  %935 = vmatpush2.msra.mxu0 0.0
  %936 = vmatprep.subr.mxu0 0.0
  %937 = vmatpush2.msra.mxu0 0.0
  %938 = vmatprep.subr.mxu0 0.0
  %939 = vmatpush2.msra.mxu0 0.0
  %940 = vmatprep.subr.mxu0 0.0
  %941 = vmatpush2.msra.mxu0 0.0
  %942 = vmatprep.subr.mxu0 0.0
  %943 = vmatpush2.msra.mxu0 0.0
  %944 = vmatprep.subr.mxu0 0.0
  %945 = vmatpush2.msra.mxu0 0.0
  %946 = vmatprep.subr.mxu0 0.0
  %947 = vmatpush2.msra.mxu0 0.0
  %948 = vmatprep.subr.mxu0 0.0
  %949 = vmatpush2.msra.mxu0 0.0
  %950 = vmatprep.subr.mxu0 0.0
  %951 = vmatpush2.msra.mxu0 0.0
  %952 = vmatprep.subr.mxu0 0.0
  %953 = vmatpush2.msra.mxu0 0.0
  %954 = vmatprep.subr.mxu0 0.0
  %955 = vmatpush2.msra.mxu0 0.0
  %956 = vmatprep.subr.mxu0 0.0
  %957 = vmatpush2.msra.mxu0 0.0
  %958 = vmatprep.subr.mxu0 0.0
  %959 = vmatpush2.msra.mxu0 0.0
  %960 = vmatprep.subr.mxu0 0.0
  %961 = vmatpush2.msra.mxu0 0.0
  %962 = vmatprep.subr.mxu0 0.0
  %963 = vmatpush2.msra.mxu0 0.0
  %964 = vmatprep.mubr.f32.mxu0 0.0
  %965 = vmatmul.mubr.f32.gmra.mxu0 %v886
  %v966 = vpop.f32.mrf.mxu0
  %v967 = vadd.f32 0.0, %v966
  %v968 = vpop.f32.mrf.mxu0
  %969 = vmatprep.mubr.f32.mxu0 0.0
  %970 = vmatmul.mubr.f32.gmra.mxu0 %v889
  %v971 = vpop.f32.mrf.mxu0
  %v972 = vadd.f32 0.0, %v971
  %v973 = vpop.f32.mrf.mxu0
  %974 = vmatprep.mubr.f32.mxu0 0.0
  %975 = vmatmul.mubr.f32.gmra.mxu0 %v892
  %v976 = vpop.f32.mrf.mxu0
  %v977 = vadd.f32 0.0, %v976
  %v978 = vpop.f32.mrf.mxu0
  %979 = vmatprep.mubr.f32.mxu0 0.0
  %980 = vmatmul.mubr.f32.gmra.mxu0 %v895
  %v981 = vpop.f32.mrf.mxu0
  %v982 = vadd.f32 0.0, %v981
  %v983 = vpop.f32.mrf.mxu0
  %984 = vdwg.mxu0
  %v985 = vmul.f32 %v770, %v967
  %v986 = vmul.f32 %v773, %v972
  %v987 = vmul.f32 %v778, %v977
  %v988 = vmul.f32 %v781, %v982
  %v990 = vlaneseq
  %v991 = vshrl.u32 %v990, 7
  %v992 = vsub.s32 0, %v991
  %v993 = vrot.slane %v183, %v992
  %v995 = vadd.f32 %v985, %v993
  %v996 = vadd.f32 %v986, %v993
  %v997 = vadd.f32 %v987, %v993
  %v998 = vadd.f32 %v988, %v993
  %v999 = vmax.f32 %v995, 0.0
  %v1000 = vmax.f32 %v996, 0.0
  %v1001 = vmax.f32 %v997, 0.0
  %v1002 = vmax.f32 %v998, 0.0
  %v1003 = vld [vmem:[%s23] sm:$0xf]
  %v1004 = vld [vmem:[%s23 + $0x4] sm:$0xf]
  %v1005 = vld [vmem:[%s23 + $0x8] sm:$0xf]
  %v1006 = vld [vmem:[%s23 + $0xc] sm:$0xf]
  %v1007 = vld [vmem:[%s25] sm:$0xff]
  %v1008 = vld [vmem:[%s25 + $0x8] sm:$0xff]
  %v1009 = vld [vmem:[%s25 + $0x10] sm:$0xff]
  %v1010 = vld [vmem:[%s25 + $0x18] sm:$0xff]
  %v1011 = vld [vmem:[%s27] sm:$0xff]
  %v1012 = vld [vmem:[%s27 + $0x8] sm:$0xff]
  %v1013 = vld [vmem:[%s27 + $0x10] sm:$0xff]
  %v1014 = vld [vmem:[%s27 + $0x18] sm:$0xff]
  %v1015 = vld [vmem:[%s29] sm:$0xf]
  %v1016 = vld [vmem:[%s31] sm:$0xf]
  %v1017 = vld [vmem:[%s33] sm:$0xff]
  %v1018 = vld [vmem:[%s33 + $0x8] sm:$0xff]
  %v1019 = vld [vmem:[%s33 + $0x10] sm:$0xff]
  %v1020 = vld [vmem:[%s33 + $0x18] sm:$0xff]
  %v1021 = vld [vmem:[%s35] sm:$0xf]
  %v1022 = vld [vmem:[%s35 + $0x4] sm:$0xf]
  %v1023 = vld [vmem:[%s35 + $0x8] sm:$0xf]
  %v1024 = vld [vmem:[%s35 + $0xc] sm:$0xf]
  %v1025 = vld [vmem:[%s35 + $0x10] sm:$0xf]
  %v1026 = vld [vmem:[%s35 + $0x14] sm:$0xf]
  %v1027 = vld [vmem:[%s35 + $0x18] sm:$0xf]
  %v1028 = vld [vmem:[%s35 + $0x1c] sm:$0xf]
  %v1029 = vld [vmem:[%s35 + $0x20] sm:$0xf]
  %v1030 = vld [vmem:[%s35 + $0x24] sm:$0xf]
  %v1031 = vld [vmem:[%s35 + $0x28] sm:$0xf]
  %v1032 = vld [vmem:[%s35 + $0x2c] sm:$0xf]
  %v1033 = vld [vmem:[%s35 + $0x30] sm:$0xf]
  %v1034 = vld [vmem:[%s35 + $0x34] sm:$0xf]
  %v1035 = vld [vmem:[%s35 + $0x38] sm:$0xf]
  %v1036 = vld [vmem:[%s35 + $0x3c] sm:$0xf]
  %v1037 = vld [vmem:[%s37] sm:$0xf]
  %v1038 = vld [vmem:[%s37 + $0x4] sm:$0xf]
  %v1039 = vld [vmem:[%s37 + $0x8] sm:$0xf]
  %v1040 = vld [vmem:[%s37 + $0xc] sm:$0xf]
  %v1041 = vld [vmem:[%s37 + $0x10] sm:$0xf]
  %v1042 = vld [vmem:[%s37 + $0x14] sm:$0xf]
  %v1043 = vld [vmem:[%s37 + $0x18] sm:$0xf]
  %v1044 = vld [vmem:[%s37 + $0x1c] sm:$0xf]
  %v1045 = vld [vmem:[%s37 + $0x20] sm:$0xf]
  %v1046 = vld [vmem:[%s37 + $0x24] sm:$0xf]
  %v1047 = vld [vmem:[%s37 + $0x28] sm:$0xf]
  %v1048 = vld [vmem:[%s37 + $0x2c] sm:$0xf]
  %v1049 = vld [vmem:[%s37 + $0x30] sm:$0xf]
  %v1050 = vld [vmem:[%s37 + $0x34] sm:$0xf]
  %v1051 = vld [vmem:[%s37 + $0x38] sm:$0xf]
  %v1052 = vld [vmem:[%s37 + $0x3c] sm:$0xf]
  %v1053 = vld [vmem:[%s39] sm:$0x1]
  %v1054 = vpack.c.bf16 %v1000, %v999
  %v1055 = vpack.c.bf16 %v1002, %v1001
  %v1060 = vunpack.c.l.b16 %v1003
  %v1061 = vunpack.c.l.b16 %v1004
  %v1062 = vunpack.c.l.b16 %v1005
  %v1063 = vunpack.c.l.b16 %v1006
  %v1064 = vpack.c.b16 %v1061, %v1060
  %v1065 = vpack.c.b16 %v1063, %v1062
  %v1069 = vsel %vm248, %v1054, 0
  %v1072 = vsel %vm248, %v1055, 0
  %1074 = vmatprep.subr.bf16.mxu0 0
  %1075 = vmatpush1.bf16.msra.mxu0 0
  %1076 = vmatprep.subr.bf16.mxu0 0
  %1077 = vmatpush1.bf16.msra.mxu0 0
  %1078 = vmatprep.subr.bf16.mxu0 0
  %1079 = vmatpush1.bf16.msra.mxu0 0
  %1080 = vmatprep.subr.bf16.mxu0 0
  %1081 = vmatpush1.bf16.msra.mxu0 0
  %1082 = vmatprep.subr.bf16.mxu0 0
  %1083 = vmatpush1.bf16.msra.mxu0 0
  %1084 = vmatprep.subr.bf16.mxu0 0
  %1085 = vmatpush1.bf16.msra.mxu0 0
  %1086 = vmatprep.subr.bf16.mxu0 0
  %1087 = vmatpush1.bf16.msra.mxu0 %v1065
  %1088 = vmatprep.subr.bf16.mxu0 0
  %1089 = vmatpush1.bf16.msra.mxu0 %v1064
  %1090 = vmatprep.subr.bf16.mxu0 0
  %1091 = vmatpush2.bf16.msra.mxu0 0
  %1092 = vmatprep.subr.bf16.mxu0 0
  %1093 = vmatpush2.bf16.msra.mxu0 0
  %1094 = vmatprep.subr.bf16.mxu0 0
  %1095 = vmatpush2.bf16.msra.mxu0 0
  %1096 = vmatprep.subr.bf16.mxu0 0
  %1097 = vmatpush2.bf16.msra.mxu0 0
  %1098 = vmatprep.subr.bf16.mxu0 0
  %1099 = vmatpush2.bf16.msra.mxu0 0
  %1100 = vmatprep.subr.bf16.mxu0 0
  %1101 = vmatpush2.bf16.msra.mxu0 0
  %1102 = vmatprep.subr.bf16.mxu0 0
  %1103 = vmatpush2.bf16.msra.mxu0 0
  %1104 = vmatprep.subr.bf16.mxu0 0
  %1105 = vmatpush2.bf16.msra.mxu0 0
  %1106 = vmatprep.mubr.bf16.mxu0 0
  %1107 = vmatmul.mubr.bf16.gmra.mxu0 %v1069
  %v1108 = vpop.f32.mrf.mxu0
  %v1109 = vadd.f32 0.0, %v1108
  %v1110 = vpop.f32.mrf.mxu0
  %v1111 = vpop.f32.mrf.mxu0
  %v1112 = vadd.f32 0.0, %v1111
  %v1113 = vpop.f32.mrf.mxu0
  %1114 = vmatprep.mubr.bf16.mxu0 0
  %1115 = vmatmul.mubr.bf16.gmra.mxu0 %v1072
  %v1116 = vpop.f32.mrf.mxu0
  %v1117 = vadd.f32 0.0, %v1116
  %v1118 = vpop.f32.mrf.mxu0
  %v1119 = vpop.f32.mrf.mxu0
  %v1120 = vadd.f32 0.0, %v1119
  %v1121 = vpop.f32.mrf.mxu0
  %1122 = vdwg.mxu0
  %v1124 = vsel %vm248, %v1109, 0
  %v1127 = vsel %vm248, %v1112, 0
  %v1130 = vsel %vm248, %v1117, 0
  %v1133 = vsel %vm248, %v1120, 0
  %1135 = vmatprep.subr.mxu0 0.0
  %1136 = vmatpush1.msra.mxu0 0.0
  %1137 = vmatprep.subr.mxu0 0.0
  %1138 = vmatpush1.msra.mxu0 0.0
  %1139 = vmatprep.subr.mxu0 0.0
  %1140 = vmatpush1.msra.mxu0 0.0
  %1141 = vmatprep.subr.mxu0 0.0
  %1142 = vmatpush1.msra.mxu0 0.0
  %1143 = vmatprep.subr.mxu0 0.0
  %1144 = vmatpush1.msra.mxu0 0.0
  %1145 = vmatprep.subr.mxu0 0.0
  %1146 = vmatpush1.msra.mxu0 0.0
  %1147 = vmatprep.subr.mxu0 0.0
  %1148 = vmatpush1.msra.mxu0 0.0
  %1149 = vmatprep.subr.mxu0 0.0
  %1150 = vmatpush1.msra.mxu0 0.0
  %1151 = vmatprep.subr.mxu0 0.0
  %1152 = vmatpush1.msra.mxu0 0.0
  %1153 = vmatprep.subr.mxu0 0.0
  %1154 = vmatpush1.msra.mxu0 0.0
  %1155 = vmatprep.subr.mxu0 0.0
  %1156 = vmatpush1.msra.mxu0 0.0
  %1157 = vmatprep.subr.mxu0 0.0
  %1158 = vmatpush1.msra.mxu0 0.0
  %1159 = vmatprep.subr.mxu0 0.0
  %1160 = vmatpush1.msra.mxu0 %v1010
  %1161 = vmatprep.subr.mxu0 0.0
  %1162 = vmatpush1.msra.mxu0 %v1009
  %1163 = vmatprep.subr.mxu0 0.0
  %1164 = vmatpush1.msra.mxu0 %v1008
  %1165 = vmatprep.subr.mxu0 0.0
  %1166 = vmatpush1.msra.mxu0 %v1007
  %1167 = vmatprep.subr.mxu0 0.0
  %1168 = vmatpush2.msra.mxu0 0.0
  %1169 = vmatprep.subr.mxu0 0.0
  %1170 = vmatpush2.msra.mxu0 0.0
  %1171 = vmatprep.subr.mxu0 0.0
  %1172 = vmatpush2.msra.mxu0 0.0
  %1173 = vmatprep.subr.mxu0 0.0
  %1174 = vmatpush2.msra.mxu0 0.0
  %1175 = vmatprep.subr.mxu0 0.0
  %1176 = vmatpush2.msra.mxu0 0.0
  %1177 = vmatprep.subr.mxu0 0.0
  %1178 = vmatpush2.msra.mxu0 0.0
  %1179 = vmatprep.subr.mxu0 0.0
  %1180 = vmatpush2.msra.mxu0 0.0
  %1181 = vmatprep.subr.mxu0 0.0
  %1182 = vmatpush2.msra.mxu0 0.0
  %1183 = vmatprep.subr.mxu0 0.0
  %1184 = vmatpush2.msra.mxu0 0.0
  %1185 = vmatprep.subr.mxu0 0.0
  %1186 = vmatpush2.msra.mxu0 0.0
  %1187 = vmatprep.subr.mxu0 0.0
  %1188 = vmatpush2.msra.mxu0 0.0
  %1189 = vmatprep.subr.mxu0 0.0
  %1190 = vmatpush2.msra.mxu0 0.0
  %1191 = vmatprep.subr.mxu0 0.0
  %1192 = vmatpush2.msra.mxu0 0.0
  %1193 = vmatprep.subr.mxu0 0.0
  %1194 = vmatpush2.msra.mxu0 0.0
  %1195 = vmatprep.subr.mxu0 0.0
  %1196 = vmatpush2.msra.mxu0 0.0
  %1197 = vmatprep.subr.mxu0 0.0
  %1198 = vmatpush2.msra.mxu0 0.0
  %1199 = vmatprep.mubr.f32.mxu0 0.0
  %1200 = vmatmul.mubr.f32.gmra.mxu0 %v1124
  %v1201 = vpop.f32.mrf.mxu0
  %v1202 = vadd.f32 0.0, %v1201
  %v1203 = vpop.f32.mrf.mxu0
  %1204 = vmatprep.mubr.f32.mxu0 0.0
  %1205 = vmatmul.mubr.f32.gmra.mxu0 %v1127
  %v1206 = vpop.f32.mrf.mxu0
  %v1207 = vadd.f32 0.0, %v1206
  %v1208 = vpop.f32.mrf.mxu0
  %1209 = vmatprep.mubr.f32.mxu0 0.0
  %1210 = vmatmul.mubr.f32.gmra.mxu0 %v1130
  %v1211 = vpop.f32.mrf.mxu0
  %v1212 = vadd.f32 0.0, %v1211
  %v1213 = vpop.f32.mrf.mxu0
  %1214 = vmatprep.mubr.f32.mxu0 0.0
  %1215 = vmatmul.mubr.f32.gmra.mxu0 %v1133
  %v1216 = vpop.f32.mrf.mxu0
  %v1217 = vadd.f32 0.0, %v1216
  %v1218 = vpop.f32.mrf.mxu0
  %1219 = vdwg.mxu0
  %1220 = vmatprep.subr.mxu0 0.0
  %1221 = vmatpush1.msra.mxu0 0.0
  %1222 = vmatprep.subr.mxu0 0.0
  %1223 = vmatpush1.msra.mxu0 0.0
  %1224 = vmatprep.subr.mxu0 0.0
  %1225 = vmatpush1.msra.mxu0 0.0
  %1226 = vmatprep.subr.mxu0 0.0
  %1227 = vmatpush1.msra.mxu0 0.0
  %1228 = vmatprep.subr.mxu0 0.0
  %1229 = vmatpush1.msra.mxu0 0.0
  %1230 = vmatprep.subr.mxu0 0.0
  %1231 = vmatpush1.msra.mxu0 0.0
  %1232 = vmatprep.subr.mxu0 0.0
  %1233 = vmatpush1.msra.mxu0 0.0
  %1234 = vmatprep.subr.mxu0 0.0
  %1235 = vmatpush1.msra.mxu0 0.0
  %1236 = vmatprep.subr.mxu0 0.0
  %1237 = vmatpush1.msra.mxu0 0.0
  %1238 = vmatprep.subr.mxu0 0.0
  %1239 = vmatpush1.msra.mxu0 0.0
  %1240 = vmatprep.subr.mxu0 0.0
  %1241 = vmatpush1.msra.mxu0 0.0
  %1242 = vmatprep.subr.mxu0 0.0
  %1243 = vmatpush1.msra.mxu0 0.0
  %1244 = vmatprep.subr.mxu0 0.0
  %1245 = vmatpush1.msra.mxu0 %v1014
  %1246 = vmatprep.subr.mxu0 0.0
  %1247 = vmatpush1.msra.mxu0 %v1013
  %1248 = vmatprep.subr.mxu0 0.0
  %1249 = vmatpush1.msra.mxu0 %v1012
  %1250 = vmatprep.subr.mxu0 0.0
  %1251 = vmatpush1.msra.mxu0 %v1011
  %1252 = vmatprep.subr.mxu0 0.0
  %1253 = vmatpush2.msra.mxu0 0.0
  %1254 = vmatprep.subr.mxu0 0.0
  %1255 = vmatpush2.msra.mxu0 0.0
  %1256 = vmatprep.subr.mxu0 0.0
  %1257 = vmatpush2.msra.mxu0 0.0
  %1258 = vmatprep.subr.mxu0 0.0
  %1259 = vmatpush2.msra.mxu0 0.0
  %1260 = vmatprep.subr.mxu0 0.0
  %1261 = vmatpush2.msra.mxu0 0.0
  %1262 = vmatprep.subr.mxu0 0.0
  %1263 = vmatpush2.msra.mxu0 0.0
  %1264 = vmatprep.subr.mxu0 0.0
  %1265 = vmatpush2.msra.mxu0 0.0
  %1266 = vmatprep.subr.mxu0 0.0
  %1267 = vmatpush2.msra.mxu0 0.0
  %1268 = vmatprep.subr.mxu0 0.0
  %1269 = vmatpush2.msra.mxu0 0.0
  %1270 = vmatprep.subr.mxu0 0.0
  %1271 = vmatpush2.msra.mxu0 0.0
  %1272 = vmatprep.subr.mxu0 0.0
  %1273 = vmatpush2.msra.mxu0 0.0
  %1274 = vmatprep.subr.mxu0 0.0
  %1275 = vmatpush2.msra.mxu0 0.0
  %1276 = vmatprep.subr.mxu0 0.0
  %1277 = vmatpush2.msra.mxu0 0.0
  %1278 = vmatprep.subr.mxu0 0.0
  %1279 = vmatpush2.msra.mxu0 0.0
  %1280 = vmatprep.subr.mxu0 0.0
  %1281 = vmatpush2.msra.mxu0 0.0
  %1282 = vmatprep.subr.mxu0 0.0
  %1283 = vmatpush2.msra.mxu0 0.0
  %1284 = vmatprep.mubr.f32.mxu0 0.0
  %1285 = vmatmul.mubr.f32.gmra.mxu0 %v1124
  %v1286 = vpop.f32.mrf.mxu0
  %v1287 = vadd.f32 0.0, %v1286
  %v1288 = vpop.f32.mrf.mxu0
  %1289 = vmatprep.mubr.f32.mxu0 0.0
  %1290 = vmatmul.mubr.f32.gmra.mxu0 %v1127
  %v1291 = vpop.f32.mrf.mxu0
  %v1292 = vadd.f32 0.0, %v1291
  %v1293 = vpop.f32.mrf.mxu0
  %1294 = vmatprep.mubr.f32.mxu0 0.0
  %1295 = vmatmul.mubr.f32.gmra.mxu0 %v1130
  %v1296 = vpop.f32.mrf.mxu0
  %v1297 = vadd.f32 0.0, %v1296
  %v1298 = vpop.f32.mrf.mxu0
  %1299 = vmatprep.mubr.f32.mxu0 0.0
  %1300 = vmatmul.mubr.f32.gmra.mxu0 %v1133
  %v1301 = vpop.f32.mrf.mxu0
  %v1302 = vadd.f32 0.0, %v1301
  %v1303 = vpop.f32.mrf.mxu0
  %1304 = vdwg.mxu0
  %v1306 = vsel %vm431, %v1287, 0
  %v1309 = vsel %vm431, %v1292, 0
  %v1312 = vsel %vm431, %v1297, 0
  %v1315 = vsel %vm431, %v1302, 0
  %v1318 = vsel %vm444, %v1015, 0
  %1320 = vmatprep.subr.mxu0 0.0
  %1321 = vmatpush1.msra.mxu0 0.0
  %1322 = vmatprep.subr.mxu0 0.0
  %1323 = vmatpush1.msra.mxu0 0.0
  %1324 = vmatprep.subr.mxu0 0.0
  %1325 = vmatpush1.msra.mxu0 0.0
  %1326 = vmatprep.subr.mxu0 0.0
  %1327 = vmatpush1.msra.mxu0 0.0
  %1328 = vmatprep.subr.mxu0 0.0
  %1329 = vmatpush1.msra.mxu0 0.0
  %1330 = vmatprep.subr.mxu0 0.0
  %1331 = vmatpush1.msra.mxu0 0.0
  %1332 = vmatprep.subr.mxu0 0.0
  %1333 = vmatpush1.msra.mxu0 0.0
  %1334 = vmatprep.subr.mxu0 0.0
  %1335 = vmatpush1.msra.mxu0 0.0
  %1336 = vmatprep.subr.mxu0 0.0
  %1337 = vmatpush1.msra.mxu0 0.0
  %1338 = vmatprep.subr.mxu0 0.0
  %1339 = vmatpush1.msra.mxu0 0.0
  %1340 = vmatprep.subr.mxu0 0.0
  %1341 = vmatpush1.msra.mxu0 0.0
  %1342 = vmatprep.subr.mxu0 0.0
  %1343 = vmatpush1.msra.mxu0 0.0
  %1344 = vmatprep.subr.mxu0 0.0
  %1345 = vmatpush1.msra.mxu0 0.0
  %1346 = vmatprep.subr.mxu0 0.0
  %1347 = vmatpush1.msra.mxu0 0.0
  %1348 = vmatprep.subr.mxu0 0.0
  %1349 = vmatpush1.msra.mxu0 0.0
  %1350 = vmatprep.subr.mxu0 0.0
  %1351 = vmatpush1.msra.mxu0 %v1318
  %1352 = vmatprep.subr.mxu0 0.0
  %1353 = vmatpush2.msra.mxu0 0.0
  %1354 = vmatprep.subr.mxu0 0.0
  %1355 = vmatpush2.msra.mxu0 0.0
  %1356 = vmatprep.subr.mxu0 0.0
  %1357 = vmatpush2.msra.mxu0 0.0
  %1358 = vmatprep.subr.mxu0 0.0
  %1359 = vmatpush2.msra.mxu0 0.0
  %1360 = vmatprep.subr.mxu0 0.0
  %1361 = vmatpush2.msra.mxu0 0.0
  %1362 = vmatprep.subr.mxu0 0.0
  %1363 = vmatpush2.msra.mxu0 0.0
  %1364 = vmatprep.subr.mxu0 0.0
  %1365 = vmatpush2.msra.mxu0 0.0
  %1366 = vmatprep.subr.mxu0 0.0
  %1367 = vmatpush2.msra.mxu0 0.0
  %1368 = vmatprep.subr.mxu0 0.0
  %1369 = vmatpush2.msra.mxu0 0.0
  %1370 = vmatprep.subr.mxu0 0.0
  %1371 = vmatpush2.msra.mxu0 0.0
  %1372 = vmatprep.subr.mxu0 0.0
  %1373 = vmatpush2.msra.mxu0 0.0
  %1374 = vmatprep.subr.mxu0 0.0
  %1375 = vmatpush2.msra.mxu0 0.0
  %1376 = vmatprep.subr.mxu0 0.0
  %1377 = vmatpush2.msra.mxu0 0.0
  %1378 = vmatprep.subr.mxu0 0.0
  %1379 = vmatpush2.msra.mxu0 0.0
  %1380 = vmatprep.subr.mxu0 0.0
  %1381 = vmatpush2.msra.mxu0 0.0
  %1382 = vmatprep.subr.mxu0 0.0
  %1383 = vmatpush2.msra.mxu0 0.0
  %1384 = vmatprep.mubr.f32.mxu0 0.0
  %1385 = vmatmul.mubr.f32.gmra.mxu0 %v1306
  %v1386 = vpop.f32.mrf.mxu0
  %v1387 = vadd.f32 0.0, %v1386
  %v1388 = vpop.f32.mrf.mxu0
  %1389 = vmatprep.mubr.f32.mxu0 0.0
  %1390 = vmatmul.mubr.f32.gmra.mxu0 %v1309
  %v1391 = vpop.f32.mrf.mxu0
  %v1392 = vadd.f32 0.0, %v1391
  %v1393 = vpop.f32.mrf.mxu0
  %1394 = vmatprep.mubr.f32.mxu0 0.0
  %1395 = vmatmul.mubr.f32.gmra.mxu0 %v1312
  %v1396 = vpop.f32.mrf.mxu0
  %v1397 = vadd.f32 0.0, %v1396
  %v1398 = vpop.f32.mrf.mxu0
  %1399 = vmatprep.mubr.f32.mxu0 0.0
  %1400 = vmatmul.mubr.f32.gmra.mxu0 %v1315
  %v1401 = vpop.f32.mrf.mxu0
  %v1402 = vadd.f32 0.0, %v1401
  %v1403 = vpop.f32.mrf.mxu0
  %1404 = vdwg.mxu0
  %v1405 = vmul.f32 %v1387, %v1017
  %v1406 = vmul.f32 %v1392, %v1018
  %v1407 = vmul.f32 %v1397, %v1019
  %v1408 = vmul.f32 %v1402, %v1020
  %v1409 = vadd.f32 %v1405, %v1406
  %v1410 = vadd.f32 %v1409, %v1407
  %v1411 = vadd.f32 %v1410, %v1408
  %v1412 = vrot.slane %v1411, 4
  %v1413 = vadd.f32 %v1411, %v1412
  %v1414 = vrot.slane %v1413, 2
  %v1415 = vadd.f32 %v1413, %v1414
  %v1416 = vrot.slane %v1415, 1
  %v1417 = vadd.f32 %v1415, %v1416
  %v1419 = vsel %vm431, %v1202, 0
  %v1422 = vsel %vm431, %v1207, 0
  %v1425 = vsel %vm431, %v1212, 0
  %v1428 = vsel %vm431, %v1217, 0
  %1430 = vmatprep.subr.mxu0 0.0
  %1431 = vmatpush1.msra.mxu0 0.0
  %1432 = vmatprep.subr.mxu0 0.0
  %1433 = vmatpush1.msra.mxu0 0.0
  %1434 = vmatprep.subr.mxu0 0.0
  %1435 = vmatpush1.msra.mxu0 0.0
  %1436 = vmatprep.subr.mxu0 0.0
  %1437 = vmatpush1.msra.mxu0 0.0
  %1438 = vmatprep.subr.mxu0 0.0
  %1439 = vmatpush1.msra.mxu0 0.0
  %1440 = vmatprep.subr.mxu0 0.0
  %1441 = vmatpush1.msra.mxu0 0.0
  %1442 = vmatprep.subr.mxu0 0.0
  %1443 = vmatpush1.msra.mxu0 0.0
  %1444 = vmatprep.subr.mxu0 0.0
  %1445 = vmatpush1.msra.mxu0 0.0
  %1446 = vmatprep.subr.mxu0 0.0
  %1447 = vmatpush1.msra.mxu0 0.0
  %1448 = vmatprep.subr.mxu0 0.0
  %1449 = vmatpush1.msra.mxu0 0.0
  %1450 = vmatprep.subr.mxu0 0.0
  %1451 = vmatpush1.msra.mxu0 0.0
  %1452 = vmatprep.subr.mxu0 0.0
  %1453 = vmatpush1.msra.mxu0 0.0
  %1454 = vmatprep.subr.mxu0 0.0
  %1455 = vmatpush1.msra.mxu0 0.0
  %1456 = vmatprep.subr.mxu0 0.0
  %1457 = vmatpush1.msra.mxu0 0.0
  %1458 = vmatprep.subr.mxu0 0.0
  %1459 = vmatpush1.msra.mxu0 0.0
  %1460 = vmatprep.subr.mxu0 0.0
  %1461 = vmatpush1.msra.mxu0 %v1318
  %1462 = vmatprep.subr.mxu0 0.0
  %1463 = vmatpush2.msra.mxu0 0.0
  %1464 = vmatprep.subr.mxu0 0.0
  %1465 = vmatpush2.msra.mxu0 0.0
  %1466 = vmatprep.subr.mxu0 0.0
  %1467 = vmatpush2.msra.mxu0 0.0
  %1468 = vmatprep.subr.mxu0 0.0
  %1469 = vmatpush2.msra.mxu0 0.0
  %1470 = vmatprep.subr.mxu0 0.0
  %1471 = vmatpush2.msra.mxu0 0.0
  %1472 = vmatprep.subr.mxu0 0.0
  %1473 = vmatpush2.msra.mxu0 0.0
  %1474 = vmatprep.subr.mxu0 0.0
  %1475 = vmatpush2.msra.mxu0 0.0
  %1476 = vmatprep.subr.mxu0 0.0
  %1477 = vmatpush2.msra.mxu0 0.0
  %1478 = vmatprep.subr.mxu0 0.0
  %1479 = vmatpush2.msra.mxu0 0.0
  %1480 = vmatprep.subr.mxu0 0.0
  %1481 = vmatpush2.msra.mxu0 0.0
  %1482 = vmatprep.subr.mxu0 0.0
  %1483 = vmatpush2.msra.mxu0 0.0
  %1484 = vmatprep.subr.mxu0 0.0
  %1485 = vmatpush2.msra.mxu0 0.0
  %1486 = vmatprep.subr.mxu0 0.0
  %1487 = vmatpush2.msra.mxu0 0.0
  %1488 = vmatprep.subr.mxu0 0.0
  %1489 = vmatpush2.msra.mxu0 0.0
  %1490 = vmatprep.subr.mxu0 0.0
  %1491 = vmatpush2.msra.mxu0 0.0
  %1492 = vmatprep.subr.mxu0 0.0
  %1493 = vmatpush2.msra.mxu0 0.0
  %1494 = vmatprep.mubr.f32.mxu0 0.0
  %1495 = vmatmul.mubr.f32.gmra.mxu0 %v1419
  %v1496 = vpop.f32.mrf.mxu0
  %v1497 = vadd.f32 %v1417, %v1496
  %v1498 = vpop.f32.mrf.mxu0
  %1499 = vmatprep.mubr.f32.mxu0 0.0
  %1500 = vmatmul.mubr.f32.gmra.mxu0 %v1422
  %v1501 = vpop.f32.mrf.mxu0
  %v1502 = vadd.f32 %v1417, %v1501
  %v1503 = vpop.f32.mrf.mxu0
  %1504 = vmatprep.mubr.f32.mxu0 0.0
  %1505 = vmatmul.mubr.f32.gmra.mxu0 %v1425
  %v1506 = vpop.f32.mrf.mxu0
  %v1507 = vadd.f32 %v1417, %v1506
  %v1508 = vpop.f32.mrf.mxu0
  %1509 = vmatprep.mubr.f32.mxu0 0.0
  %1510 = vmatmul.mubr.f32.gmra.mxu0 %v1428
  %v1511 = vpop.f32.mrf.mxu0
  %v1512 = vadd.f32 %v1417, %v1511
  %v1513 = vpop.f32.mrf.mxu0
  %1514 = vdwg.mxu0
  %v1515 = vmul.f32 %v1497, 0.2
  %v1516 = vmul.f32 %v1502, 0.2
  %v1517 = vmul.f32 %v1507, 0.2
  %v1518 = vmul.f32 %v1512, 0.2
  %v1519 = vmax.f32 %v1497, %v1515
  %v1520 = vmax.f32 %v1502, %v1516
  %v1521 = vmax.f32 %v1507, %v1517
  %v1522 = vmax.f32 %v1512, %v1518
  %v1523 = vadd.f32 %v1519, %v127
  %v1524 = vadd.f32 %v1520, %v128
  %v1525 = vadd.f32 %v1521, %v129
  %v1526 = vadd.f32 %v1522, %v130
  %1527 = vmax.xlane.f32.xlu0 %v1523
  %v1528 = vpop.xlane.xlu0 %1527
  %1529 = vmax.xlane.f32.xlu0 %v1524
  %v1530 = vpop.xlane.xlu0 %1529
  %1531 = vmax.xlane.f32.xlu0 %v1525
  %v1532 = vpop.xlane.xlu0 %1531
  %1533 = vmax.xlane.f32.xlu0 %v1526
  %v1534 = vpop.xlane.xlu0 %1533
  %v1535 = vsub.f32 %v1523, %v1528
  %v1536 = vsub.f32 %v1524, %v1530
  %v1537 = vsub.f32 %v1525, %v1532
  %v1538 = vsub.f32 %v1526, %v1534
  %v1539 = vmul.f32 %v1535, 1.442695
  %v1540 = vpow.pop %v1539
  %v1541 = vmul.f32 %v1536, 1.442695
  %v1542 = vpow.pop %v1541
  %v1543 = vmul.f32 %v1537, 1.442695
  %v1544 = vpow.pop %v1543
  %v1545 = vmul.f32 %v1538, 1.442695
  %v1546 = vpow.pop %v1545
  %v1547 = vpack.c.bf16 %v1542, %v1540
  %v1548 = vpack.c.bf16 %v1546, %v1544
  %v1549 = vpack.c.bf16 %v1112, %v1109
  %v1550 = vpack.c.bf16 %v1120, %v1117
  %v1567 = vunpack.c.l.b16 %v1037
  %v1568 = vunpack.c.l.b16 %v1038
  %v1569 = vunpack.c.l.b16 %v1039
  %v1570 = vunpack.c.l.b16 %v1040
  %v1571 = vunpack.c.l.b16 %v1041
  %v1572 = vunpack.c.l.b16 %v1042
  %v1573 = vunpack.c.l.b16 %v1043
  %v1574 = vunpack.c.l.b16 %v1044
  %v1575 = vunpack.c.l.b16 %v1045
  %v1576 = vunpack.c.l.b16 %v1046
  %v1577 = vunpack.c.l.b16 %v1047
  %v1578 = vunpack.c.l.b16 %v1048
  %v1579 = vunpack.c.l.b16 %v1049
  %v1580 = vunpack.c.l.b16 %v1050
  %v1581 = vunpack.c.l.b16 %v1051
  %v1582 = vunpack.c.l.b16 %v1052
  %v1583 = vpack.c.b16 %v1568, %v1567
  %v1584 = vpack.c.b16 %v1570, %v1569
  %v1585 = vpack.c.b16 %v1572, %v1571
  %v1586 = vpack.c.b16 %v1574, %v1573
  %v1587 = vpack.c.b16 %v1576, %v1575
  %v1588 = vpack.c.b16 %v1578, %v1577
  %v1589 = vpack.c.b16 %v1580, %v1579
  %v1590 = vpack.c.b16 %v1582, %v1581
  %v1599 = vmul.bf16 %v1549, %v1583
  %v1600 = vmul.bf16 %v1550, %v1584
  %v1601 = vmul.bf16 %v1549, %v1585
  %v1602 = vmul.bf16 %v1550, %v1586
  %v1603 = vmul.bf16 %v1549, %v1587
  %v1604 = vmul.bf16 %v1550, %v1588
  %v1605 = vmul.bf16 %v1549, %v1589
  %v1606 = vmul.bf16 %v1550, %v1590
  %1607 = vmatprep.subr.bf16.mxu0 0
  %1608 = vmatpush1.bf16.msra.mxu0 %v1606
  %1609 = vmatprep.subr.bf16.mxu0 0
  %1610 = vmatpush1.bf16.msra.mxu0 %v1605
  %1611 = vmatprep.subr.bf16.mxu0 0
  %1612 = vmatpush1.bf16.msra.mxu0 %v1604
  %1613 = vmatprep.subr.bf16.mxu0 0
  %1614 = vmatpush1.bf16.msra.mxu0 %v1603
  %1615 = vmatprep.subr.bf16.mxu0 0
  %1616 = vmatpush1.bf16.msra.mxu0 %v1602
  %1617 = vmatprep.subr.bf16.mxu0 0
  %1618 = vmatpush1.bf16.msra.mxu0 %v1601
  %1619 = vmatprep.subr.bf16.mxu0 0
  %1620 = vmatpush1.bf16.msra.mxu0 %v1600
  %1621 = vmatprep.subr.bf16.mxu0 0
  %1622 = vmatpush1.bf16.msra.mxu0 %v1599
  %1623 = vmatprep.subr.bf16.mxu0 0
  %1624 = vmatpush2.bf16.msra.mxu0 0
  %1625 = vmatprep.subr.bf16.mxu0 0
  %1626 = vmatpush2.bf16.msra.mxu0 0
  %1627 = vmatprep.subr.bf16.mxu0 0
  %1628 = vmatpush2.bf16.msra.mxu0 0
  %1629 = vmatprep.subr.bf16.mxu0 0
  %1630 = vmatpush2.bf16.msra.mxu0 0
  %1631 = vmatprep.subr.bf16.mxu0 0
  %1632 = vmatpush2.bf16.msra.mxu0 0
  %1633 = vmatprep.subr.bf16.mxu0 0
  %1634 = vmatpush2.bf16.msra.mxu0 0
  %1635 = vmatprep.subr.bf16.mxu0 0
  %1636 = vmatpush2.bf16.msra.mxu0 0
  %1637 = vmatprep.subr.bf16.mxu0 0
  %1638 = vmatpush2.bf16.msra.mxu0 0
  %1639 = vmatprep.mubr.bf16.mxu0 0
  %1640 = vmatmul.mubr.bf16.gmra.mxu0 %v1547
  %v1641 = vpop.f32.mrf.mxu0
  %v1642 = vadd.f32 0.0, %v1641
  %v1643 = vpop.f32.mrf.mxu0
  %v1644 = vpop.f32.mrf.mxu0
  %v1645 = vadd.f32 0.0, %v1644
  %v1646 = vpop.f32.mrf.mxu0
  %1647 = vmatprep.mubr.bf16.mxu0 0
  %1648 = vmatmul.mubr.bf16.gmra.mxu0 %v1548
  %v1649 = vpop.f32.mrf.mxu0
  %v1650 = vadd.f32 0.0, %v1649
  %v1651 = vpop.f32.mrf.mxu0
  %v1652 = vpop.f32.mrf.mxu0
  %v1653 = vadd.f32 0.0, %v1652
  %v1654 = vpop.f32.mrf.mxu0
  %1655 = vdwg.mxu0
  %v1672 = vunpack.c.l.b16 %v1021
  %v1673 = vunpack.c.l.b16 %v1022
  %v1674 = vunpack.c.l.b16 %v1023
  %v1675 = vunpack.c.l.b16 %v1024
  %v1676 = vunpack.c.l.b16 %v1025
  %v1677 = vunpack.c.l.b16 %v1026
  %v1678 = vunpack.c.l.b16 %v1027
  %v1679 = vunpack.c.l.b16 %v1028
  %v1680 = vunpack.c.l.b16 %v1029
  %v1681 = vunpack.c.l.b16 %v1030
  %v1682 = vunpack.c.l.b16 %v1031
  %v1683 = vunpack.c.l.b16 %v1032
  %v1684 = vunpack.c.l.b16 %v1033
  %v1685 = vunpack.c.l.b16 %v1034
  %v1686 = vunpack.c.l.b16 %v1035
  %v1687 = vunpack.c.l.b16 %v1036
  %v1688 = vpack.c.b16 %v1673, %v1672
  %v1689 = vpack.c.b16 %v1675, %v1674
  %v1690 = vpack.c.b16 %v1677, %v1676
  %v1691 = vpack.c.b16 %v1679, %v1678
  %v1692 = vpack.c.b16 %v1681, %v1680
  %v1693 = vpack.c.b16 %v1683, %v1682
  %v1694 = vpack.c.b16 %v1685, %v1684
  %v1695 = vpack.c.b16 %v1687, %v1686
  %1704 = vmatprep.subr.bf16.mxu0 0
  %1705 = vmatpush1.bf16.msra.mxu0 %v1695
  %1706 = vmatprep.subr.bf16.mxu0 0
  %1707 = vmatpush1.bf16.msra.mxu0 %v1694
  %1708 = vmatprep.subr.bf16.mxu0 0
  %1709 = vmatpush1.bf16.msra.mxu0 %v1693
  %1710 = vmatprep.subr.bf16.mxu0 0
  %1711 = vmatpush1.bf16.msra.mxu0 %v1692
  %1712 = vmatprep.subr.bf16.mxu0 0
  %1713 = vmatpush1.bf16.msra.mxu0 %v1691
  %1714 = vmatprep.subr.bf16.mxu0 0
  %1715 = vmatpush1.bf16.msra.mxu0 %v1690
  %1716 = vmatprep.subr.bf16.mxu0 0
  %1717 = vmatpush1.bf16.msra.mxu0 %v1689
  %1718 = vmatprep.subr.bf16.mxu0 0
  %1719 = vmatpush1.bf16.msra.mxu0 %v1688
  %1720 = vmatprep.subr.bf16.mxu0 0
  %1721 = vmatpush2.bf16.msra.mxu0 0
  %1722 = vmatprep.subr.bf16.mxu0 0
  %1723 = vmatpush2.bf16.msra.mxu0 0
  %1724 = vmatprep.subr.bf16.mxu0 0
  %1725 = vmatpush2.bf16.msra.mxu0 0
  %1726 = vmatprep.subr.bf16.mxu0 0
  %1727 = vmatpush2.bf16.msra.mxu0 0
  %1728 = vmatprep.subr.bf16.mxu0 0
  %1729 = vmatpush2.bf16.msra.mxu0 0
  %1730 = vmatprep.subr.bf16.mxu0 0
  %1731 = vmatpush2.bf16.msra.mxu0 0
  %1732 = vmatprep.subr.bf16.mxu0 0
  %1733 = vmatpush2.bf16.msra.mxu0 0
  %1734 = vmatprep.subr.bf16.mxu0 0
  %1735 = vmatpush2.bf16.msra.mxu0 0
  %1736 = vmatprep.mubr.bf16.mxu0 0
  %1737 = vmatmul.mubr.bf16.gmra.mxu0 %v1547
  %v1738 = vpop.f32.mrf.mxu0
  %v1739 = vadd.f32 0.0, %v1738
  %v1740 = vpop.f32.mrf.mxu0
  %v1741 = vpop.f32.mrf.mxu0
  %v1742 = vadd.f32 0.0, %v1741
  %v1743 = vpop.f32.mrf.mxu0
  %1744 = vmatprep.mubr.bf16.mxu0 0
  %1745 = vmatmul.mubr.bf16.gmra.mxu0 %v1548
  %v1746 = vpop.f32.mrf.mxu0
  %v1747 = vadd.f32 0.0, %v1746
  %v1748 = vpop.f32.mrf.mxu0
  %v1749 = vpop.f32.mrf.mxu0
  %v1750 = vadd.f32 0.0, %v1749
  %v1751 = vpop.f32.mrf.mxu0
  %1752 = vdwg.mxu0
  %v1753 = vrcp.pop %v1739
  %v1754 = vrcp.pop %v1742
  %v1755 = vrcp.pop %v1747
  %v1756 = vrcp.pop %v1750
  %v1758 = vsel %vm431, %v1753, 0
  %v1761 = vsel %vm431, %v1754, 0
  %v1764 = vsel %vm431, %v1755, 0
  %v1767 = vsel %vm431, %v1756, 0
  %v1770 = vsel %vm444, %v1016, 0
  %1772 = vmatprep.subr.mxu0 0.0
  %1773 = vmatpush1.msra.mxu0 0.0
  %1774 = vmatprep.subr.mxu0 0.0
  %1775 = vmatpush1.msra.mxu0 0.0
  %1776 = vmatprep.subr.mxu0 0.0
  %1777 = vmatpush1.msra.mxu0 0.0
  %1778 = vmatprep.subr.mxu0 0.0
  %1779 = vmatpush1.msra.mxu0 0.0
  %1780 = vmatprep.subr.mxu0 0.0
  %1781 = vmatpush1.msra.mxu0 0.0
  %1782 = vmatprep.subr.mxu0 0.0
  %1783 = vmatpush1.msra.mxu0 0.0
  %1784 = vmatprep.subr.mxu0 0.0
  %1785 = vmatpush1.msra.mxu0 0.0
  %1786 = vmatprep.subr.mxu0 0.0
  %1787 = vmatpush1.msra.mxu0 0.0
  %1788 = vmatprep.subr.mxu0 0.0
  %1789 = vmatpush1.msra.mxu0 0.0
  %1790 = vmatprep.subr.mxu0 0.0
  %1791 = vmatpush1.msra.mxu0 0.0
  %1792 = vmatprep.subr.mxu0 0.0
  %1793 = vmatpush1.msra.mxu0 0.0
  %1794 = vmatprep.subr.mxu0 0.0
  %1795 = vmatpush1.msra.mxu0 0.0
  %1796 = vmatprep.subr.mxu0 0.0
  %1797 = vmatpush1.msra.mxu0 0.0
  %1798 = vmatprep.subr.mxu0 0.0
  %1799 = vmatpush1.msra.mxu0 0.0
  %1800 = vmatprep.subr.mxu0 0.0
  %1801 = vmatpush1.msra.mxu0 0.0
  %1802 = vmatprep.subr.mxu0 0.0
  %1803 = vmatpush1.msra.mxu0 %v1770
  %1804 = vmatprep.subr.mxu0 0.0
  %1805 = vmatpush2.msra.mxu0 0.0
  %1806 = vmatprep.subr.mxu0 0.0
  %1807 = vmatpush2.msra.mxu0 0.0
  %1808 = vmatprep.subr.mxu0 0.0
  %1809 = vmatpush2.msra.mxu0 0.0
  %1810 = vmatprep.subr.mxu0 0.0
  %1811 = vmatpush2.msra.mxu0 0.0
  %1812 = vmatprep.subr.mxu0 0.0
  %1813 = vmatpush2.msra.mxu0 0.0
  %1814 = vmatprep.subr.mxu0 0.0
  %1815 = vmatpush2.msra.mxu0 0.0
  %1816 = vmatprep.subr.mxu0 0.0
  %1817 = vmatpush2.msra.mxu0 0.0
  %1818 = vmatprep.subr.mxu0 0.0
  %1819 = vmatpush2.msra.mxu0 0.0
  %1820 = vmatprep.subr.mxu0 0.0
  %1821 = vmatpush2.msra.mxu0 0.0
  %1822 = vmatprep.subr.mxu0 0.0
  %1823 = vmatpush2.msra.mxu0 0.0
  %1824 = vmatprep.subr.mxu0 0.0
  %1825 = vmatpush2.msra.mxu0 0.0
  %1826 = vmatprep.subr.mxu0 0.0
  %1827 = vmatpush2.msra.mxu0 0.0
  %1828 = vmatprep.subr.mxu0 0.0
  %1829 = vmatpush2.msra.mxu0 0.0
  %1830 = vmatprep.subr.mxu0 0.0
  %1831 = vmatpush2.msra.mxu0 0.0
  %1832 = vmatprep.subr.mxu0 0.0
  %1833 = vmatpush2.msra.mxu0 0.0
  %1834 = vmatprep.subr.mxu0 0.0
  %1835 = vmatpush2.msra.mxu0 0.0
  %1836 = vmatprep.mubr.f32.mxu0 0.0
  %1837 = vmatmul.mubr.f32.gmra.mxu0 %v1758
  %v1838 = vpop.f32.mrf.mxu0
  %v1839 = vadd.f32 0.0, %v1838
  %v1840 = vpop.f32.mrf.mxu0
  %1841 = vmatprep.mubr.f32.mxu0 0.0
  %1842 = vmatmul.mubr.f32.gmra.mxu0 %v1761
  %v1843 = vpop.f32.mrf.mxu0
  %v1844 = vadd.f32 0.0, %v1843
  %v1845 = vpop.f32.mrf.mxu0
  %1846 = vmatprep.mubr.f32.mxu0 0.0
  %1847 = vmatmul.mubr.f32.gmra.mxu0 %v1764
  %v1848 = vpop.f32.mrf.mxu0
  %v1849 = vadd.f32 0.0, %v1848
  %v1850 = vpop.f32.mrf.mxu0
  %1851 = vmatprep.mubr.f32.mxu0 0.0
  %1852 = vmatmul.mubr.f32.gmra.mxu0 %v1767
  %v1853 = vpop.f32.mrf.mxu0
  %v1854 = vadd.f32 0.0, %v1853
  %v1855 = vpop.f32.mrf.mxu0
  %1856 = vdwg.mxu0
  %v1857 = vmul.f32 %v1642, %v1839
  %v1858 = vmul.f32 %v1645, %v1844
  %v1859 = vmul.f32 %v1650, %v1849
  %v1860 = vmul.f32 %v1653, %v1854
  %v1862 = vlaneseq
  %v1863 = vshrl.u32 %v1862, 7
  %v1864 = vsub.s32 0, %v1863
  %v1865 = vrot.slane %v1053, %v1864
  %v1867 = vadd.f32 %v1857, %v1865
  %v1868 = vadd.f32 %v1858, %v1865
  %v1869 = vadd.f32 %v1859, %v1865
  %v1870 = vadd.f32 %v1860, %v1865
  %v1871 = vadd.f32 %v1867, %v999
  %v1872 = vadd.f32 %v1868, %v1000
  %v1873 = vadd.f32 %v1869, %v1001
  %v1874 = vadd.f32 %v1870, %v1002
  %v1875 = vmax.f32 %v1871, 0.0
  %v1876 = vmax.f32 %v1872, 0.0
  %v1877 = vmax.f32 %v1873, 0.0
  %v1878 = vmax.f32 %v1874, 0.0
  %v1879 = vld [vmem:[%s41] sm:$0xf]
  %v1880 = vld [vmem:[%s41 + $0x4] sm:$0xf]
  %v1881 = vld [vmem:[%s41 + $0x8] sm:$0xf]
  %v1882 = vld [vmem:[%s41 + $0xc] sm:$0xf]
  %v1883 = vld [vmem:[%s43] sm:$0xff]
  %v1884 = vld [vmem:[%s45] sm:$0xff]
  %v1885 = vld [vmem:[%s47] sm:$0x3]
  %v1886 = vld [vmem:[%s49] sm:$0x3]
  %v1887 = vld [vmem:[%s51] sm:$0xff]
  %v1888 = vld [vmem:[%s51 + $0x8] sm:$0xff]
  %v1889 = vld [vmem:[%s51 + $0x10] sm:$0xff]
  %v1890 = vld [vmem:[%s51 + $0x18] sm:$0xff]
  %v1891 = vld [vmem:[%s53] sm:$0xf]
  %v1892 = vld [vmem:[%s53 + $0x4] sm:$0xf]
  %v1893 = vld [vmem:[%s53 + $0x8] sm:$0xf]
  %v1894 = vld [vmem:[%s53 + $0xc] sm:$0xf]
  %v1895 = vld [vmem:[%s53 + $0x10] sm:$0xf]
  %v1896 = vld [vmem:[%s53 + $0x14] sm:$0xf]
  %v1897 = vld [vmem:[%s53 + $0x18] sm:$0xf]
  %v1898 = vld [vmem:[%s53 + $0x1c] sm:$0xf]
  %v1899 = vld [vmem:[%s55] sm:$0xf]
  %v1900 = vld [vmem:[%s55 + $0x4] sm:$0xf]
  %v1901 = vld [vmem:[%s55 + $0x8] sm:$0xf]
  %v1902 = vld [vmem:[%s55 + $0xc] sm:$0xf]
  %v1903 = vld [vmem:[%s55 + $0x10] sm:$0xf]
  %v1904 = vld [vmem:[%s55 + $0x14] sm:$0xf]
  %v1905 = vld [vmem:[%s55 + $0x18] sm:$0xf]
  %v1906 = vld [vmem:[%s55 + $0x1c] sm:$0xf]
  %v1907 = vld [vmem:[%s57] sm:$0x1]
  %v1908 = vld [vmem:[%s59] sm:$0xff]
  %v1909 = vpack.c.bf16 %v1876, %v1875
  %v1910 = vpack.c.bf16 %v1878, %v1877
  %v1915 = vunpack.c.l.b16 %v1879
  %v1916 = vunpack.c.l.b16 %v1880
  %v1917 = vunpack.c.l.b16 %v1881
  %v1918 = vunpack.c.l.b16 %v1882
  %v1919 = vpack.c.b16 %v1916, %v1915
  %v1920 = vpack.c.b16 %v1918, %v1917
  %v1924 = vsel %vm248, %v1909, 0
  %v1927 = vsel %vm248, %v1910, 0
  %1929 = vmatprep.subr.bf16.mxu0 0
  %1930 = vmatpush1.bf16.msra.mxu0 0
  %1931 = vmatprep.subr.bf16.mxu0 0
  %1932 = vmatpush1.bf16.msra.mxu0 0
  %1933 = vmatprep.subr.bf16.mxu0 0
  %1934 = vmatpush1.bf16.msra.mxu0 0
  %1935 = vmatprep.subr.bf16.mxu0 0
  %1936 = vmatpush1.bf16.msra.mxu0 0
  %1937 = vmatprep.subr.bf16.mxu0 0
  %1938 = vmatpush1.bf16.msra.mxu0 0
  %1939 = vmatprep.subr.bf16.mxu0 0
  %1940 = vmatpush1.bf16.msra.mxu0 0
  %1941 = vmatprep.subr.bf16.mxu0 0
  %1942 = vmatpush1.bf16.msra.mxu0 %v1920
  %1943 = vmatprep.subr.bf16.mxu0 0
  %1944 = vmatpush1.bf16.msra.mxu0 %v1919
  %1945 = vmatprep.subr.bf16.mxu0 0
  %1946 = vmatpush2.bf16.msra.mxu0 0
  %1947 = vmatprep.subr.bf16.mxu0 0
  %1948 = vmatpush2.bf16.msra.mxu0 0
  %1949 = vmatprep.subr.bf16.mxu0 0
  %1950 = vmatpush2.bf16.msra.mxu0 0
  %1951 = vmatprep.subr.bf16.mxu0 0
  %1952 = vmatpush2.bf16.msra.mxu0 0
  %1953 = vmatprep.subr.bf16.mxu0 0
  %1954 = vmatpush2.bf16.msra.mxu0 0
  %1955 = vmatprep.subr.bf16.mxu0 0
  %1956 = vmatpush2.bf16.msra.mxu0 0
  %1957 = vmatprep.subr.bf16.mxu0 0
  %1958 = vmatpush2.bf16.msra.mxu0 0
  %1959 = vmatprep.subr.bf16.mxu0 0
  %1960 = vmatpush2.bf16.msra.mxu0 0
  %1961 = vmatprep.mubr.bf16.mxu0 0
  %1962 = vmatmul.mubr.bf16.gmra.mxu0 %v1924
  %v1963 = vpop.f32.mrf.mxu0
  %v1964 = vadd.f32 0.0, %v1963
  %v1965 = vpop.f32.mrf.mxu0
  %v1966 = vpop.f32.mrf.mxu0
  %v1967 = vadd.f32 0.0, %v1966
  %v1968 = vpop.f32.mrf.mxu0
  %1969 = vmatprep.mubr.bf16.mxu0 0
  %1970 = vmatmul.mubr.bf16.gmra.mxu0 %v1927
  %v1971 = vpop.f32.mrf.mxu0
  %v1972 = vadd.f32 0.0, %v1971
  %v1973 = vpop.f32.mrf.mxu0
  %v1974 = vpop.f32.mrf.mxu0
  %v1975 = vadd.f32 0.0, %v1974
  %v1976 = vpop.f32.mrf.mxu0
  %1977 = vdwg.mxu0
  %vm1978 = vcmask 64512
  %v1980 = vsel %vm1978, %v1964, 0
  %v1983 = vsel %vm1978, %v1967, 0
  %v1986 = vsel %vm1978, %v1972, 0
  %v1989 = vsel %vm1978, %v1975, 0
  %1991 = vmatprep.subr.mxu0 0.0
  %1992 = vmatpush1.msra.mxu0 0.0
  %1993 = vmatprep.subr.mxu0 0.0
  %1994 = vmatpush1.msra.mxu0 0.0
  %1995 = vmatprep.subr.mxu0 0.0
  %1996 = vmatpush1.msra.mxu0 0.0
  %1997 = vmatprep.subr.mxu0 0.0
  %1998 = vmatpush1.msra.mxu0 0.0
  %1999 = vmatprep.subr.mxu0 0.0
  %2000 = vmatpush1.msra.mxu0 0.0
  %2001 = vmatprep.subr.mxu0 0.0
  %2002 = vmatpush1.msra.mxu0 0.0
  %2003 = vmatprep.subr.mxu0 0.0
  %2004 = vmatpush1.msra.mxu0 0.0
  %2005 = vmatprep.subr.mxu0 0.0
  %2006 = vmatpush1.msra.mxu0 0.0
  %2007 = vmatprep.subr.mxu0 0.0
  %2008 = vmatpush1.msra.mxu0 0.0
  %2009 = vmatprep.subr.mxu0 0.0
  %2010 = vmatpush1.msra.mxu0 0.0
  %2011 = vmatprep.subr.mxu0 0.0
  %2012 = vmatpush1.msra.mxu0 0.0
  %2013 = vmatprep.subr.mxu0 0.0
  %2014 = vmatpush1.msra.mxu0 0.0
  %2015 = vmatprep.subr.mxu0 0.0
  %2016 = vmatpush1.msra.mxu0 0.0
  %2017 = vmatprep.subr.mxu0 0.0
  %2018 = vmatpush1.msra.mxu0 0.0
  %2019 = vmatprep.subr.mxu0 0.0
  %2020 = vmatpush1.msra.mxu0 0.0
  %2021 = vmatprep.subr.mxu0 0.0
  %2022 = vmatpush1.msra.mxu0 %v1883
  %2023 = vmatprep.subr.mxu0 0.0
  %2024 = vmatpush2.msra.mxu0 0.0
  %2025 = vmatprep.subr.mxu0 0.0
  %2026 = vmatpush2.msra.mxu0 0.0
  %2027 = vmatprep.subr.mxu0 0.0
  %2028 = vmatpush2.msra.mxu0 0.0
  %2029 = vmatprep.subr.mxu0 0.0
  %2030 = vmatpush2.msra.mxu0 0.0
  %2031 = vmatprep.subr.mxu0 0.0
  %2032 = vmatpush2.msra.mxu0 0.0
  %2033 = vmatprep.subr.mxu0 0.0
  %2034 = vmatpush2.msra.mxu0 0.0
  %2035 = vmatprep.subr.mxu0 0.0
  %2036 = vmatpush2.msra.mxu0 0.0
  %2037 = vmatprep.subr.mxu0 0.0
  %2038 = vmatpush2.msra.mxu0 0.0
  %2039 = vmatprep.subr.mxu0 0.0
  %2040 = vmatpush2.msra.mxu0 0.0
  %2041 = vmatprep.subr.mxu0 0.0
  %2042 = vmatpush2.msra.mxu0 0.0
  %2043 = vmatprep.subr.mxu0 0.0
  %2044 = vmatpush2.msra.mxu0 0.0
  %2045 = vmatprep.subr.mxu0 0.0
  %2046 = vmatpush2.msra.mxu0 0.0
  %2047 = vmatprep.subr.mxu0 0.0
  %2048 = vmatpush2.msra.mxu0 0.0
  %2049 = vmatprep.subr.mxu0 0.0
  %2050 = vmatpush2.msra.mxu0 0.0
  %2051 = vmatprep.subr.mxu0 0.0
  %2052 = vmatpush2.msra.mxu0 0.0
  %2053 = vmatprep.subr.mxu0 0.0
  %2054 = vmatpush2.msra.mxu0 0.0
  %2055 = vmatprep.mubr.f32.mxu0 0.0
  %2056 = vmatmul.mubr.f32.gmra.mxu0 %v1980
  %v2057 = vpop.f32.mrf.mxu0
  %v2058 = vadd.f32 0.0, %v2057
  %v2059 = vpop.f32.mrf.mxu0
  %2060 = vmatprep.mubr.f32.mxu0 0.0
  %2061 = vmatmul.mubr.f32.gmra.mxu0 %v1983
  %v2062 = vpop.f32.mrf.mxu0
  %v2063 = vadd.f32 0.0, %v2062
  %v2064 = vpop.f32.mrf.mxu0
  %2065 = vmatprep.mubr.f32.mxu0 0.0
  %2066 = vmatmul.mubr.f32.gmra.mxu0 %v1986
  %v2067 = vpop.f32.mrf.mxu0
  %v2068 = vadd.f32 0.0, %v2067
  %v2069 = vpop.f32.mrf.mxu0
  %2070 = vmatprep.mubr.f32.mxu0 0.0
  %2071 = vmatmul.mubr.f32.gmra.mxu0 %v1989
  %v2072 = vpop.f32.mrf.mxu0
  %v2073 = vadd.f32 0.0, %v2072
  %v2074 = vpop.f32.mrf.mxu0
  %2075 = vdwg.mxu0
  %2076 = vmatprep.subr.mxu0 0.0
  %2077 = vmatpush1.msra.mxu0 0.0
  %2078 = vmatprep.subr.mxu0 0.0
  %2079 = vmatpush1.msra.mxu0 0.0
  %2080 = vmatprep.subr.mxu0 0.0
  %2081 = vmatpush1.msra.mxu0 0.0
  %2082 = vmatprep.subr.mxu0 0.0
  %2083 = vmatpush1.msra.mxu0 0.0
  %2084 = vmatprep.subr.mxu0 0.0
  %2085 = vmatpush1.msra.mxu0 0.0
  %2086 = vmatprep.subr.mxu0 0.0
  %2087 = vmatpush1.msra.mxu0 0.0
  %2088 = vmatprep.subr.mxu0 0.0
  %2089 = vmatpush1.msra.mxu0 0.0
  %2090 = vmatprep.subr.mxu0 0.0
  %2091 = vmatpush1.msra.mxu0 0.0
  %2092 = vmatprep.subr.mxu0 0.0
  %2093 = vmatpush1.msra.mxu0 0.0
  %2094 = vmatprep.subr.mxu0 0.0
  %2095 = vmatpush1.msra.mxu0 0.0
  %2096 = vmatprep.subr.mxu0 0.0
  %2097 = vmatpush1.msra.mxu0 0.0
  %2098 = vmatprep.subr.mxu0 0.0
  %2099 = vmatpush1.msra.mxu0 0.0
  %2100 = vmatprep.subr.mxu0 0.0
  %2101 = vmatpush1.msra.mxu0 0.0
  %2102 = vmatprep.subr.mxu0 0.0
  %2103 = vmatpush1.msra.mxu0 0.0
  %2104 = vmatprep.subr.mxu0 0.0
  %2105 = vmatpush1.msra.mxu0 0.0
  %2106 = vmatprep.subr.mxu0 0.0
  %2107 = vmatpush1.msra.mxu0 %v1884
  %2108 = vmatprep.subr.mxu0 0.0
  %2109 = vmatpush2.msra.mxu0 0.0
  %2110 = vmatprep.subr.mxu0 0.0
  %2111 = vmatpush2.msra.mxu0 0.0
  %2112 = vmatprep.subr.mxu0 0.0
  %2113 = vmatpush2.msra.mxu0 0.0
  %2114 = vmatprep.subr.mxu0 0.0
  %2115 = vmatpush2.msra.mxu0 0.0
  %2116 = vmatprep.subr.mxu0 0.0
  %2117 = vmatpush2.msra.mxu0 0.0
  %2118 = vmatprep.subr.mxu0 0.0
  %2119 = vmatpush2.msra.mxu0 0.0
  %2120 = vmatprep.subr.mxu0 0.0
  %2121 = vmatpush2.msra.mxu0 0.0
  %2122 = vmatprep.subr.mxu0 0.0
  %2123 = vmatpush2.msra.mxu0 0.0
  %2124 = vmatprep.subr.mxu0 0.0
  %2125 = vmatpush2.msra.mxu0 0.0
  %2126 = vmatprep.subr.mxu0 0.0
  %2127 = vmatpush2.msra.mxu0 0.0
  %2128 = vmatprep.subr.mxu0 0.0
  %2129 = vmatpush2.msra.mxu0 0.0
  %2130 = vmatprep.subr.mxu0 0.0
  %2131 = vmatpush2.msra.mxu0 0.0
  %2132 = vmatprep.subr.mxu0 0.0
  %2133 = vmatpush2.msra.mxu0 0.0
  %2134 = vmatprep.subr.mxu0 0.0
  %2135 = vmatpush2.msra.mxu0 0.0
  %2136 = vmatprep.subr.mxu0 0.0
  %2137 = vmatpush2.msra.mxu0 0.0
  %2138 = vmatprep.subr.mxu0 0.0
  %2139 = vmatpush2.msra.mxu0 0.0
  %2140 = vmatprep.mubr.f32.mxu0 0.0
  %2141 = vmatmul.mubr.f32.gmra.mxu0 %v1980
  %v2142 = vpop.f32.mrf.mxu0
  %v2143 = vadd.f32 0.0, %v2142
  %v2144 = vpop.f32.mrf.mxu0
  %2145 = vmatprep.mubr.f32.mxu0 0.0
  %2146 = vmatmul.mubr.f32.gmra.mxu0 %v1983
  %v2147 = vpop.f32.mrf.mxu0
  %v2148 = vadd.f32 0.0, %v2147
  %v2149 = vpop.f32.mrf.mxu0
  %2150 = vmatprep.mubr.f32.mxu0 0.0
  %2151 = vmatmul.mubr.f32.gmra.mxu0 %v1986
  %v2152 = vpop.f32.mrf.mxu0
  %v2153 = vadd.f32 0.0, %v2152
  %v2154 = vpop.f32.mrf.mxu0
  %2155 = vmatprep.mubr.f32.mxu0 0.0
  %2156 = vmatmul.mubr.f32.gmra.mxu0 %v1989
  %v2157 = vpop.f32.mrf.mxu0
  %v2158 = vadd.f32 0.0, %v2157
  %v2159 = vpop.f32.mrf.mxu0
  %2160 = vdwg.mxu0
  %vm2161 = vcmask 15360
  %v2163 = vsel %vm2161, %v2143, 0
  %v2166 = vsel %vm2161, %v2148, 0
  %v2169 = vsel %vm2161, %v2153, 0
  %v2172 = vsel %vm2161, %v2158, 0
  %vm2174 = vcmask 1041408
  %v2176 = vsel %vm2174, %v1885, 0
  %2178 = vmatprep.subr.mxu0 0.0
  %2179 = vmatpush1.msra.mxu0 0.0
  %2180 = vmatprep.subr.mxu0 0.0
  %2181 = vmatpush1.msra.mxu0 0.0
  %2182 = vmatprep.subr.mxu0 0.0
  %2183 = vmatpush1.msra.mxu0 0.0
  %2184 = vmatprep.subr.mxu0 0.0
  %2185 = vmatpush1.msra.mxu0 0.0
  %2186 = vmatprep.subr.mxu0 0.0
  %2187 = vmatpush1.msra.mxu0 0.0
  %2188 = vmatprep.subr.mxu0 0.0
  %2189 = vmatpush1.msra.mxu0 0.0
  %2190 = vmatprep.subr.mxu0 0.0
  %2191 = vmatpush1.msra.mxu0 0.0
  %2192 = vmatprep.subr.mxu0 0.0
  %2193 = vmatpush1.msra.mxu0 0.0
  %2194 = vmatprep.subr.mxu0 0.0
  %2195 = vmatpush1.msra.mxu0 0.0
  %2196 = vmatprep.subr.mxu0 0.0
  %2197 = vmatpush1.msra.mxu0 0.0
  %2198 = vmatprep.subr.mxu0 0.0
  %2199 = vmatpush1.msra.mxu0 0.0
  %2200 = vmatprep.subr.mxu0 0.0
  %2201 = vmatpush1.msra.mxu0 0.0
  %2202 = vmatprep.subr.mxu0 0.0
  %2203 = vmatpush1.msra.mxu0 0.0
  %2204 = vmatprep.subr.mxu0 0.0
  %2205 = vmatpush1.msra.mxu0 0.0
  %2206 = vmatprep.subr.mxu0 0.0
  %2207 = vmatpush1.msra.mxu0 0.0
  %2208 = vmatprep.subr.mxu0 0.0
  %2209 = vmatpush1.msra.mxu0 %v2176
  %2210 = vmatprep.subr.mxu0 0.0
  %2211 = vmatpush2.msra.mxu0 0.0
  %2212 = vmatprep.subr.mxu0 0.0
  %2213 = vmatpush2.msra.mxu0 0.0
  %2214 = vmatprep.subr.mxu0 0.0
  %2215 = vmatpush2.msra.mxu0 0.0
  %2216 = vmatprep.subr.mxu0 0.0
  %2217 = vmatpush2.msra.mxu0 0.0
  %2218 = vmatprep.subr.mxu0 0.0
  %2219 = vmatpush2.msra.mxu0 0.0
  %2220 = vmatprep.subr.mxu0 0.0
  %2221 = vmatpush2.msra.mxu0 0.0
  %2222 = vmatprep.subr.mxu0 0.0
  %2223 = vmatpush2.msra.mxu0 0.0
  %2224 = vmatprep.subr.mxu0 0.0
  %2225 = vmatpush2.msra.mxu0 0.0
  %2226 = vmatprep.subr.mxu0 0.0
  %2227 = vmatpush2.msra.mxu0 0.0
  %2228 = vmatprep.subr.mxu0 0.0
  %2229 = vmatpush2.msra.mxu0 0.0
  %2230 = vmatprep.subr.mxu0 0.0
  %2231 = vmatpush2.msra.mxu0 0.0
  %2232 = vmatprep.subr.mxu0 0.0
  %2233 = vmatpush2.msra.mxu0 0.0
  %2234 = vmatprep.subr.mxu0 0.0
  %2235 = vmatpush2.msra.mxu0 0.0
  %2236 = vmatprep.subr.mxu0 0.0
  %2237 = vmatpush2.msra.mxu0 0.0
  %2238 = vmatprep.subr.mxu0 0.0
  %2239 = vmatpush2.msra.mxu0 0.0
  %2240 = vmatprep.subr.mxu0 0.0
  %2241 = vmatpush2.msra.mxu0 0.0
  %2242 = vmatprep.mubr.f32.mxu0 0.0
  %2243 = vmatmul.mubr.f32.gmra.mxu0 %v2163
  %v2244 = vpop.f32.mrf.mxu0
  %v2245 = vadd.f32 0.0, %v2244
  %v2246 = vpop.f32.mrf.mxu0
  %2247 = vmatprep.mubr.f32.mxu0 0.0
  %2248 = vmatmul.mubr.f32.gmra.mxu0 %v2166
  %v2249 = vpop.f32.mrf.mxu0
  %v2250 = vadd.f32 0.0, %v2249
  %v2251 = vpop.f32.mrf.mxu0
  %2252 = vmatprep.mubr.f32.mxu0 0.0
  %2253 = vmatmul.mubr.f32.gmra.mxu0 %v2169
  %v2254 = vpop.f32.mrf.mxu0
  %v2255 = vadd.f32 0.0, %v2254
  %v2256 = vpop.f32.mrf.mxu0
  %2257 = vmatprep.mubr.f32.mxu0 0.0
  %2258 = vmatmul.mubr.f32.gmra.mxu0 %v2172
  %v2259 = vpop.f32.mrf.mxu0
  %v2260 = vadd.f32 0.0, %v2259
  %v2261 = vpop.f32.mrf.mxu0
  %2262 = vdwg.mxu0
  %v2263 = vmul.f32 %v2245, %v1887
  %v2264 = vmul.f32 %v2250, %v1888
  %v2265 = vmul.f32 %v2255, %v1889
  %v2266 = vmul.f32 %v2260, %v1890
  %vm2267 = vcmask 523264
  %v2268 = vsel %vm2267, %v2263, 0.0
  %v2269 = vsel %vm2267, %v2264, 0.0
  %v2270 = vadd.f32 %v2268, %v2269
  %v2271 = vsel %vm2267, %v2265, 0.0
  %v2272 = vadd.f32 %v2270, %v2271
  %v2273 = vsel %vm2267, %v2266, 0.0
  %v2274 = vadd.f32 %v2272, %v2273
  %v2275 = vrot.slane %v2274, 4
  %v2276 = vadd.f32 %v2274, %v2275
  %v2277 = vrot.slane %v2276, 2
  %v2278 = vadd.f32 %v2276, %v2277
  %v2279 = vrot.slane %v2278, 1
  %v2280 = vadd.f32 %v2278, %v2279
  %v2282 = vsel %vm2161, %v2058, 0
  %v2285 = vsel %vm2161, %v2063, 0
  %v2288 = vsel %vm2161, %v2068, 0
  %v2291 = vsel %vm2161, %v2073, 0
  %2293 = vmatprep.subr.mxu0 0.0
  %2294 = vmatpush1.msra.mxu0 0.0
  %2295 = vmatprep.subr.mxu0 0.0
  %2296 = vmatpush1.msra.mxu0 0.0
  %2297 = vmatprep.subr.mxu0 0.0
  %2298 = vmatpush1.msra.mxu0 0.0
  %2299 = vmatprep.subr.mxu0 0.0
  %2300 = vmatpush1.msra.mxu0 0.0
  %2301 = vmatprep.subr.mxu0 0.0
  %2302 = vmatpush1.msra.mxu0 0.0
  %2303 = vmatprep.subr.mxu0 0.0
  %2304 = vmatpush1.msra.mxu0 0.0
  %2305 = vmatprep.subr.mxu0 0.0
  %2306 = vmatpush1.msra.mxu0 0.0
  %2307 = vmatprep.subr.mxu0 0.0
  %2308 = vmatpush1.msra.mxu0 0.0
  %2309 = vmatprep.subr.mxu0 0.0
  %2310 = vmatpush1.msra.mxu0 0.0
  %2311 = vmatprep.subr.mxu0 0.0
  %2312 = vmatpush1.msra.mxu0 0.0
  %2313 = vmatprep.subr.mxu0 0.0
  %2314 = vmatpush1.msra.mxu0 0.0
  %2315 = vmatprep.subr.mxu0 0.0
  %2316 = vmatpush1.msra.mxu0 0.0
  %2317 = vmatprep.subr.mxu0 0.0
  %2318 = vmatpush1.msra.mxu0 0.0
  %2319 = vmatprep.subr.mxu0 0.0
  %2320 = vmatpush1.msra.mxu0 0.0
  %2321 = vmatprep.subr.mxu0 0.0
  %2322 = vmatpush1.msra.mxu0 0.0
  %2323 = vmatprep.subr.mxu0 0.0
  %2324 = vmatpush1.msra.mxu0 %v2176
  %2325 = vmatprep.subr.mxu0 0.0
  %2326 = vmatpush2.msra.mxu0 0.0
  %2327 = vmatprep.subr.mxu0 0.0
  %2328 = vmatpush2.msra.mxu0 0.0
  %2329 = vmatprep.subr.mxu0 0.0
  %2330 = vmatpush2.msra.mxu0 0.0
  %2331 = vmatprep.subr.mxu0 0.0
  %2332 = vmatpush2.msra.mxu0 0.0
  %2333 = vmatprep.subr.mxu0 0.0
  %2334 = vmatpush2.msra.mxu0 0.0
  %2335 = vmatprep.subr.mxu0 0.0
  %2336 = vmatpush2.msra.mxu0 0.0
  %2337 = vmatprep.subr.mxu0 0.0
  %2338 = vmatpush2.msra.mxu0 0.0
  %2339 = vmatprep.subr.mxu0 0.0
  %2340 = vmatpush2.msra.mxu0 0.0
  %2341 = vmatprep.subr.mxu0 0.0
  %2342 = vmatpush2.msra.mxu0 0.0
  %2343 = vmatprep.subr.mxu0 0.0
  %2344 = vmatpush2.msra.mxu0 0.0
  %2345 = vmatprep.subr.mxu0 0.0
  %2346 = vmatpush2.msra.mxu0 0.0
  %2347 = vmatprep.subr.mxu0 0.0
  %2348 = vmatpush2.msra.mxu0 0.0
  %2349 = vmatprep.subr.mxu0 0.0
  %2350 = vmatpush2.msra.mxu0 0.0
  %2351 = vmatprep.subr.mxu0 0.0
  %2352 = vmatpush2.msra.mxu0 0.0
  %2353 = vmatprep.subr.mxu0 0.0
  %2354 = vmatpush2.msra.mxu0 0.0
  %2355 = vmatprep.subr.mxu0 0.0
  %2356 = vmatpush2.msra.mxu0 0.0
  %2357 = vmatprep.mubr.f32.mxu0 0.0
  %2358 = vmatmul.mubr.f32.gmra.mxu0 %v2282
  %v2359 = vpop.f32.mrf.mxu0
  %v2360 = vadd.f32 %v2280, %v2359
  %v2361 = vpop.f32.mrf.mxu0
  %2362 = vmatprep.mubr.f32.mxu0 0.0
  %2363 = vmatmul.mubr.f32.gmra.mxu0 %v2285
  %v2364 = vpop.f32.mrf.mxu0
  %v2365 = vadd.f32 %v2280, %v2364
  %v2366 = vpop.f32.mrf.mxu0
  %2367 = vmatprep.mubr.f32.mxu0 0.0
  %2368 = vmatmul.mubr.f32.gmra.mxu0 %v2288
  %v2369 = vpop.f32.mrf.mxu0
  %v2370 = vadd.f32 %v2280, %v2369
  %v2371 = vpop.f32.mrf.mxu0
  %2372 = vmatprep.mubr.f32.mxu0 0.0
  %2373 = vmatmul.mubr.f32.gmra.mxu0 %v2291
  %v2374 = vpop.f32.mrf.mxu0
  %v2375 = vadd.f32 %v2280, %v2374
  %v2376 = vpop.f32.mrf.mxu0
  %2377 = vdwg.mxu0
  %v2378 = vmul.f32 %v2360, 0.2
  %v2379 = vmul.f32 %v2365, 0.2
  %v2380 = vmul.f32 %v2370, 0.2
  %v2381 = vmul.f32 %v2375, 0.2
  %v2382 = vmax.f32 %v2360, %v2378
  %v2383 = vmax.f32 %v2365, %v2379
  %v2384 = vmax.f32 %v2370, %v2380
  %v2385 = vmax.f32 %v2375, %v2381
  %v2386 = vadd.f32 %v2382, %v127
  %v2387 = vadd.f32 %v2383, %v128
  %v2388 = vadd.f32 %v2384, %v129
  %v2389 = vadd.f32 %v2385, %v130
  %v2390 = vsel %vm2267, %v2386, -inf
  %2391 = vmax.xlane.f32.xlu0 %v2390
  %v2392 = vpop.xlane.xlu0 %2391
  %v2393 = vsel %vm2267, %v2387, -inf
  %2394 = vmax.xlane.f32.xlu0 %v2393
  %v2395 = vpop.xlane.xlu0 %2394
  %v2396 = vsel %vm2267, %v2388, -inf
  %2397 = vmax.xlane.f32.xlu0 %v2396
  %v2398 = vpop.xlane.xlu0 %2397
  %v2399 = vsel %vm2267, %v2389, -inf
  %2400 = vmax.xlane.f32.xlu0 %v2399
  %v2401 = vpop.xlane.xlu0 %2400
  %v2402 = vsub.f32 %v2386, %v2392
  %v2403 = vsub.f32 %v2387, %v2395
  %v2404 = vsub.f32 %v2388, %v2398
  %v2405 = vsub.f32 %v2389, %v2401
  %v2406 = vmul.f32 %v2402, 1.442695
  %v2407 = vpow.pop %v2406
  %v2408 = vmul.f32 %v2403, 1.442695
  %v2409 = vpow.pop %v2408
  %v2410 = vmul.f32 %v2404, 1.442695
  %v2411 = vpow.pop %v2410
  %v2412 = vmul.f32 %v2405, 1.442695
  %v2413 = vpow.pop %v2412
  %v2414 = vpack.c.bf16 %v2409, %v2407
  %v2415 = vpack.c.bf16 %v2413, %v2411
  %v2416 = vpack.c.bf16 %v1967, %v1964
  %v2417 = vpack.c.bf16 %v1975, %v1972
  %v2426 = vunpack.c.l.b16 %v1899
  %v2427 = vunpack.c.l.b16 %v1900
  %v2428 = vunpack.c.l.b16 %v1901
  %v2429 = vunpack.c.l.b16 %v1902
  %v2430 = vunpack.c.l.b16 %v1903
  %v2431 = vunpack.c.l.b16 %v1904
  %v2432 = vunpack.c.l.b16 %v1905
  %v2433 = vunpack.c.l.b16 %v1906
  %v2434 = vpack.c.b16 %v2427, %v2426
  %v2435 = vpack.c.b16 %v2429, %v2428
  %v2436 = vpack.c.b16 %v2431, %v2430
  %v2437 = vpack.c.b16 %v2433, %v2432
  %v2442 = vmul.bf16 %v2416, %v2434
  %v2443 = vmul.bf16 %v2417, %v2435
  %v2444 = vmul.bf16 %v2416, %v2436
  %v2445 = vmul.bf16 %v2417, %v2437
  %v2447 = vsel %vm2267, %v2414, 0
  %v2450 = vsel %vm2267, %v2415, 0
  %2452 = vmatprep.subr.bf16.mxu0 0
  %2453 = vmatpush1.bf16.msra.mxu0 0
  %2454 = vmatprep.subr.bf16.mxu0 0
  %2455 = vmatpush1.bf16.msra.mxu0 0
  %2456 = vmatprep.subr.bf16.mxu0 0
  %2457 = vmatpush1.bf16.msra.mxu0 0
  %2458 = vmatprep.subr.bf16.mxu0 0
  %2459 = vmatpush1.bf16.msra.mxu0 0
  %2460 = vmatprep.subr.bf16.mxu0 0
  %2461 = vmatpush1.bf16.msra.mxu0 %v2445
  %2462 = vmatprep.subr.bf16.mxu0 0
  %2463 = vmatpush1.bf16.msra.mxu0 %v2444
  %2464 = vmatprep.subr.bf16.mxu0 0
  %2465 = vmatpush1.bf16.msra.mxu0 %v2443
  %2466 = vmatprep.subr.bf16.mxu0 0
  %2467 = vmatpush1.bf16.msra.mxu0 %v2442
  %2468 = vmatprep.subr.bf16.mxu0 0
  %2469 = vmatpush2.bf16.msra.mxu0 0
  %2470 = vmatprep.subr.bf16.mxu0 0
  %2471 = vmatpush2.bf16.msra.mxu0 0
  %2472 = vmatprep.subr.bf16.mxu0 0
  %2473 = vmatpush2.bf16.msra.mxu0 0
  %2474 = vmatprep.subr.bf16.mxu0 0
  %2475 = vmatpush2.bf16.msra.mxu0 0
  %2476 = vmatprep.subr.bf16.mxu0 0
  %2477 = vmatpush2.bf16.msra.mxu0 0
  %2478 = vmatprep.subr.bf16.mxu0 0
  %2479 = vmatpush2.bf16.msra.mxu0 0
  %2480 = vmatprep.subr.bf16.mxu0 0
  %2481 = vmatpush2.bf16.msra.mxu0 0
  %2482 = vmatprep.subr.bf16.mxu0 0
  %2483 = vmatpush2.bf16.msra.mxu0 0
  %2484 = vmatprep.mubr.bf16.mxu0 0
  %2485 = vmatmul.mubr.bf16.gmra.mxu0 %v2447
  %v2486 = vpop.f32.mrf.mxu0
  %v2487 = vadd.f32 0.0, %v2486
  %v2488 = vpop.f32.mrf.mxu0
  %v2489 = vpop.f32.mrf.mxu0
  %v2490 = vadd.f32 0.0, %v2489
  %v2491 = vpop.f32.mrf.mxu0
  %2492 = vmatprep.mubr.bf16.mxu0 0
  %2493 = vmatmul.mubr.bf16.gmra.mxu0 %v2450
  %v2494 = vpop.f32.mrf.mxu0
  %v2495 = vadd.f32 0.0, %v2494
  %v2496 = vpop.f32.mrf.mxu0
  %v2497 = vpop.f32.mrf.mxu0
  %v2498 = vadd.f32 0.0, %v2497
  %v2499 = vpop.f32.mrf.mxu0
  %2500 = vdwg.mxu0
  %v2509 = vunpack.c.l.b16 %v1891
  %v2510 = vunpack.c.l.b16 %v1892
  %v2511 = vunpack.c.l.b16 %v1893
  %v2512 = vunpack.c.l.b16 %v1894
  %v2513 = vunpack.c.l.b16 %v1895
  %v2514 = vunpack.c.l.b16 %v1896
  %v2515 = vunpack.c.l.b16 %v1897
  %v2516 = vunpack.c.l.b16 %v1898
  %v2517 = vpack.c.b16 %v2510, %v2509
  %v2518 = vpack.c.b16 %v2512, %v2511
  %v2519 = vpack.c.b16 %v2514, %v2513
  %v2520 = vpack.c.b16 %v2516, %v2515
  %2525 = vmatprep.subr.bf16.mxu0 0
  %2526 = vmatpush1.bf16.msra.mxu0 0
  %2527 = vmatprep.subr.bf16.mxu0 0
  %2528 = vmatpush1.bf16.msra.mxu0 0
  %2529 = vmatprep.subr.bf16.mxu0 0
  %2530 = vmatpush1.bf16.msra.mxu0 0
  %2531 = vmatprep.subr.bf16.mxu0 0
  %2532 = vmatpush1.bf16.msra.mxu0 0
  %2533 = vmatprep.subr.bf16.mxu0 0
  %2534 = vmatpush1.bf16.msra.mxu0 %v2520
  %2535 = vmatprep.subr.bf16.mxu0 0
  %2536 = vmatpush1.bf16.msra.mxu0 %v2519
  %2537 = vmatprep.subr.bf16.mxu0 0
  %2538 = vmatpush1.bf16.msra.mxu0 %v2518
  %2539 = vmatprep.subr.bf16.mxu0 0
  %2540 = vmatpush1.bf16.msra.mxu0 %v2517
  %2541 = vmatprep.subr.bf16.mxu0 0
  %2542 = vmatpush2.bf16.msra.mxu0 0
  %2543 = vmatprep.subr.bf16.mxu0 0
  %2544 = vmatpush2.bf16.msra.mxu0 0
  %2545 = vmatprep.subr.bf16.mxu0 0
  %2546 = vmatpush2.bf16.msra.mxu0 0
  %2547 = vmatprep.subr.bf16.mxu0 0
  %2548 = vmatpush2.bf16.msra.mxu0 0
  %2549 = vmatprep.subr.bf16.mxu0 0
  %2550 = vmatpush2.bf16.msra.mxu0 0
  %2551 = vmatprep.subr.bf16.mxu0 0
  %2552 = vmatpush2.bf16.msra.mxu0 0
  %2553 = vmatprep.subr.bf16.mxu0 0
  %2554 = vmatpush2.bf16.msra.mxu0 0
  %2555 = vmatprep.subr.bf16.mxu0 0
  %2556 = vmatpush2.bf16.msra.mxu0 0
  %2557 = vmatprep.mubr.bf16.mxu0 0
  %2558 = vmatmul.mubr.bf16.gmra.mxu0 %v2447
  %v2559 = vpop.f32.mrf.mxu0
  %v2560 = vadd.f32 0.0, %v2559
  %v2561 = vpop.f32.mrf.mxu0
  %v2562 = vpop.f32.mrf.mxu0
  %v2563 = vadd.f32 0.0, %v2562
  %v2564 = vpop.f32.mrf.mxu0
  %2565 = vmatprep.mubr.bf16.mxu0 0
  %2566 = vmatmul.mubr.bf16.gmra.mxu0 %v2450
  %v2567 = vpop.f32.mrf.mxu0
  %v2568 = vadd.f32 0.0, %v2567
  %v2569 = vpop.f32.mrf.mxu0
  %v2570 = vpop.f32.mrf.mxu0
  %v2571 = vadd.f32 0.0, %v2570
  %v2572 = vpop.f32.mrf.mxu0
  %2573 = vdwg.mxu0
  %v2574 = vrcp.pop %v2560
  %v2575 = vrcp.pop %v2563
  %v2576 = vrcp.pop %v2568
  %v2577 = vrcp.pop %v2571
  %v2579 = vsel %vm2161, %v2574, 0
  %v2582 = vsel %vm2161, %v2575, 0
  %v2585 = vsel %vm2161, %v2576, 0
  %v2588 = vsel %vm2161, %v2577, 0
  %v2591 = vsel %vm2174, %v1886, 0
  %2593 = vmatprep.subr.mxu0 0.0
  %2594 = vmatpush1.msra.mxu0 0.0
  %2595 = vmatprep.subr.mxu0 0.0
  %2596 = vmatpush1.msra.mxu0 0.0
  %2597 = vmatprep.subr.mxu0 0.0
  %2598 = vmatpush1.msra.mxu0 0.0
  %2599 = vmatprep.subr.mxu0 0.0
  %2600 = vmatpush1.msra.mxu0 0.0
  %2601 = vmatprep.subr.mxu0 0.0
  %2602 = vmatpush1.msra.mxu0 0.0
  %2603 = vmatprep.subr.mxu0 0.0
  %2604 = vmatpush1.msra.mxu0 0.0
  %2605 = vmatprep.subr.mxu0 0.0
  %2606 = vmatpush1.msra.mxu0 0.0
  %2607 = vmatprep.subr.mxu0 0.0
  %2608 = vmatpush1.msra.mxu0 0.0
  %2609 = vmatprep.subr.mxu0 0.0
  %2610 = vmatpush1.msra.mxu0 0.0
  %2611 = vmatprep.subr.mxu0 0.0
  %2612 = vmatpush1.msra.mxu0 0.0
  %2613 = vmatprep.subr.mxu0 0.0
  %2614 = vmatpush1.msra.mxu0 0.0
  %2615 = vmatprep.subr.mxu0 0.0
  %2616 = vmatpush1.msra.mxu0 0.0
  %2617 = vmatprep.subr.mxu0 0.0
  %2618 = vmatpush1.msra.mxu0 0.0
  %2619 = vmatprep.subr.mxu0 0.0
  %2620 = vmatpush1.msra.mxu0 0.0
  %2621 = vmatprep.subr.mxu0 0.0
  %2622 = vmatpush1.msra.mxu0 0.0
  %2623 = vmatprep.subr.mxu0 0.0
  %2624 = vmatpush1.msra.mxu0 %v2591
  %2625 = vmatprep.subr.mxu0 0.0
  %2626 = vmatpush2.msra.mxu0 0.0
  %2627 = vmatprep.subr.mxu0 0.0
  %2628 = vmatpush2.msra.mxu0 0.0
  %2629 = vmatprep.subr.mxu0 0.0
  %2630 = vmatpush2.msra.mxu0 0.0
  %2631 = vmatprep.subr.mxu0 0.0
  %2632 = vmatpush2.msra.mxu0 0.0
  %2633 = vmatprep.subr.mxu0 0.0
  %2634 = vmatpush2.msra.mxu0 0.0
  %2635 = vmatprep.subr.mxu0 0.0
  %2636 = vmatpush2.msra.mxu0 0.0
  %2637 = vmatprep.subr.mxu0 0.0
  %2638 = vmatpush2.msra.mxu0 0.0
  %2639 = vmatprep.subr.mxu0 0.0
  %2640 = vmatpush2.msra.mxu0 0.0
  %2641 = vmatprep.subr.mxu0 0.0
  %2642 = vmatpush2.msra.mxu0 0.0
  %2643 = vmatprep.subr.mxu0 0.0
  %2644 = vmatpush2.msra.mxu0 0.0
  %2645 = vmatprep.subr.mxu0 0.0
  %2646 = vmatpush2.msra.mxu0 0.0
  %2647 = vmatprep.subr.mxu0 0.0
  %2648 = vmatpush2.msra.mxu0 0.0
  %2649 = vmatprep.subr.mxu0 0.0
  %2650 = vmatpush2.msra.mxu0 0.0
  %2651 = vmatprep.subr.mxu0 0.0
  %2652 = vmatpush2.msra.mxu0 0.0
  %2653 = vmatprep.subr.mxu0 0.0
  %2654 = vmatpush2.msra.mxu0 0.0
  %2655 = vmatprep.subr.mxu0 0.0
  %2656 = vmatpush2.msra.mxu0 0.0
  %2657 = vmatprep.mubr.f32.mxu0 0.0
  %2658 = vmatmul.mubr.f32.gmra.mxu0 %v2579
  %v2659 = vpop.f32.mrf.mxu0
  %v2660 = vadd.f32 0.0, %v2659
  %v2661 = vpop.f32.mrf.mxu0
  %2662 = vmatprep.mubr.f32.mxu0 0.0
  %2663 = vmatmul.mubr.f32.gmra.mxu0 %v2582
  %v2664 = vpop.f32.mrf.mxu0
  %v2665 = vadd.f32 0.0, %v2664
  %v2666 = vpop.f32.mrf.mxu0
  %2667 = vmatprep.mubr.f32.mxu0 0.0
  %2668 = vmatmul.mubr.f32.gmra.mxu0 %v2585
  %v2669 = vpop.f32.mrf.mxu0
  %v2670 = vadd.f32 0.0, %v2669
  %v2671 = vpop.f32.mrf.mxu0
  %2672 = vmatprep.mubr.f32.mxu0 0.0
  %2673 = vmatmul.mubr.f32.gmra.mxu0 %v2588
  %v2674 = vpop.f32.mrf.mxu0
  %v2675 = vadd.f32 0.0, %v2674
  %v2676 = vpop.f32.mrf.mxu0
  %2677 = vdwg.mxu0
  %v2678 = vmul.f32 %v2487, %v2660
  %v2679 = vmul.f32 %v2490, %v2665
  %v2680 = vmul.f32 %v2495, %v2670
  %v2681 = vmul.f32 %v2498, %v2675
  %v2683 = vlaneseq
  %v2684 = vshrl.u32 %v2683, 7
  %v2685 = vsub.s32 0, %v2684
  %v2686 = vrot.slane %v1907, %v2685
  %v2689 = vsel %vm1978, %v2678, 0
  %v2692 = vsel %vm1978, %v2679, 0
  %v2695 = vsel %vm1978, %v2680, 0
  %v2698 = vsel %vm1978, %v2681, 0
  %2700 = vmatprep.subr.mxu0 0.0
  %2701 = vmatpush1.msra.mxu0 0.0
  %2702 = vmatprep.subr.mxu0 0.0
  %2703 = vmatpush1.msra.mxu0 0.0
  %2704 = vmatprep.subr.mxu0 0.0
  %2705 = vmatpush1.msra.mxu0 0.0
  %2706 = vmatprep.subr.mxu0 0.0
  %2707 = vmatpush1.msra.mxu0 0.0
  %2708 = vmatprep.subr.mxu0 0.0
  %2709 = vmatpush1.msra.mxu0 0.0
  %2710 = vmatprep.subr.mxu0 0.0
  %2711 = vmatpush1.msra.mxu0 0.0
  %2712 = vmatprep.subr.mxu0 0.0
  %2713 = vmatpush1.msra.mxu0 0.0
  %2714 = vmatprep.subr.mxu0 0.0
  %2715 = vmatpush1.msra.mxu0 0.0
  %2716 = vmatprep.subr.mxu0 0.0
  %2717 = vmatpush1.msra.mxu0 0.0
  %2718 = vmatprep.subr.mxu0 0.0
  %2719 = vmatpush1.msra.mxu0 0.0
  %2720 = vmatprep.subr.mxu0 0.0
  %2721 = vmatpush1.msra.mxu0 0.0
  %2722 = vmatprep.subr.mxu0 0.0
  %2723 = vmatpush1.msra.mxu0 0.0
  %2724 = vmatprep.subr.mxu0 0.0
  %2725 = vmatpush1.msra.mxu0 0.0
  %2726 = vmatprep.subr.mxu0 0.0
  %2727 = vmatpush1.msra.mxu0 0.0
  %2728 = vmatprep.subr.mxu0 0.0
  %2729 = vmatpush1.msra.mxu0 0.0
  %2730 = vmatprep.subr.mxu0 0.0
  %2731 = vmatpush1.msra.mxu0 %v1908
  %2732 = vmatprep.subr.mxu0 0.0
  %2733 = vmatpush2.msra.mxu0 0.0
  %2734 = vmatprep.subr.mxu0 0.0
  %2735 = vmatpush2.msra.mxu0 0.0
  %2736 = vmatprep.subr.mxu0 0.0
  %2737 = vmatpush2.msra.mxu0 0.0
  %2738 = vmatprep.subr.mxu0 0.0
  %2739 = vmatpush2.msra.mxu0 0.0
  %2740 = vmatprep.subr.mxu0 0.0
  %2741 = vmatpush2.msra.mxu0 0.0
  %2742 = vmatprep.subr.mxu0 0.0
  %2743 = vmatpush2.msra.mxu0 0.0
  %2744 = vmatprep.subr.mxu0 0.0
  %2745 = vmatpush2.msra.mxu0 0.0
  %2746 = vmatprep.subr.mxu0 0.0
  %2747 = vmatpush2.msra.mxu0 0.0
  %2748 = vmatprep.subr.mxu0 0.0
  %2749 = vmatpush2.msra.mxu0 0.0
  %2750 = vmatprep.subr.mxu0 0.0
  %2751 = vmatpush2.msra.mxu0 0.0
  %2752 = vmatprep.subr.mxu0 0.0
  %2753 = vmatpush2.msra.mxu0 0.0
  %2754 = vmatprep.subr.mxu0 0.0
  %2755 = vmatpush2.msra.mxu0 0.0
  %2756 = vmatprep.subr.mxu0 0.0
  %2757 = vmatpush2.msra.mxu0 0.0
  %2758 = vmatprep.subr.mxu0 0.0
  %2759 = vmatpush2.msra.mxu0 0.0
  %2760 = vmatprep.subr.mxu0 0.0
  %2761 = vmatpush2.msra.mxu0 0.0
  %2762 = vmatprep.subr.mxu0 0.0
  %2763 = vmatpush2.msra.mxu0 0.0
  %2764 = vmatprep.mubr.f32.mxu0 0.0
  %2765 = vmatmul.mubr.f32.gmra.mxu0 %v2689
  %v2766 = vpop.f32.mrf.mxu0
  %v2767 = vadd.f32 %v2686, %v2766
  %v2768 = vpop.f32.mrf.mxu0
  %2769 = vmatprep.mubr.f32.mxu0 0.0
  %2770 = vmatmul.mubr.f32.gmra.mxu0 %v2692
  %v2771 = vpop.f32.mrf.mxu0
  %v2772 = vadd.f32 %v2686, %v2771
  %v2773 = vpop.f32.mrf.mxu0
  %2774 = vmatprep.mubr.f32.mxu0 0.0
  %2775 = vmatmul.mubr.f32.gmra.mxu0 %v2695
  %v2776 = vpop.f32.mrf.mxu0
  %v2777 = vadd.f32 %v2686, %v2776
  %v2778 = vpop.f32.mrf.mxu0
  %2779 = vmatprep.mubr.f32.mxu0 0.0
  %2780 = vmatmul.mubr.f32.gmra.mxu0 %v2698
  %v2781 = vpop.f32.mrf.mxu0
  %v2782 = vadd.f32 %v2686, %v2781
  %v2783 = vpop.f32.mrf.mxu0
  %2784 = vdwg.mxu0
  %2785 = vst.msk [vmem:[%s61] sm:$0xff] %vm431, %v2767
  %2786 = vst.msk [vmem:[%s61 + $0x8] sm:$0xff] %vm431, %v2772
  %2787 = vst.msk [vmem:[%s61 + $0x10] sm:$0xff] %vm431, %v2777
  %2788 = vst.msk [vmem:[%s61 + $0x18] sm:$0xff] %vm431, %v2782
  // Predicated region
  $region122: #{gat_forward.1} parent=0 // pred_check
    _
  $region123: #{gat_forward.1} parent=0 // pred_check_branch
    %2790 = sbr.rel (0) target = $region125
  $region124: #{gat_forward.1} parent=0 // pred_region
    _
  $region125: #{gat_forward.1} parent=0 // pred_fallthru
    _
  // Predicated region
  $region126: #{gat_forward.1} parent=0 // pred_check
    _
  $region127: #{gat_forward.1} parent=0 // pred_check_branch
    %2792 = sbr.rel (0) target = $region129
  $region128: #{gat_forward.1} parent=0 // pred_region
    _
  $region129: #{gat_forward.1} parent=0 // pred_fallthru
    _

</llo_original>
